<compile_context>
chip_gen: v7x
topology: tpu7x:2x2x1
jax: 0.10.0
libtpu: 0.0.40
codegen_flags: <defaults>
</compile_context>

<pallas_src>
import math
import functools

import jax
import jax.numpy as jnp
from jax import lax
from jax.experimental import pallas as pl
from jax.experimental.pallas import tpu as pltpu


def _round_up(x, m):
    return (x + m - 1) // m * m


# ----------------------------------------------------------------------------
# Chip-aware VMEM budget
# ----------------------------------------------------------------------------
@functools.lru_cache(maxsize=None)
def _vmem_limit_bytes():
    cap = 128 * 1024 * 1024
    try:
        cap = int(pltpu.get_tpu_info().vmem_capacity_bytes)
    except Exception:
        pass
    if cap <= 64 * 1024 * 1024:          # v7x: 64 MiB physical per TC
        return 44 * 1024 * 1024
    return 80 * 1024 * 1024              # v5e / v6e: 128 MiB physical


def _gn_fused_max_bytes():
    return (6 * 1024 * 1024 if _vmem_limit_bytes() <= 44 * 1024 * 1024
            else 14 * 1024 * 1024)


def _cparams(dims):
    return pltpu.CompilerParams(dimension_semantics=dims,
                                vmem_limit_bytes=_vmem_limit_bytes())


# ----------------------------------------------------------------------------
# Pallas kernel 1: tiled matmul + bias (+ optional fused residual add)
#   bf16 MXU operands, f32 accumulation, natural (unpadded) output channels.
# ----------------------------------------------------------------------------
def _matmul_bias_kernel(a_ref, b_ref, bias_ref, *rest, has_residual):
    if has_residual:
        r_ref, o_ref, acc_ref = rest
    else:
        o_ref, acc_ref = rest

    @pl.when(pl.program_id(2) == 0)
    def _():
        acc_ref[...] = jnp.zeros_like(acc_ref)

    acc_ref[...] += jnp.dot(a_ref[...], b_ref[...],
                            preferred_element_type=jnp.float32)

    @pl.when(pl.program_id(2) == pl.num_programs(2) - 1)
    def _():
        out = acc_ref[...] + bias_ref[...]
        if has_residual:
            out = out + r_ref[...].astype(jnp.float32)
        o_ref[...] = out.astype(o_ref.dtype)


def matmul_bias(a, w, bias, *, residual=None, out_dtype=jnp.bfloat16):
    """a:(M,K) @ w:(K,N) + bias:(1,N) [+ residual:(M,N)] -> (M,N)."""
    M, Ka = a.shape
    K, Nout = w.shape
    assert Ka == K, (Ka, K)

    if Nout % 256 == 0:
        TN = 256
    elif Nout % 128 == 0:
        TN = 128
    else:
        TN = Nout
    if K % 512 == 0:
        TK = 512
    elif K % 256 == 0:
        TK = 256
    elif K % 128 == 0:
        TK = 128
    else:
        TK = K
    if M >= 256:
        TM = 256
        Mp = _round_up(M, 256)
    else:
        Mp = _round_up(M, 8)
        TM = Mp

    if a.dtype != jnp.bfloat16 or M != Mp:
        a = jnp.pad(a.astype(jnp.bfloat16), ((0, Mp - M), (0, 0)))

    has_res = residual is not None
    args = [a, w, bias]
    in_specs = [pl.BlockSpec((TM, TK), lambda i, j, k: (i, k)),
                pl.BlockSpec((TK, TN), lambda i, j, k: (k, j)),
                pl.BlockSpec((1, TN), lambda i, j, k: (0, j))]
    if has_res:
        if residual.dtype != jnp.bfloat16 or M != Mp:
            residual = jnp.pad(residual.astype(jnp.bfloat16),
                               ((0, Mp - M), (0, 0)))
        args.append(residual)
        in_specs.append(pl.BlockSpec((TM, TN), lambda i, j, k: (i, j)))

    out = pl.pallas_call(
        functools.partial(_matmul_bias_kernel, has_residual=has_res),
        out_shape=jax.ShapeDtypeStruct((Mp, Nout), out_dtype),
        grid_spec=pltpu.PrefetchScalarGridSpec(
            num_scalar_prefetch=0,
            grid=(Mp // TM, Nout // TN, K // TK),
            in_specs=in_specs,
            out_specs=pl.BlockSpec((TM, TN), lambda i, j, k: (i, j)),
            scratch_shapes=[pltpu.VMEM((TM, TN), jnp.float32)]),
        compiler_params=_cparams(("parallel", "parallel", "arbitrary")),
    )(*args)
    return out if Mp == M else out[:M]


# ----------------------------------------------------------------------------
# Pallas kernel 2: fused 3x3 stride-1 conv (no im2col materialization)
#   grid (N, row-tiles); "top" tile + 2-row halo of the same padded HBM array;
#   9-tap reduction in-kernel; bias and residual fused into the epilogue.
# ----------------------------------------------------------------------------
def _conv3x3_kernel(top_ref, halo_ref, w_ref, b_ref, *rest, TH, W, has_residual):
    if has_residual:
        r_ref, o_ref, win_ref = rest
    else:
        o_ref, win_ref = rest

    # assemble the (TH+2)-row halo window in VMEM scratch
    win_ref[0:TH] = top_ref[0]
    win_ref[TH:TH + 2] = halo_ref[0]
    win = win_ref[...]                                  # (TH+2, W+2, C) bf16
    C = win.shape[-1]

    acc = None
    for dx in range(3):
        sh = win[:, dx:dx + W, :]                       # (TH+2, W, C)
        for dy in range(3):
            lhs = sh[dy:dy + TH].reshape(TH * W, C)
            c = jnp.dot(lhs, w_ref[dy * 3 + dx],
                        preferred_element_type=jnp.float32)
            acc = c if acc is None else acc + c

    out = acc + b_ref[...]
    if has_residual:
        out = out + r_ref[0].reshape(TH * W, -1).astype(jnp.float32)
    o_ref[0] = out.reshape(TH, W, -1).astype(o_ref.dtype)


def _pick_conv_tile(H, W, C, Cout):
    def too_big(t):
        rows = t * W
        return (rows > 2048
                or rows * Cout * 4 > 4 * 1024 * 1024
                or (t + 2) * (W + 2) * C * 2 > 3 * 1024 * 1024)

    th = H
    while th % 2 == 0 and th > 2 and too_big(th):
        th //= 2
    return th


def conv3x3_fused(x, p, th, *, residual=None, out_dtype=jnp.bfloat16):
    N, H, W, C = x.shape
    Cout = p['cout']
    Wp = W + 2
    # pad 1 row/col on top/left, (th-1) rows on the bottom (extra rows are zero
    # and feed the last tile's halo), 1 col on the right.
    xp = jnp.pad(x.astype(jnp.bfloat16), ((0, 0), (1, th - 1), (1, 1), (0, 0)))
    R = H // th
    halo_step = th // 2

    in_specs = [
        pl.BlockSpec((1, th, Wp, C), lambda n, i: (n, i, 0, 0)),
        pl.BlockSpec((1, 2, Wp, C), lambda n, i: (n, (i + 1) * halo_step, 0, 0)),
        pl.BlockSpec((9, C, Cout), lambda n, i: (0, 0, 0)),
        pl.BlockSpec((1, Cout), lambda n, i: (0, 0)),
    ]
    args = [xp, xp, p['wt'], p['b']]
    if residual is not None:
        args.append(residual.astype(jnp.bfloat16))
        in_specs.append(pl.BlockSpec((1, th, W, Cout), lambda n, i: (n, i, 0, 0)))

    return pl.pallas_call(
        functools.partial(_conv3x3_kernel, TH=th, W=W,
                          has_residual=residual is not None),
        out_shape=jax.ShapeDtypeStruct((N, H, W, Cout), out_dtype),
        grid_spec=pltpu.PrefetchScalarGridSpec(
            num_scalar_prefetch=0,
            grid=(N, R),
            in_specs=in_specs,
            out_specs=pl.BlockSpec((1, th, W, Cout), lambda n, i: (n, i, 0, 0)),
            scratch_shapes=[pltpu.VMEM((th + 2, Wp, C), jnp.bfloat16)]),
        compiler_params=_cparams(("parallel", "parallel")),
    )(*args)


# ----------------------------------------------------------------------------
# Pallas kernel 3: GroupNorm (32 groups, eps=1e-6) with optional fused SiLU
# ----------------------------------------------------------------------------
def _gn_fused_kernel(x_ref, gamma_ref, beta_ref, oh_ref, oht_ref, o_ref, *,
                     eps, denom, swish):
    x = x_ref[0].astype(jnp.float32)               # (HW, C)
    csum = jnp.sum(x, axis=0, keepdims=True)
    csq = jnp.sum(x * x, axis=0, keepdims=True)
    gsum = jnp.dot(csum, oh_ref[...], preferred_element_type=jnp.float32)
    gsq = jnp.dot(csq, oh_ref[...], preferred_element_type=jnp.float32)
    mean_g = gsum / denom
    var_g = jnp.maximum(gsq / denom - mean_g * mean_g, 0.0)
    mean_c = jnp.dot(mean_g, oht_ref[...], preferred_element_type=jnp.float32)
    var_c = jnp.dot(var_g, oht_ref[...], preferred_element_type=jnp.float32)
    y = (x - mean_c) * lax.rsqrt(var_c + eps) * gamma_ref[...] + beta_ref[...]
    if swish:
        y = y * jax.nn.sigmoid(y)
    o_ref[0] = y.astype(o_ref.dtype)


def _gn_stats_kernel(x_ref, sum_ref, sq_ref):
    @pl.when(pl.program_id(1) == 0)
    def _():
        sum_ref[...] = jnp.zeros_like(sum_ref)
        sq_ref[...] = jnp.zeros_like(sq_ref)
    x = x_ref[0].astype(jnp.float32)
    sum_ref[0] = sum_ref[0] + jnp.sum(x, axis=0, keepdims=True)
    sq_ref[0] = sq_ref[0] + jnp.sum(x * x, axis=0, keepdims=True)


def _gn_apply_kernel(x_ref, mean_ref, rstd_ref, gamma_ref, beta_ref, o_ref, *,
                     swish):
    x = x_ref[0].astype(jnp.float32)
    y = (x - mean_ref[0]) * rstd_ref[0] * gamma_ref[...] + beta_ref[...]
    if swish:
        y = y * jax.nn.sigmoid(y)
    o_ref[0] = y.astype(o_ref.dtype)


def _pick_hw_tile(hw, c, max_bytes=2 * 1024 * 1024):
    t = hw
    while t % 2 == 0 and t > 8 and t * c * 4 > max_bytes:
        t //= 2
    if hw % t != 0 or (t != hw and t % 8 != 0):
        t = hw
    return t


def group_norm(x, p, *, num_groups=32, eps=1e-6, swish=False,
               force_tiled=False, hw_tile=None):
    N, H, W, C = x.shape
    HW = H * W
    cg = C // num_groups
    x3 = x.reshape(N, HW, C)

    use_fused = (not force_tiled) and (HW * C * 4 <= _gn_fused_max_bytes())
    if use_fused:
        onehot = jnp.eye(num_groups, dtype=jnp.float32)[jnp.arange(C) // cg]
        onehot_t = onehot.T
        kern = functools.partial(_gn_fused_kernel, eps=eps,
                                 denom=float(HW * cg), swish=swish)
        out = pl.pallas_call(
            kern,
            out_shape=jax.ShapeDtypeStruct((N, HW, C), jnp.bfloat16),
            grid_spec=pltpu.PrefetchScalarGridSpec(
                num_scalar_prefetch=0,
                grid=(N,),
                in_specs=[pl.BlockSpec((1, HW, C), lambda n: (n, 0, 0)),
                          pl.BlockSpec((1, C), lambda n: (0, 0)),
                          pl.BlockSpec((1, C), lambda n: (0, 0)),
                          pl.BlockSpec((C, num_groups), lambda n: (0, 0)),
                          pl.BlockSpec((num_groups, C), lambda n: (0, 0))],
                out_specs=pl.BlockSpec((1, HW, C), lambda n: (n, 0, 0))),
            compiler_params=_cparams(("parallel",)),
        )(x3, p['gamma'], p['beta'], onehot, onehot_t)
        return out.reshape(N, H, W, C)

    # ---- tiled path: bounded VMEM, two sweeps over x ----
    t = hw_tile or _pick_hw_tile(HW, C)
    assert HW % t == 0
    T = HW // t

    sums, sqs = pl.pallas_call(
        _gn_stats_kernel,
        out_shape=(jax.ShapeDtypeStruct((N, 1, C), jnp.float32),
                   jax.ShapeDtypeStruct((N, 1, C), jnp.float32)),
        grid_spec=pltpu.PrefetchScalarGridSpec(
            num_scalar_prefetch=0,
            grid=(N, T),
            in_specs=[pl.BlockSpec((1, t, C), lambda n, ti: (n, ti, 0))],
            out_specs=[pl.BlockSpec((1, 1, C), lambda n, ti: (n, 0, 0)),
                       pl.BlockSpec((1, 1, C), lambda n, ti: (n, 0, 0))]),
        compiler_params=_cparams(("parallel", "arbitrary")),
    )(x3)

    denom = float(HW * cg)
    gsum = sums.reshape(N, num_groups, cg).sum(-1)
    gsq = sqs.reshape(N, num_groups, cg).sum(-1)
    mean_g = gsum / denom
    var_g = jnp.maximum(gsq / denom - mean_g * mean_g, 0.0)
    mean_c = jnp.repeat(mean_g, cg, axis=-1).reshape(N, 1, C)
    rstd_c = jnp.repeat(lax.rsqrt(var_g + eps), cg, axis=-1).reshape(N, 1, C)

    out = pl.pallas_call(
        functools.partial(_gn_apply_kernel, swish=swish),
        out_shape=jax.ShapeDtypeStruct((N, HW, C), jnp.bfloat16),
        grid_spec=pltpu.PrefetchScalarGridSpec(
            num_scalar_prefetch=0,
            grid=(N, T),
            in_specs=[pl.BlockSpec((1, t, C), lambda n, ti: (n, ti, 0)),
                      pl.BlockSpec((1, 1, C), lambda n, ti: (n, 0, 0)),
                      pl.BlockSpec((1, 1, C), lambda n, ti: (n, 0, 0)),
                      pl.BlockSpec((1, C), lambda n, ti: (0, 0)),
                      pl.BlockSpec((1, C), lambda n, ti: (0, 0))],
            out_specs=pl.BlockSpec((1, t, C), lambda n, ti: (n, ti, 0))),
        compiler_params=_cparams(("parallel", "parallel")),
    )(x3, mean_c, rstd_c, p['gamma'], p['beta'])
    return out.reshape(N, H, W, C)


# ----------------------------------------------------------------------------
# Pallas kernel 4: flash-style single-head spatial attention
#   grid (B, q_tiles, kv_tiles); online softmax state in VMEM scratch.
#   q/k/v can be read directly out of a fused (B, HW, 3C) array via
#   channel-block offsets (requires C % 128 == 0).
# ----------------------------------------------------------------------------
def _flash_attn_kernel(q_ref, k_ref, v_ref, o_ref, m_sc, l_sc, acc_sc, *,
                       scale):
    kv = pl.program_id(2)

    @pl.when(kv == 0)
    def _():
        m_sc[...] = jnp.full(m_sc.shape, -1e30, jnp.float32)
        l_sc[...] = jnp.zeros(l_sc.shape, jnp.float32)
        acc_sc[...] = jnp.zeros(acc_sc.shape, jnp.float32)

    q = q_ref[0]                                   # (tq, C) bf16
    k = k_ref[0]                                   # (tk, C) bf16
    v = v_ref[0]                                   # (tk, C) bf16
    s = lax.dot_general(q, k, (((1,), (1,)), ((), ())),
                        preferred_element_type=jnp.float32)      # (tq, tk)
    if scale != 1.0:                               # model path folds scale in q
        s = s * scale

    m_prev = m_sc[0]
    m_new = jnp.maximum(m_prev, jnp.max(s, axis=-1, keepdims=True))
    alpha = jnp.exp(m_prev - m_new)
    p = jnp.exp(s - m_new)
    l_sc[0] = alpha * l_sc[0] + jnp.sum(p, axis=-1, keepdims=True)
    acc_sc[0] = alpha * acc_sc[0] + jnp.dot(p.astype(v.dtype), v,
                                            preferred_element_type=jnp.float32)
    m_sc[0] = m_new

    @pl.when(kv == pl.num_programs(2) - 1)
    def _():
        o_ref[0] = (acc_sc[0] * pl.reciprocal(l_sc[0], approx=True)
                    ).astype(o_ref.dtype)


def attention_core(q, k, v, *, C=None, kv_offsets=(0, 0, 0), scale=1.0,
                   q_tile=None, kv_tile=None):
    B, HW, Ctot = q.shape
    if C is None:
        C = Ctot
    q = q.astype(jnp.bfloat16)
    k = k.astype(jnp.bfloat16)
    v = v.astype(jnp.bfloat16)

    tq = q_tile or min(HW, 512)
    if HW % tq != 0 or tq % 8 != 0:
        tq = HW
    tk = kv_tile or min(HW, 512)
    if HW % tk != 0 or tk % 8 != 0:
        tk = HW

    oq, ok, ov = kv_offsets
    kern = functools.partial(_flash_attn_kernel, scale=float(scale))
    return pl.pallas_call(
        kern,
        out_shape=jax.ShapeDtypeStruct((B, HW, C), jnp.bfloat16),
        grid_spec=pltpu.PrefetchScalarGridSpec(
            num_scalar_prefetch=0,
            grid=(B, HW // tq, HW // tk),
            in_specs=[pl.BlockSpec((1, tq, C), lambda b, i, j: (b, i, oq)),
                      pl.BlockSpec((1, tk, C), lambda b, i, j: (b, j, ok)),
                      pl.BlockSpec((1, tk, C), lambda b, i, j: (b, j, ov))],
            out_specs=pl.BlockSpec((1, tq, C), lambda b, i, j: (b, i, 0)),
            scratch_shapes=[pltpu.VMEM((1, tq, 1), jnp.float32),
                            pltpu.VMEM((1, tq, 1), jnp.float32),
                            pltpu.VMEM((1, tq, C), jnp.float32)]),
        compiler_params=_cparams(("parallel", "parallel", "arbitrary")),
    )(q, k, v)


# ----------------------------------------------------------------------------
# Conv glue: fused-halo path for 3x3/stride-1; im2col fallback for stride-2
# downsample convs and tiny-channel inputs (conv_in).
# ----------------------------------------------------------------------------
def _extract_patches(x, kh, kw, stride, pad, k_padded):
    N, H, W, C = x.shape
    xp = jnp.pad(x, ((0, 0), pad[0], pad[1], (0, 0)))
    Hp, Wp = xp.shape[1], xp.shape[2]
    Ho = (Hp - kh) // stride + 1
    Wo = (Wp - kw) // stride + 1
    cols = []
    for dy in range(kh):
        for dx in range(kw):
            cols.append(xp[:, dy:dy + stride * Ho:stride,
                           dx:dx + stride * Wo:stride, :])
    k = kh * kw * C
    if k_padded > k:   # fold K-padding into the same concat (no extra copy)
        cols.append(jnp.zeros((N, Ho, Wo, k_padded - k), x.dtype))
    return jnp.concatenate(cols, axis=-1)          # (N, Ho, Wo, Kp)


def conv2d(x, p, ksize, stride=1, pad=None, residual=None,
           out_dtype=jnp.bfloat16, force_im2col=False):
    N, H, W, C = x.shape
    cout = p['cout']
    if ksize == 1:
        a = x.reshape(N * H * W, C)
        r = None if residual is None else residual.reshape(N * H * W, cout)
        y = matmul_bias(a, p['w'], p['b'], residual=r, out_dtype=out_dtype)
        return y.reshape(N, H, W, cout)
    if pad is None:
        pad = ((1, 1), (1, 1))

    fused_ok = (not force_im2col and ksize == 3 and stride == 1
                and pad == ((1, 1), (1, 1)) and 'wt' in p
                and C % 8 == 0 and W % 8 == 0 and H % 2 == 0)
    if fused_ok:
        th = _pick_conv_tile(H, W, C, cout)
        if th >= 2 and th % 2 == 0 and H % th == 0:
            return conv3x3_fused(x, p, th, residual=residual,
                                 out_dtype=out_dtype)

    # fallback: materialized im2col + tiled matmul
    # TODO(synk): fuse the stride-2 downsample conv via the halo kernel too.
    patches = _extract_patches(x.astype(jnp.bfloat16), ksize, ksize, stride,
                               pad, p['w'].shape[0])
    _, Ho, Wo, Kp = patches.shape
    r = None if residual is None else residual.reshape(N * Ho * Wo, cout)
    y = matmul_bias(patches.reshape(N * Ho * Wo, Kp), p['w'], p['b'],
                    residual=r, out_dtype=out_dtype)
    return y.reshape(N, Ho, Wo, cout)


# ----------------------------------------------------------------------------
# Model blocks (ResnetBlock / AttnBlock / Down / Up), NHWC, bf16 activations
# ----------------------------------------------------------------------------
def resnet_block(x, p):
    h = group_norm(x, p['norm1'], swish=True)
    h = conv2d(h, p['conv1'], 3)
    h = group_norm(h, p['norm2'], swish=True)      # dropout p=0
    shortcut = x if p['nin_shortcut'] is None else conv2d(x, p['nin_shortcut'], 1)
    return conv2d(h, p['conv2'], 3, residual=shortcut)   # residual fused


def attn_block(x, p):
    N, H, W, C = x.shape
    HW = H * W
    h_ = group_norm(x, p['norm'], swish=False)
    # merged q/k/v projection: one matmul, one read of h_
    qkv = matmul_bias(h_.reshape(N * HW, C), p['qkv']['w'], p['qkv']['b'])
    qkv = qkv.reshape(N, HW, 3 * C)
    if C % 128 == 0:
        h_ = attention_core(qkv, qkv, qkv, C=C, kv_offsets=(0, 1, 2))
    else:
        q = qkv[..., :C]
        k = qkv[..., C:2 * C]
        v = qkv[..., 2 * C:]
        h_ = attention_core(q, k, v, C=C)
    h_ = h_.reshape(N, H, W, C)
    return conv2d(h_, p['proj_out'], 1, residual=x)       # residual fused


def downsample(x, p):
    # torch: F.pad(x, (0,1,0,1)) then conv3x3 stride 2, padding 0
    return conv2d(x, p, 3, stride=2, pad=((0, 1), (0, 1)))


def upsample(x, p):
    # TODO(synk): fuse the nearest-neighbor repeat into the fused conv's
    # index maps to avoid materializing the 4x-larger bf16 activation.
    x = jnp.repeat(jnp.repeat(x, 2, axis=1), 2, axis=2)
    return conv2d(x, p, 3, stride=1, pad=((1, 1), (1, 1)))


# ----------------------------------------------------------------------------
# Encoder / Decoder forward
# ----------------------------------------------------------------------------
def encoder_forward(p, x, cfg):
    num_res = len(cfg['ch_mult'])
    hs = [conv2d(x, p['conv_in'], 3)]
    for i_level in range(num_res):
        lvl = p['down'][i_level]
        for i_block in range(cfg['num_res_blocks']):
            h = resnet_block(hs[-1], lvl['block'][i_block])
            if lvl['attn']:
                h = attn_block(h, lvl['attn'][i_block])
            hs.append(h)
        if i_level != num_res - 1:
            hs.append(downsample(hs[-1], lvl['downsample']))
    h = hs[-1]
    h = resnet_block(h, p['mid']['block_1'])
    h = attn_block(h, p['mid']['attn_1'])
    h = resnet_block(h, p['mid']['block_2'])
    h = group_norm(h, p['norm_out'], swish=True)
    h = conv2d(h, p['conv_out'], 3)
    return h


def decoder_forward(p, z, cfg):
    num_res = len(cfg['ch_mult'])
    h = conv2d(z, p['conv_in'], 3)
    h = resnet_block(h, p['mid']['block_1'])
    h = attn_block(h, p['mid']['attn_1'])
    h = resnet_block(h, p['mid']['block_2'])
    for i_level in reversed(range(num_res)):
        lvl = p['up'][i_level]
        for i_block in range(cfg['num_res_blocks'] + 1):
            h = resnet_block(h, lvl['block'][i_block])
            if lvl['attn']:
                h = attn_block(h, lvl['attn'][i_block])
        if i_level != 0:
            h = upsample(h, lvl['upsample'])
    h = group_norm(h, p['norm_out'], swish=True)
    h = conv2d(h, p['conv_out'], 3, out_dtype=jnp.float32)  # tanh_out=False
    return h


# ----------------------------------------------------------------------------
# AutoencoderKL forward (encode -> quant_conv -> sample -> post_quant -> decode)
# ----------------------------------------------------------------------------
def autoencoder_forward(params, cfg, x_nchw, eps_noise):
    x = jnp.transpose(x_nchw, (0, 2, 3, 1)).astype(jnp.bfloat16)  # NCHW -> NHWC
    h = encoder_forward(params['encoder'], x, cfg)
    moments = conv2d(h, params['quant_conv'], 1, out_dtype=jnp.float32)
    mean, logvar = jnp.split(moments, 2, axis=-1)
    logvar = jnp.clip(logvar, -30.0, 20.0)
    std = jnp.exp(0.5 * logvar)
    z = mean + std * eps_noise                     # posterior.sample()
    zq = conv2d(z.astype(jnp.bfloat16), params['post_quant_conv'], 1)
    dec = decoder_forward(params['decoder'], zq, cfg)
    dec_nchw = jnp.transpose(dec, (0, 3, 1, 2))
    return dec_nchw, (jnp.transpose(mean, (0, 3, 1, 2)),
                      jnp.transpose(logvar, (0, 3, 1, 2)))


# ----------------------------------------------------------------------------
# Deterministic synthetic parameter initialization (shapes follow __init__).
# 3x3 conv weights stored both as (9, C, Cout) taps (fused path) and flat
# K-padded (Kp, Cout) (fallback path); all bf16, biases f32.
# ----------------------------------------------------------------------------
class ParamGen:
    def __init__(self, key):
        self.key = key

    def next(self, shape, scale=0.1):
        self.key, sub = jax.random.split(self.key)
        return scale * jax.random.normal(sub, shape, jnp.float32)


def init_conv(pg, cin, cout, k):
    scale = 1.0 / math.sqrt(k * k * cin)
    K = k * k * cin
    w4 = pg.next((k, k, cin, cout), scale)
    b = pg.next((cout,), 0.01).reshape(1, cout)
    p = {'cout': cout, 'b': b}
    if k == 1:
        p['w'] = w4.reshape(cin, cout).astype(jnp.bfloat16)
    else:
        Kp = _round_up(K, 128)
        wflat = jnp.zeros((Kp, cout), jnp.float32).at[:K].set(w4.reshape(K, cout))
        p['w'] = wflat.astype(jnp.bfloat16)                       # im2col path
        p['wt'] = w4.reshape(k * k, cin, cout).astype(jnp.bfloat16)  # fused path
    return p


def init_norm(pg, c):
    return {'gamma': jnp.ones((1, c), jnp.float32) + pg.next((1, c), 0.02),
            'beta': pg.next((1, c), 0.02)}


def init_resblock(pg, cin, cout):
    return {'norm1': init_norm(pg, cin),
            'conv1': init_conv(pg, cin, cout, 3),
            'norm2': init_norm(pg, cout),
            'conv2': init_conv(pg, cout, cout, 3),
            'nin_shortcut': init_conv(pg, cin, cout, 1) if cin != cout else None}


def init_attn(pg, c):
    q = init_conv(pg, c, c, 1)
    k = init_conv(pg, c, c, 1)
    v = init_conv(pg, c, c, 1)
    po = init_conv(pg, c, c, 1)
    s = float(c) ** -0.5
    # fold 1/sqrt(C) attention scale into the q projection; merge q/k/v weights
    wqkv = jnp.concatenate([q['w'].astype(jnp.float32) * s,
                            k['w'].astype(jnp.float32),
                            v['w'].astype(jnp.float32)], axis=1)
    bqkv = jnp.concatenate([q['b'] * s, k['b'], v['b']], axis=1)
    return {'norm': init_norm(pg, c),
            'qkv': {'w': wqkv.astype(jnp.bfloat16), 'b': bqkv, 'cout': 3 * c},
            'proj_out': po}


def init_encoder(pg, cfg):
    ch, ch_mult, nrb = cfg['ch'], cfg['ch_mult'], cfg['num_res_blocks']
    num_res = len(ch_mult)
    in_ch_mult = (1,) + tuple(ch_mult)
    p = {'conv_in': init_conv(pg, cfg['in_channels'], ch, 3), 'down': []}
    curr_res = cfg['resolution']
    block_in = ch
    for i_level in range(num_res):
        block_in = ch * in_ch_mult[i_level]
        block_out = ch * ch_mult[i_level]
        blocks, attns = [], []
        for _ in range(nrb):
            blocks.append(init_resblock(pg, block_in, block_out))
            block_in = block_out
            if curr_res in cfg['attn_resolutions']:
                attns.append(init_attn(pg, block_in))
        lvl = {'block': blocks, 'attn': attns, 'downsample': None}
        if i_level != num_res - 1:
            lvl['downsample'] = init_conv(pg, block_in, block_in, 3)
            curr_res //= 2
        p['down'].append(lvl)
    p['mid'] = {'block_1': init_resblock(pg, block_in, block_in),
                'attn_1': init_attn(pg, block_in),
                'block_2': init_resblock(pg, block_in, block_in)}
    p['norm_out'] = init_norm(pg, block_in)
    out_c = 2 * cfg['z_channels'] if cfg['double_z'] else cfg['z_channels']
    p['conv_out'] = init_conv(pg, block_in, out_c, 3)
    return p


def init_decoder(pg, cfg):
    ch, ch_mult, nrb = cfg['ch'], cfg['ch_mult'], cfg['num_res_blocks']
    num_res = len(ch_mult)
    block_in = ch * ch_mult[num_res - 1]
    curr_res = cfg['resolution'] // 2 ** (num_res - 1)
    p = {'conv_in': init_conv(pg, cfg['z_channels'], block_in, 3)}
    p['mid'] = {'block_1': init_resblock(pg, block_in, block_in),
                'attn_1': init_attn(pg, block_in),
                'block_2': init_resblock(pg, block_in, block_in)}
    up = [None] * num_res
    for i_level in reversed(range(num_res)):
        block_out = ch * ch_mult[i_level]
        blocks, attns = [], []
        for _ in range(nrb + 1):
            blocks.append(init_resblock(pg, block_in, block_out))
            block_in = block_out
            if curr_res in cfg['attn_resolutions']:
                attns.append(init_attn(pg, block_in))
        lvl = {'block': blocks, 'attn': attns, 'upsample': None}
        if i_level != 0:
            lvl['upsample'] = init_conv(pg, block_in, block_in, 3)
            curr_res *= 2
        up[i_level] = lvl
    p['up'] = up
    p['norm_out'] = init_norm(pg, block_in)
    p['conv_out'] = init_conv(pg, block_in, cfg['out_ch'], 3)
    return p


def init_autoencoder(key, cfg, embed_dim):
    pg = ParamGen(key)
    return {'encoder': init_encoder(pg, cfg),
            'decoder': init_decoder(pg, cfg),
            'quant_conv': init_conv(pg, 2 * cfg['z_channels'], 2 * embed_dim, 1),
            'post_quant_conv': init_conv(pg, embed_dim, cfg['z_channels'], 1)}


# TODO(synk): training_step / loss / optimizers / checkpoint loading are not
# part of the forward pass and are intentionally not translated.

if __name__ == "__main__":
    # ---- lightweight self-tests of the kernel paths -------------------------
    tkey = jax.random.PRNGKey(1)
    tk1, tk2, tk3, tk4, tk5, tk6 = jax.random.split(tkey, 6)

    # fused halo-conv (no im2col) vs materialized im2col reference path
    pgt = ParamGen(jax.random.PRNGKey(7))
    cpar = init_conv(pgt, 32, 48, 3)
    xc = jax.random.normal(tk5, (2, 16, 16, 32), jnp.float32).astype(jnp.bfloat16)
    rc = jax.random.normal(tk6, (2, 16, 16, 48), jnp.float32).astype(jnp.bfloat16)
    y_fused_c = conv2d(xc, cpar, 3, residual=rc).astype(jnp.float32)
    y_ref_c = conv2d(xc, cpar, 3, residual=rc, force_im2col=True).astype(jnp.float32)
    assert jnp.allclose(y_fused_c, y_ref_c, atol=6e-2, rtol=6e-2), float(
        jnp.max(jnp.abs(y_fused_c - y_ref_c)))

    # tiled GroupNorm (multi HW tile) vs fused GroupNorm
    xt = jax.random.normal(tk1, (2, 8, 8, 64), jnp.float32).astype(jnp.bfloat16)
    gnp = {'gamma': jnp.ones((1, 64), jnp.float32),
           'beta': jnp.zeros((1, 64), jnp.float32)}
    y_fused = group_norm(xt, gnp, swish=True)
    y_tiled = group_norm(xt, gnp, swish=True, force_tiled=True, hw_tile=16)
    assert jnp.allclose(y_fused.astype(jnp.float32), y_tiled.astype(jnp.float32),
                        atol=5e-2, rtol=5e-2)

    # flash attention (multi KV tile) vs plain softmax reference
    qa = jax.random.normal(tk2, (1, 128, 64), jnp.float32).astype(jnp.bfloat16)
    ka = jax.random.normal(tk3, (1, 128, 64), jnp.float32).astype(jnp.bfloat16)
    va = jax.random.normal(tk4, (1, 128, 64), jnp.float32).astype(jnp.bfloat16)
    o_flash = attention_core(qa, ka, va, kv_tile=32,
                             scale=64.0 ** -0.5).astype(jnp.float32)
    s_ref = jnp.einsum('bqc,bkc->bqk', qa.astype(jnp.float32),
                       ka.astype(jnp.float32)) * (64.0 ** -0.5)
    o_ref = jnp.einsum('bqk,bkc->bqc', jax.nn.softmax(s_ref, axis=-1),
                       va.astype(jnp.float32))
    assert jnp.allclose(o_flash, o_ref, atol=3e-2, rtol=3e-2)

    # ---- full AutoencoderKL forward -----------------------------------------
    ddconfig = dict(double_z=True, z_channels=4, resolution=16, in_channels=3,
                    out_ch=3, ch=64, ch_mult=(1, 2), num_res_blocks=1,
                    attn_resolutions=(), dropout=0.0)
    embed_dim = 4

    key = jax.random.PRNGKey(0)
    pkey, xkey, nkey = jax.random.split(key, 3)
    params = init_autoencoder(pkey, ddconfig, embed_dim)

    # input: (B, C, H, W) = (2, 3, 16, 16), matching PyTorch NCHW convention
    x = jax.random.normal(xkey, (2, ddconfig['in_channels'],
                                 ddconfig['resolution'],
                                 ddconfig['resolution']), jnp.float32)
    z_res = ddconfig['resolution'] // 2 ** (len(ddconfig['ch_mult']) - 1)
    eps_noise = jax.random.normal(nkey, (2, z_res, z_res, embed_dim), jnp.float32)

    fwd = jax.jit(lambda xi, ei: autoencoder_forward(params, ddconfig, xi, ei))
    dec, (mean, logvar) = fwd(x, eps_noise)
    jax.block_until_ready(dec)

    assert dec.shape == x.shape, dec.shape
    assert mean.shape == (2, embed_dim, z_res, z_res), mean.shape
    assert bool(jnp.all(jnp.isfinite(dec)))
    print("KERNEL_OK")
</pallas_src>

<mosaic_0001>
module attributes {stable_mosaic.version = 11 : i64} {
  func.func @_conv3x3_kernel(%arg0: i32, %arg1: i32, %arg2: memref<1x16x18x32xbf16, #tpu.memory_space<vmem>>, %arg3: memref<1x2x18x32xbf16, #tpu.memory_space<vmem>>, %arg4: memref<9x32x48xbf16, #tpu.memory_space<vmem>>, %arg5: memref<1x48xf32, #tpu.memory_space<vmem>>, %arg6: memref<1x16x16x48xbf16, #tpu.memory_space<vmem>>, %arg7: memref<1x16x16x48xbf16, #tpu.memory_space<vmem>>, %arg8: memref<18x18x32xbf16, #tpu.memory_space<vmem>>) attributes {dimension_semantics = [#tpu.dimension_semantics<parallel>, #tpu.dimension_semantics<parallel>], iteration_bounds = array<i64: 2, 1>, scalar_prefetch = 0 : i64, scratch_operands = 1 : i64, tpu.core_type = #tpu.core_type<tc>, window_params = [{transform_indices = @transform_0, window_bounds = array<i64: 1, 16, 18, 32>}, {transform_indices = @transform_1, window_bounds = array<i64: 1, 2, 18, 32>}, {pipeline_mode = #tpu.pipeline_mode<synchronous>, transform_indices = @transform_2, window_bounds = array<i64: 9, 32, 48>}, {pipeline_mode = #tpu.pipeline_mode<synchronous>, transform_indices = @transform_3, window_bounds = array<i64: 1, 48>}, {transform_indices = @transform_4, window_bounds = array<i64: 1, 16, 16, 48>}, {transform_indices = @transform_5, window_bounds = array<i64: 1, 16, 16, 48>}]} {
    %c0 = arith.constant 0 : index
    %c0_0 = arith.constant 0 : index
    %c0_1 = arith.constant 0 : index
    %c0_2 = arith.constant 0 : index
    %0 = vector.load %arg2[%c0, %c0_0, %c0_1, %c0_2] : memref<1x16x18x32xbf16, #tpu.memory_space<vmem>>, vector<1x16x18x32xbf16>
    %1 = vector.shape_cast %0 : vector<1x16x18x32xbf16> to vector<16x18x32xbf16>
    %c0_3 = arith.constant 0 : index
    %c0_4 = arith.constant 0 : index
    %c0_5 = arith.constant 0 : index
    %2 = vector.load %arg8[%c0_3, %c0_4, %c0_5] : memref<18x18x32xbf16, #tpu.memory_space<vmem>>, vector<16x18x32xbf16>
    tpu.vector_store %arg8[%c0_3, %c0_4, %c0_5], %1 {strides = array<i32>} : memref<18x18x32xbf16, #tpu.memory_space<vmem>>, vector<16x18x32xbf16>,
    %c0_6 = arith.constant 0 : index
    %c0_7 = arith.constant 0 : index
    %c0_8 = arith.constant 0 : index
    %c0_9 = arith.constant 0 : index
    %3 = vector.load %arg3[%c0_6, %c0_7, %c0_8, %c0_9] : memref<1x2x18x32xbf16, #tpu.memory_space<vmem>>, vector<1x2x18x32xbf16>
    %4 = vector.shape_cast %3 : vector<1x2x18x32xbf16> to vector<2x18x32xbf16>
    %c16 = arith.constant 16 : index
    %c0_10 = arith.constant 0 : index
    %c0_11 = arith.constant 0 : index
    %5 = vector.load %arg8[%c16, %c0_10, %c0_11] : memref<18x18x32xbf16, #tpu.memory_space<vmem>>, vector<2x18x32xbf16>
    tpu.vector_store %arg8[%c16, %c0_10, %c0_11], %4 {strides = array<i32>} : memref<18x18x32xbf16, #tpu.memory_space<vmem>>, vector<2x18x32xbf16>,
    %c0_12 = arith.constant 0 : index
    %c0_13 = arith.constant 0 : index
    %c0_14 = arith.constant 0 : index
    %6 = vector.load %arg8[%c0_12, %c0_13, %c0_14] : memref<18x18x32xbf16, #tpu.memory_space<vmem>>, vector<18x18x32xbf16>
    %7 = vector.extract_strided_slice %6 {offsets = [0, 0, 0], sizes = [18, 16, 32], strides = [1, 1, 1]} : vector<18x18x32xbf16> to vector<18x16x32xbf16>
    %8 = vector.extract_strided_slice %7 {offsets = [0, 0, 0], sizes = [16, 16, 32], strides = [1, 1, 1]} : vector<18x16x32xbf16> to vector<16x16x32xbf16>
    %9 = vector.shape_cast %8 : vector<16x16x32xbf16> to vector<256x32xbf16>
    %c0_15 = arith.constant 0 : index
    %c0_16 = arith.constant 0 : index
    %c0_17 = arith.constant 0 : index
    %10 = vector.load %arg4[%c0_15, %c0_16, %c0_17] : memref<9x32x48xbf16, #tpu.memory_space<vmem>>, vector<1x32x48xbf16>
    %11 = vector.shape_cast %10 : vector<1x32x48xbf16> to vector<32x48xbf16>
    %cst = arith.constant dense<0.000000e+00> : vector<256x48xf32>
    %12 = tpu.matmul %9, %11, %cst {dimension_numbers = #tpu.dot_dimension_numbers<[1], [0], [0], [1], [0, 0, 1, 1], [], []>} : vector<256x32xbf16>, vector<32x48xbf16>, vector<256x48xf32> -> vector<256x48xf32>
    %13 = vector.extract_strided_slice %7 {offsets = [1, 0, 0], sizes = [16, 16, 32], strides = [1, 1, 1]} : vector<18x16x32xbf16> to vector<16x16x32xbf16>
    %14 = vector.shape_cast %13 : vector<16x16x32xbf16> to vector<256x32xbf16>
    %c3 = arith.constant 3 : index
    %c0_18 = arith.constant 0 : index
    %c0_19 = arith.constant 0 : index
    %15 = vector.load %arg4[%c3, %c0_18, %c0_19] : memref<9x32x48xbf16, #tpu.memory_space<vmem>>, vector<1x32x48xbf16>
    %16 = vector.shape_cast %15 : vector<1x32x48xbf16> to vector<32x48xbf16>
    %cst_20 = arith.constant dense<0.000000e+00> : vector<256x48xf32>
    %17 = tpu.matmul %14, %16, %cst_20 {dimension_numbers = #tpu.dot_dimension_numbers<[1], [0], [0], [1], [0, 0, 1, 1], [], []>} : vector<256x32xbf16>, vector<32x48xbf16>, vector<256x48xf32> -> vector<256x48xf32>
    %18 = arith.addf %12, %17 : vector<256x48xf32>
    %19 = vector.extract_strided_slice %7 {offsets = [2, 0, 0], sizes = [16, 16, 32], strides = [1, 1, 1]} : vector<18x16x32xbf16> to vector<16x16x32xbf16>
    %20 = vector.shape_cast %19 : vector<16x16x32xbf16> to vector<256x32xbf16>
    %c6 = arith.constant 6 : index
    %c0_21 = arith.constant 0 : index
    %c0_22 = arith.constant 0 : index
    %21 = vector.load %arg4[%c6, %c0_21, %c0_22] : memref<9x32x48xbf16, #tpu.memory_space<vmem>>, vector<1x32x48xbf16>
    %22 = vector.shape_cast %21 : vector<1x32x48xbf16> to vector<32x48xbf16>
    %cst_23 = arith.constant dense<0.000000e+00> : vector<256x48xf32>
    %23 = tpu.matmul %20, %22, %cst_23 {dimension_numbers = #tpu.dot_dimension_numbers<[1], [0], [0], [1], [0, 0, 1, 1], [], []>} : vector<256x32xbf16>, vector<32x48xbf16>, vector<256x48xf32> -> vector<256x48xf32>
    %24 = arith.addf %18, %23 : vector<256x48xf32>
    %25 = vector.extract_strided_slice %6 {offsets = [0, 1, 0], sizes = [18, 16, 32], strides = [1, 1, 1]} : vector<18x18x32xbf16> to vector<18x16x32xbf16>
    %26 = vector.extract_strided_slice %25 {offsets = [0, 0, 0], sizes = [16, 16, 32], strides = [1, 1, 1]} : vector<18x16x32xbf16> to vector<16x16x32xbf16>
    %27 = vector.shape_cast %26 : vector<16x16x32xbf16> to vector<256x32xbf16>
    %c1 = arith.constant 1 : index
    %c0_24 = arith.constant 0 : index
    %c0_25 = arith.constant 0 : index
    %28 = vector.load %arg4[%c1, %c0_24, %c0_25] : memref<9x32x48xbf16, #tpu.memory_space<vmem>>, vector<1x32x48xbf16>
    %29 = vector.shape_cast %28 : vector<1x32x48xbf16> to vector<32x48xbf16>
    %cst_26 = arith.constant dense<0.000000e+00> : vector<256x48xf32>
    %30 = tpu.matmul %27, %29, %cst_26 {dimension_numbers = #tpu.dot_dimension_numbers<[1], [0], [0], [1], [0, 0, 1, 1], [], []>} : vector<256x32xbf16>, vector<32x48xbf16>, vector<256x48xf32> -> vector<256x48xf32>
    %31 = arith.addf %24, %30 : vector<256x48xf32>
    %32 = vector.extract_strided_slice %25 {offsets = [1, 0, 0], sizes = [16, 16, 32], strides = [1, 1, 1]} : vector<18x16x32xbf16> to vector<16x16x32xbf16>
    %33 = vector.shape_cast %32 : vector<16x16x32xbf16> to vector<256x32xbf16>
    %c4 = arith.constant 4 : index
    %c0_27 = arith.constant 0 : index
    %c0_28 = arith.constant 0 : index
    %34 = vector.load %arg4[%c4, %c0_27, %c0_28] : memref<9x32x48xbf16, #tpu.memory_space<vmem>>, vector<1x32x48xbf16>
    %35 = vector.shape_cast %34 : vector<1x32x48xbf16> to vector<32x48xbf16>
    %cst_29 = arith.constant dense<0.000000e+00> : vector<256x48xf32>
    %36 = tpu.matmul %33, %35, %cst_29 {dimension_numbers = #tpu.dot_dimension_numbers<[1], [0], [0], [1], [0, 0, 1, 1], [], []>} : vector<256x32xbf16>, vector<32x48xbf16>, vector<256x48xf32> -> vector<256x48xf32>
    %37 = arith.addf %31, %36 : vector<256x48xf32>
    %38 = vector.extract_strided_slice %25 {offsets = [2, 0, 0], sizes = [16, 16, 32], strides = [1, 1, 1]} : vector<18x16x32xbf16> to vector<16x16x32xbf16>
    %39 = vector.shape_cast %38 : vector<16x16x32xbf16> to vector<256x32xbf16>
    %c7 = arith.constant 7 : index
    %c0_30 = arith.constant 0 : index
    %c0_31 = arith.constant 0 : index
    %40 = vector.load %arg4[%c7, %c0_30, %c0_31] : memref<9x32x48xbf16, #tpu.memory_space<vmem>>, vector<1x32x48xbf16>
    %41 = vector.shape_cast %40 : vector<1x32x48xbf16> to vector<32x48xbf16>
    %cst_32 = arith.constant dense<0.000000e+00> : vector<256x48xf32>
    %42 = tpu.matmul %39, %41, %cst_32 {dimension_numbers = #tpu.dot_dimension_numbers<[1], [0], [0], [1], [0, 0, 1, 1], [], []>} : vector<256x32xbf16>, vector<32x48xbf16>, vector<256x48xf32> -> vector<256x48xf32>
    %43 = arith.addf %37, %42 : vector<256x48xf32>
    %44 = vector.extract_strided_slice %6 {offsets = [0, 2, 0], sizes = [18, 16, 32], strides = [1, 1, 1]} : vector<18x18x32xbf16> to vector<18x16x32xbf16>
    %45 = vector.extract_strided_slice %44 {offsets = [0, 0, 0], sizes = [16, 16, 32], strides = [1, 1, 1]} : vector<18x16x32xbf16> to vector<16x16x32xbf16>
    %46 = vector.shape_cast %45 : vector<16x16x32xbf16> to vector<256x32xbf16>
    %c2 = arith.constant 2 : index
    %c0_33 = arith.constant 0 : index
    %c0_34 = arith.constant 0 : index
    %47 = vector.load %arg4[%c2, %c0_33, %c0_34] : memref<9x32x48xbf16, #tpu.memory_space<vmem>>, vector<1x32x48xbf16>
    %48 = vector.shape_cast %47 : vector<1x32x48xbf16> to vector<32x48xbf16>
    %cst_35 = arith.constant dense<0.000000e+00> : vector<256x48xf32>
    %49 = tpu.matmul %46, %48, %cst_35 {dimension_numbers = #tpu.dot_dimension_numbers<[1], [0], [0], [1], [0, 0, 1, 1], [], []>} : vector<256x32xbf16>, vector<32x48xbf16>, vector<256x48xf32> -> vector<256x48xf32>
    %50 = arith.addf %43, %49 : vector<256x48xf32>
    %51 = vector.extract_strided_slice %44 {offsets = [1, 0, 0], sizes = [16, 16, 32], strides = [1, 1, 1]} : vector<18x16x32xbf16> to vector<16x16x32xbf16>
    %52 = vector.shape_cast %51 : vector<16x16x32xbf16> to vector<256x32xbf16>
    %c5 = arith.constant 5 : index
    %c0_36 = arith.constant 0 : index
    %c0_37 = arith.constant 0 : index
    %53 = vector.load %arg4[%c5, %c0_36, %c0_37] : memref<9x32x48xbf16, #tpu.memory_space<vmem>>, vector<1x32x48xbf16>
    %54 = vector.shape_cast %53 : vector<1x32x48xbf16> to vector<32x48xbf16>
    %cst_38 = arith.constant dense<0.000000e+00> : vector<256x48xf32>
    %55 = tpu.matmul %52, %54, %cst_38 {dimension_numbers = #tpu.dot_dimension_numbers<[1], [0], [0], [1], [0, 0, 1, 1], [], []>} : vector<256x32xbf16>, vector<32x48xbf16>, vector<256x48xf32> -> vector<256x48xf32>
    %56 = arith.addf %50, %55 : vector<256x48xf32>
    %57 = vector.extract_strided_slice %44 {offsets = [2, 0, 0], sizes = [16, 16, 32], strides = [1, 1, 1]} : vector<18x16x32xbf16> to vector<16x16x32xbf16>
    %58 = vector.shape_cast %57 : vector<16x16x32xbf16> to vector<256x32xbf16>
    %c8 = arith.constant 8 : index
    %c0_39 = arith.constant 0 : index
    %c0_40 = arith.constant 0 : index
    %59 = vector.load %arg4[%c8, %c0_39, %c0_40] : memref<9x32x48xbf16, #tpu.memory_space<vmem>>, vector<1x32x48xbf16>
    %60 = vector.shape_cast %59 : vector<1x32x48xbf16> to vector<32x48xbf16>
    %cst_41 = arith.constant dense<0.000000e+00> : vector<256x48xf32>
    %61 = tpu.matmul %58, %60, %cst_41 {dimension_numbers = #tpu.dot_dimension_numbers<[1], [0], [0], [1], [0, 0, 1, 1], [], []>} : vector<256x32xbf16>, vector<32x48xbf16>, vector<256x48xf32> -> vector<256x48xf32>
    %62 = arith.addf %56, %61 : vector<256x48xf32>
    %c0_42 = arith.constant 0 : index
    %c0_43 = arith.constant 0 : index
    %63 = vector.load %arg5[%c0_42, %c0_43] : memref<1x48xf32, #tpu.memory_space<vmem>>, vector<1x48xf32>
    %64 = vector.broadcast %63 : vector<1x48xf32> to vector<256x48xf32>
    %65 = arith.addf %62, %64 : vector<256x48xf32>
    %c0_44 = arith.constant 0 : index
    %c0_45 = arith.constant 0 : index
    %c0_46 = arith.constant 0 : index
    %c0_47 = arith.constant 0 : index
    %66 = vector.load %arg6[%c0_44, %c0_45, %c0_46, %c0_47] : memref<1x16x16x48xbf16, #tpu.memory_space<vmem>>, vector<1x16x16x48xbf16>
    %67 = vector.shape_cast %66 : vector<1x16x16x48xbf16> to vector<16x16x48xbf16>
    %68 = vector.shape_cast %67 : vector<16x16x48xbf16> to vector<256x48xbf16>
    %69 = arith.extf %68 : vector<256x48xbf16> to vector<256x48xf32>
    %70 = arith.addf %65, %69 : vector<256x48xf32>
    %71 = vector.shape_cast %70 : vector<256x48xf32> to vector<16x16x48xf32>
    %72 = arith.truncf %71 : vector<16x16x48xf32> to vector<16x16x48xbf16>
    %c0_48 = arith.constant 0 : index
    %c0_49 = arith.constant 0 : index
    %c0_50 = arith.constant 0 : index
    %c0_51 = arith.constant 0 : index
    %73 = vector.load %arg7[%c0_48, %c0_49, %c0_50, %c0_51] : memref<1x16x16x48xbf16, #tpu.memory_space<vmem>>, vector<1x16x16x48xbf16>
    %74 = vector.shape_cast %73 : vector<1x16x16x48xbf16> to vector<16x16x48xbf16>
    %75 = vector.shape_cast %72 : vector<16x16x48xbf16> to vector<1x16x16x48xbf16>
    tpu.vector_store %arg7[%c0_48, %c0_49, %c0_50, %c0_51], %75 {strides = array<i32>} : memref<1x16x16x48xbf16, #tpu.memory_space<vmem>>, vector<1x16x16x48xbf16>,
    return
  }
  func.func @transform_0(%arg0: i32, %arg1: i32) -> (i32, i32, i32, i32) {
    %c0_i32 = arith.constant 0 : i32
    %c0_i32_0 = arith.constant 0 : i32
    %c0_i32_1 = arith.constant 0 : i32
    return %arg0, %arg1, %c0_i32, %c0_i32_0 : i32, i32, i32, i32
  }
  func.func @transform_1(%arg0: i32, %arg1: i32) -> (i32, i32, i32, i32) {
    %c1_i32 = arith.constant 1 : i32
    %0 = arith.addi %arg1, %c1_i32 : i32
    %c8_i32 = arith.constant 8 : i32
    %1 = arith.muli %0, %c8_i32 : i32
    %c0_i32 = arith.constant 0 : i32
    %c0_i32_0 = arith.constant 0 : i32
    %c0_i32_1 = arith.constant 0 : i32
    return %arg0, %1, %c0_i32, %c0_i32_0 : i32, i32, i32, i32
  }
  func.func @transform_2(%arg0: i32, %arg1: i32) -> (i32, i32, i32) {
    %c0_i32 = arith.constant 0 : i32
    %c0_i32_0 = arith.constant 0 : i32
    %c0_i32_1 = arith.constant 0 : i32
    %c0_i32_2 = arith.constant 0 : i32
    return %c0_i32, %c0_i32_0, %c0_i32_1 : i32, i32, i32
  }
  func.func @transform_3(%arg0: i32, %arg1: i32) -> (i32, i32) {
    %c0_i32 = arith.constant 0 : i32
    %c0_i32_0 = arith.constant 0 : i32
    %c0_i32_1 = arith.constant 0 : i32
    return %c0_i32, %c0_i32_0 : i32, i32
  }
  func.func @transform_4(%arg0: i32, %arg1: i32) -> (i32, i32, i32, i32) {
    %c0_i32 = arith.constant 0 : i32
    %c0_i32_0 = arith.constant 0 : i32
    %c0_i32_1 = arith.constant 0 : i32
    return %arg0, %arg1, %c0_i32, %c0_i32_0 : i32, i32, i32, i32
  }
  func.func @transform_5(%arg0: i32, %arg1: i32) -> (i32, i32, i32, i32) {
    %c0_i32 = arith.constant 0 : i32
    %c0_i32_0 = arith.constant 0 : i32
    %c0_i32_1 = arith.constant 0 : i32
    return %arg0, %arg1, %c0_i32, %c0_i32_0 : i32, i32, i32, i32
  }
}

</mosaic_0001>

<llo_original>
// kernel: tpu_custom_call.1
$region0: #{tpu_custom_call.1}
  #allocation0 [shape = 'u32[]', space=smem, size = 0x4, offset = 0x4, fixed_abs, tag = 'smem constant byte address 0x4 - core index']
  #allocation1 [shape = 'u32[144,128]{1,0:T(1,128)}', space=vmem, size = 0x12000, scoped, tag = 'internal scratch']
  #allocation2 [shape = 'bf16[18,18,32]{2,1,0:T(8,128)(2,1)}', space=vmem, size = 0x1b000, scoped, tag = 'scratch operand']
  %s0 = inlined_call_operand.hbm [shape: bf16[2,32,18,32], index: 0, kind: input, shape index: {}]
  %s1 = inlined_call_operand.hbm [shape: bf16[2,32,18,32], index: 1, kind: input, shape index: {}]
  %s2 = inlined_call_operand.hbm [shape: bf16[9,32,48], index: 2, kind: input, shape index: {}]
  %s3 = inlined_call_operand.hbm [shape: f32[1,48], index: 3, kind: input, shape index: {}]
  %s4 = inlined_call_operand.hbm [shape: bf16[2,16,16,48], index: 4, kind: input, shape index: {}]
  %s5 = inlined_call_operand.hbm [shape: bf16[2,16,16,48], index: 5, kind: output, shape index: {}]
  %s6 = sld [smem:[#allocation0]]
  $region73: #{tpu_custom_call.1} parent=0
    _
  %s8 = ssub.s32 1, %s6
  %s9 = scalar_select 0, %s8, %s6
  $region1: #{tpu_custom_call.1} parent=0
    #allocation3 [shape = 'u8[196608]{0}', space=vmem, size = 0x30000, scoped, tag = 'input window, operand 0']
    #allocation4 [shape = 's32[2]{0}', space=sflag, size = 0x8, scoped, tag = 'scoped memory for tpu_custom_call.1']
    #allocation5 [shape = 's32[2]{0}', space=sflag, size = 0x8, scoped, tag = 'scoped memory for tpu_custom_call.1']
    #allocation6 [shape = 'u8[24576]{0}', space=vmem, size = 0x6000, scoped, tag = 'input window, operand 1']
    #allocation7 [shape = 's32[2]{0}', space=sflag, size = 0x8, scoped, tag = 'scoped memory for tpu_custom_call.1']
    #allocation8 [shape = 'u8[73728]{0}', space=vmem, size = 0x12000, scoped, tag = 'input window, operand 2, single buffered']
    #allocation9 [shape = 'u8[512]{0}', space=vmem, size = 0x400, scoped, tag = 'input window, operand 3, single buffered']
    #allocation10 [shape = 's32[1]{0}', space=sflag, size = 0x4, scoped, tag = 'scoped memory for tpu_custom_call.1']
    #allocation11 [shape = 'u8[131072]{0}', space=vmem, size = 0x20000, scoped, tag = 'input window, operand 4']
    #allocation12 [shape = 'u8[131072]{0}', space=vmem, size = 0x20000, scoped, tag = 'output window, operand 0']
    %10 = vsyncpa [#allocation4], 0
    %s11 = scalar_lea.sflag [#allocation4], 1
    %12 = vsyncpa %s11, 0
    %13 = vsyncpa [#allocation7], 0
    %s14 = scalar_lea.sflag [#allocation7], 1
    %15 = vsyncpa %s14, 0
    %16 = vsyncpa [#allocation10], 0
    %17 = vsyncpa [#allocation5], 0
    %s18 = scalar_lea.sflag [#allocation5], 1
    %19 = vsyncpa %s18, 0
    loop: start=0, step=1, limit=4
    $region2: #{tpu_custom_call.1} parent=1 // loop_pre_header
      _
    $region3: #{tpu_custom_call.1} parent=1 // loop_header
      %s21 = sphi 0, %s25
      %p22 = scmp.ge.s32.totalorder %s21, 4
      %s28 = sphi 0, %s40
      %s29 = sphi 0, %s36
      %s30 = sphi 0, %s28
      %s31 = sphi 0, %s29
      %s32 = sphi 0, %s30
      %s33 = sphi 0, %s31
      %s45 = sphi 0, %s47
      %s48 = sphi 0, %s45
      %s49 = sphi 0, %s48
      %s65 = sphi 0, %s49
      %s77 = sphi 0, %s79
      %s80 = sphi 0, %s77
      %s81 = sphi 0, %s80
      %s97 = sphi 0, %s81
      %s101 = sphi 0, %s101
      %s103 = sphi 0, %s101
      %s104 = sphi 0, %s103
      %s118 = sphi 0, %s104
      %s122 = sphi 0, %s122
      %s124 = sphi 0, %s122
      %s125 = sphi 0, %s124
      %s139 = sphi 0, %s125
      %s147 = sphi 0, %s149
      %s150 = sphi 0, %s147
      %s151 = sphi 0, %s150
      %s167 = sphi 0, %s151
      %s175 = sphi 0, %s177
      %s178 = sphi 0, %s175
      %s179 = sphi 0, %s178
      %s195 = sphi 0, %s179
    $region4: #{tpu_custom_call.1} parent=1 // loop_header_branch
      %24 = sbr.rel (%p22) target = $region8
    $region5: #{tpu_custom_call.1} parent=1 // loop_body
      %s26 = ssub.s32 %s21, 1
      %s27 = ssub.s32 %s21, 2
      %s34 = sadd.s32 1, %s29
      %p35 = scmp.ge.s32.totalorder %s34, 1
      %s36 = scalar_select %p35, 0, %s34
      %s37 = sadd.s32 1, %s28
      %s38 = scalar_select %p35, %s37, %s28
      %p39 = scmp.ge.s32.totalorder %s38, 2
      %s40 = scalar_select %p39, 0, %s38
      %s41 = ssub.s32 %s28, %s40
      %s42 = ssub.s32 %s29, %s36
      %s43 = sor.u32 %s41, %s42
      %p44 = scmp.eq.s32.totalorder %s43, 0
      %s46 = sadd.s32 %s45, 1
      %s47 = scalar_select %p44, %s45, %s46
      %p50 = pneg %p44
      %p51 = scmp.eq.s32.totalorder %s21, 1
      %p52 = por %p50, %p51
      %p53 = scmp.ne.s32.totalorder %s45, %s48
      %p54 = scmp.eq.s32.totalorder %s21, 0
      %p55 = por %p53, %p54
      %p56 = scmp.ne.s32.totalorder %s45, %s48
      %p57 = scmp.eq.s32.totalorder %s26, 1
      %p58 = por %p56, %p57
      %p59 = scmp.ne.s32.totalorder %s48, %s49
      %p60 = scmp.eq.s32.totalorder %s26, 0
      %p61 = por %p59, %p60
      %p62 = scmp.ne.s32.totalorder %s48, %s49
      %p63 = scmp.eq.s32.totalorder %s27, 1
      %p64 = por %p62, %p63
      %p66 = scmp.ne.s32.totalorder %s49, %s65
      %p67 = scmp.eq.s32.totalorder %s27, 0
      %p68 = por %p66, %p67
      %s69 = sadd.s32 %s29, 1
      %s70 = smul.u32 %s69, 8
      %s71 = sadd.s32 %s36, 1
      %s72 = smul.u32 %s71, 8
      %s73 = ssub.s32 %s28, %s40
      %s74 = ssub.s32 %s70, %s72
      %s75 = sor.u32 %s73, %s74
      %p76 = scmp.eq.s32.totalorder %s75, 0
      %s78 = sadd.s32 %s77, 1
      %s79 = scalar_select %p76, %s77, %s78
      %p82 = pneg %p76
      %p83 = scmp.eq.s32.totalorder %s21, 1
      %p84 = por %p82, %p83
      %p85 = scmp.ne.s32.totalorder %s77, %s80
      %p86 = scmp.eq.s32.totalorder %s21, 0
      %p87 = por %p85, %p86
      %p88 = scmp.ne.s32.totalorder %s77, %s80
      %p89 = scmp.eq.s32.totalorder %s26, 1
      %p90 = por %p88, %p89
      %p91 = scmp.ne.s32.totalorder %s80, %s81
      %p92 = scmp.eq.s32.totalorder %s26, 0
      %p93 = por %p91, %p92
      %p94 = scmp.ne.s32.totalorder %s80, %s81
      %p95 = scmp.eq.s32.totalorder %s27, 1
      %p96 = por %p94, %p95
      %p98 = scmp.ne.s32.totalorder %s81, %s97
      %p99 = scmp.eq.s32.totalorder %s27, 0
      %p100 = por %p98, %p99
      %s102 = sadd.s32 %s101, 1
      %p105 = scmp.eq.s32.totalorder %s21, 1
      %p106 = scmp.ne.s32.totalorder %s101, %s103
      %p107 = scmp.eq.s32.totalorder %s21, 0
      %p108 = por %p106, %p107
      %p109 = scmp.ne.s32.totalorder %s101, %s103
      %p110 = scmp.eq.s32.totalorder %s26, 1
      %p111 = por %p109, %p110
      %p112 = scmp.ne.s32.totalorder %s103, %s104
      %p113 = scmp.eq.s32.totalorder %s26, 0
      %p114 = por %p112, %p113
      %p115 = scmp.ne.s32.totalorder %s103, %s104
      %p116 = scmp.eq.s32.totalorder %s27, 1
      %p117 = por %p115, %p116
      %p119 = scmp.ne.s32.totalorder %s104, %s118
      %p120 = scmp.eq.s32.totalorder %s27, 0
      %p121 = por %p119, %p120
      %s123 = sadd.s32 %s122, 1
      %p126 = scmp.eq.s32.totalorder %s21, 1
      %p127 = scmp.ne.s32.totalorder %s122, %s124
      %p128 = scmp.eq.s32.totalorder %s21, 0
      %p129 = por %p127, %p128
      %p130 = scmp.ne.s32.totalorder %s122, %s124
      %p131 = scmp.eq.s32.totalorder %s26, 1
      %p132 = por %p130, %p131
      %p133 = scmp.ne.s32.totalorder %s124, %s125
      %p134 = scmp.eq.s32.totalorder %s26, 0
      %p135 = por %p133, %p134
      %p136 = scmp.ne.s32.totalorder %s124, %s125
      %p137 = scmp.eq.s32.totalorder %s27, 1
      %p138 = por %p136, %p137
      %p140 = scmp.ne.s32.totalorder %s125, %s139
      %p141 = scmp.eq.s32.totalorder %s27, 0
      %p142 = por %p140, %p141
      %s143 = ssub.s32 %s28, %s40
      %s144 = ssub.s32 %s29, %s36
      %s145 = sor.u32 %s143, %s144
      %p146 = scmp.eq.s32.totalorder %s145, 0
      %s148 = sadd.s32 %s147, 1
      %s149 = scalar_select %p146, %s147, %s148
      %p152 = pneg %p146
      %p153 = scmp.eq.s32.totalorder %s21, 1
      %p154 = por %p152, %p153
      %p155 = scmp.ne.s32.totalorder %s147, %s150
      %p156 = scmp.eq.s32.totalorder %s21, 0
      %p157 = por %p155, %p156
      %p158 = scmp.ne.s32.totalorder %s147, %s150
      %p159 = scmp.eq.s32.totalorder %s26, 1
      %p160 = por %p158, %p159
      %p161 = scmp.ne.s32.totalorder %s150, %s151
      %p162 = scmp.eq.s32.totalorder %s26, 0
      %p163 = por %p161, %p162
      %p164 = scmp.ne.s32.totalorder %s150, %s151
      %p165 = scmp.eq.s32.totalorder %s27, 1
      %p166 = por %p164, %p165
      %p168 = scmp.ne.s32.totalorder %s151, %s167
      %p169 = scmp.eq.s32.totalorder %s27, 0
      %p170 = por %p168, %p169
      %s171 = ssub.s32 %s28, %s40
      %s172 = ssub.s32 %s29, %s36
      %s173 = sor.u32 %s171, %s172
      %p174 = scmp.eq.s32.totalorder %s173, 0
      %s176 = sadd.s32 %s175, 1
      %s177 = scalar_select %p174, %s175, %s176
      %p180 = pneg %p174
      %p181 = scmp.eq.s32.totalorder %s21, 1
      %p182 = por %p180, %p181
      %p183 = scmp.ne.s32.totalorder %s175, %s178
      %p184 = scmp.eq.s32.totalorder %s21, 0
      %p185 = por %p183, %p184
      %p186 = scmp.ne.s32.totalorder %s175, %s178
      %p187 = scmp.eq.s32.totalorder %s26, 1
      %p188 = por %p186, %p187
      %p189 = scmp.ne.s32.totalorder %s178, %s179
      %p190 = scmp.eq.s32.totalorder %s26, 0
      %p191 = por %p189, %p190
      %p192 = scmp.ne.s32.totalorder %s178, %s179
      %p193 = scmp.eq.s32.totalorder %s27, 1
      %p194 = por %p192, %p193
      %p196 = scmp.ne.s32.totalorder %s179, %s195
      %p197 = scmp.eq.s32.totalorder %s27, 0
      %p198 = por %p196, %p197
      %p199 = scmp.le.s32.totalorder 1, %s21
      %p200 = scmp.lt.s32.totalorder %s21, 3
      %p201 = pnand %p199, %p200
      %p202 = pneg %p201
      // Predicated region
      $region9: #{tpu_custom_call.1} parent=5 // pred_check
        _
      $region10: #{tpu_custom_call.1} parent=5 // pred_check_branch
        %204 = sbr.rel (%p201) target = $region12
      $region11: #{tpu_custom_call.1} parent=5 // pred_region
        %s205 = ssub.s32 %s21, 1
        // Predicated region
        $region13: #{tpu_custom_call.1} parent=11 // pred_check
          %p206 = pneg %p114
        $region14: #{tpu_custom_call.1} parent=11 // pred_check_branch
          %208 = sbr.rel (%p206) target = $region16
        $region15: #{tpu_custom_call.1} parent=11 // pred_region
          %s210 = ssub.s32 2304, 2304
          %211 = vsyncadd [#allocation7], %s210
          %s212 = sshll.u32 [#allocation8], 4
          %s213 = int_to_ptr.vmem [resolvable:$true] %s212
          %218 = dma.hbm_to_vmem [thread:$0]  %s2, 2304, %s213, [#allocation7], 64, 64, 4
        $region16: #{tpu_custom_call.1} parent=11 // pred_fallthru
          _
        // Predicated region
        $region17: #{tpu_custom_call.1} parent=11 // pred_check
          %p219 = pneg %p135
        $region18: #{tpu_custom_call.1} parent=11 // pred_check_branch
          %221 = sbr.rel (%p219) target = $region20
        $region19: #{tpu_custom_call.1} parent=11 // pred_region
          %s223 = ssub.s32 16, 16
          %224 = vsyncadd [#allocation10], %s223
          %s226 = sshll.u32 [#allocation9], 4
          %s227 = int_to_ptr.vmem [resolvable:$true] %s226
          %229 = dma.hbm_to_vmem [thread:$0]  %s3, 16, %s227, [#allocation10]
        $region20: #{tpu_custom_call.1} parent=11 // pred_fallthru
          _
      $region12: #{tpu_custom_call.1} parent=5 // pred_fallthru
        _
      %p230 = scmp.lt.s32.totalorder %s21, 2
      // Predicated region
      $region21: #{tpu_custom_call.1} parent=5 // pred_check
        %p231 = pneg %p230
      $region22: #{tpu_custom_call.1} parent=5 // pred_check_branch
        %233 = sbr.rel (%p231) target = $region24
      $region23: #{tpu_custom_call.1} parent=5 // pred_region
        // Predicated region
        $region25: #{tpu_custom_call.1} parent=23 // pred_check
          %p234 = pneg %p55
        $region26: #{tpu_custom_call.1} parent=23 // pred_check_branch
          %236 = sbr.rel (%p234) target = $region28
        $region27: #{tpu_custom_call.1} parent=23 // pred_region
          %s237 = sand.u32 %s21, 1
          %s238 = scalar_lea.sflag [#allocation4], %s237
          %s239 = sand.u32 %s45, 1
          %s240 = smul.addr %s239, 192
          %s241 = scalar_lea.vmem [#allocation3], %s240
          %s242 = smul.u32 16, %s29
          %s244 = ssub.s32 3072, 3072
          %245 = vsyncadd %s238, %s244
          %s246 = smul.addr %s242, 3
          %s247 = smul.addr %s28, 96
          %s248 = sadd.s32 %s246, %s247
          %s249 = smul.addr %s248, 64
          %s250 = scalar_lea.hbm %s0, %s249
          %s251 = sshll.u32 %s241, 4
          %s252 = int_to_ptr.vmem [resolvable:$true] %s251
          %257 = dma.hbm_to_vmem [thread:$0]  %s250, 3072, %s252, %s238, 64, 64, 4
        $region28: #{tpu_custom_call.1} parent=23 // pred_fallthru
          _
        // Predicated region
        $region29: #{tpu_custom_call.1} parent=23 // pred_check
          %p258 = pneg %p87
        $region30: #{tpu_custom_call.1} parent=23 // pred_check_branch
          %260 = sbr.rel (%p258) target = $region32
        $region31: #{tpu_custom_call.1} parent=23 // pred_region
          %s261 = sand.u32 %s21, 1
          %s262 = scalar_lea.sflag [#allocation7], %s261
          %s263 = sand.u32 %s77, 1
          %s264 = smul.addr %s263, 24
          %s265 = scalar_lea.vmem [#allocation6], %s264
          %s266 = sadd.s32 %s29, 1
          %s267 = smul.u32 %s266, 8
          %s268 = smul.u32 2, %s267
          %s270 = ssub.s32 384, 384
          %271 = vsyncadd %s262, %s270
          %s272 = smul.addr %s268, 3
          %s273 = smul.addr %s28, 96
          %s274 = sadd.s32 %s272, %s273
          %s275 = smul.addr %s274, 64
          %s276 = scalar_lea.hbm %s1, %s275
          %s277 = sshll.u32 %s265, 4
          %s278 = int_to_ptr.vmem [resolvable:$true] %s277
          %283 = dma.hbm_to_vmem [thread:$0]  %s276, 384, %s278, %s262, 64, 64, 4
        $region32: #{tpu_custom_call.1} parent=23 // pred_fallthru
          _
        // Predicated region
        $region33: #{tpu_custom_call.1} parent=23 // pred_check
          %p284 = pneg %p157
        $region34: #{tpu_custom_call.1} parent=23 // pred_check_branch
          %286 = sbr.rel (%p284) target = $region36
        $region35: #{tpu_custom_call.1} parent=23 // pred_region
          %s287 = sand.u32 %s21, 1
          %s288 = scalar_lea.sflag [#allocation4], %s287
          %s289 = sand.u32 %s147, 1
          %s290 = smul.addr %s289, 128
          %s291 = scalar_lea.vmem [#allocation11], %s290
          %s292 = smul.u32 16, %s29
          %s294 = ssub.s32 2048, 2048
          %295 = vsyncadd %s288, %s294
          %s296 = smul.addr %s292, 2
          %s297 = smul.addr %s28, 32
          %s298 = sadd.s32 %s296, %s297
          %s299 = smul.addr %s298, 64
          %s300 = scalar_lea.hbm %s4, %s299
          %s301 = sshll.u32 %s291, 4
          %s302 = int_to_ptr.vmem [resolvable:$true] %s301
          %307 = dma.hbm_to_vmem [thread:$0]  %s300, 2048, %s302, %s288, 64, 64, 4
        $region36: #{tpu_custom_call.1} parent=23 // pred_fallthru
          _
      $region24: #{tpu_custom_call.1} parent=5 // pred_fallthru
        _
      %p308 = scmp.le.s32.totalorder 1, %s21
      %p309 = scmp.lt.s32.totalorder %s21, 3
      %p310 = pnand %p308, %p309
      %p311 = pneg %p310
      // Predicated region
      $region37: #{tpu_custom_call.1} parent=5 // pred_check
        _
      $region38: #{tpu_custom_call.1} parent=5 // pred_check_branch
        %313 = sbr.rel (%p310) target = $region40
      $region39: #{tpu_custom_call.1} parent=5 // pred_region
        %s314 = ssub.s32 %s21, 1
        %s315 = sand.u32 %s26, 1
        %s316 = scalar_lea.sflag [#allocation4], %s315
        %s317 = sand.u32 %s48, 1
        %s318 = smul.addr %s317, 192
        %s319 = scalar_lea.vmem [#allocation3], %s318
        // Predicated region
        $region41: #{tpu_custom_call.1} parent=39 // pred_check
          %p320 = pneg %p61
        $region42: #{tpu_custom_call.1} parent=39 // pred_check_branch
          %322 = sbr.rel (%p320) target = $region44
        $region43: #{tpu_custom_call.1} parent=39 // pred_region
          %323 = dma.done %s316, 3072
        $region44: #{tpu_custom_call.1} parent=39 // pred_fallthru
          _
        %s324 = sand.u32 %s26, 1
        %s325 = scalar_lea.sflag [#allocation7], %s324
        %s326 = sand.u32 %s80, 1
        %s327 = smul.addr %s326, 24
        %s328 = scalar_lea.vmem [#allocation6], %s327
        // Predicated region
        $region45: #{tpu_custom_call.1} parent=39 // pred_check
          %p329 = pneg %p93
        $region46: #{tpu_custom_call.1} parent=39 // pred_check_branch
          %331 = sbr.rel (%p329) target = $region48
        $region47: #{tpu_custom_call.1} parent=39 // pred_region
          %332 = dma.done %s325, 384
        $region48: #{tpu_custom_call.1} parent=39 // pred_fallthru
          _
        // Predicated region
        $region49: #{tpu_custom_call.1} parent=39 // pred_check
          %p333 = pneg %p114
        $region50: #{tpu_custom_call.1} parent=39 // pred_check_branch
          %335 = sbr.rel (%p333) target = $region52
        $region51: #{tpu_custom_call.1} parent=39 // pred_region
          %336 = dma.done [#allocation7], 2304
        $region52: #{tpu_custom_call.1} parent=39 // pred_fallthru
          _
        // Predicated region
        $region53: #{tpu_custom_call.1} parent=39 // pred_check
          %p337 = pneg %p135
        $region54: #{tpu_custom_call.1} parent=39 // pred_check_branch
          %339 = sbr.rel (%p337) target = $region56
        $region55: #{tpu_custom_call.1} parent=39 // pred_region
          %340 = dma.done [#allocation10], 16
        $region56: #{tpu_custom_call.1} parent=39 // pred_fallthru
          _
        %s341 = sand.u32 %s26, 1
        %s342 = scalar_lea.sflag [#allocation4], %s341
        %s343 = sand.u32 %s150, 1
        %s344 = smul.addr %s343, 128
        %s345 = scalar_lea.vmem [#allocation11], %s344
        // Predicated region
        $region57: #{tpu_custom_call.1} parent=39 // pred_check
          %p346 = pneg %p163
        $region58: #{tpu_custom_call.1} parent=39 // pred_check_branch
          %348 = sbr.rel (%p346) target = $region60
        $region59: #{tpu_custom_call.1} parent=39 // pred_region
          %349 = dma.done %s342, 2048
        $region60: #{tpu_custom_call.1} parent=39 // pred_fallthru
          _
        %s350 = sand.u32 %s26, 1
        %s351 = scalar_lea.sflag [#allocation4], %s350
        %s352 = sand.u32 %s48, 1
        %s353 = smul.addr %s352, 192
        %s354 = scalar_lea.vmem [#allocation3], %s353
        %p355 = pneg %p61
        %p356 = pneg %p58
        %s357 = sand.u32 %s26, 1
        %s358 = scalar_lea.sflag [#allocation7], %s357
        %s359 = sand.u32 %s80, 1
        %s360 = smul.addr %s359, 24
        %s361 = scalar_lea.vmem [#allocation6], %s360
        %p362 = pneg %p93
        %p363 = pneg %p90
        %p364 = pneg %p114
        %p365 = pneg %p111
        %p366 = pneg %p135
        %p367 = pneg %p132
        %s368 = sand.u32 %s26, 1
        %s369 = scalar_lea.sflag [#allocation4], %s368
        %s370 = sand.u32 %s150, 1
        %s371 = smul.addr %s370, 128
        %s372 = scalar_lea.vmem [#allocation11], %s371
        %p373 = pneg %p163
        %p374 = pneg %p160
        %p375 = pneg %p191
        %p376 = pneg %p188
        %s377 = sand.u32 %s178, 1
        %s378 = scalar_lea.sflag [#allocation5], %s377
        %s379 = sand.u32 %s178, 1
        %s380 = smul.addr %s379, 128
        %s381 = scalar_lea.vmem [#allocation12], %s380
        %s382 = smul.u32 16, %s31
        %s383 = sadd.s32 %s31, 1
        %s384 = smul.u32 %s383, 8
        %s385 = smul.u32 2, %s384
        %s386 = smul.u32 16, %s31
        %s387 = smul.u32 16, %s31
        %v389 = vld [vmem:[%s319] sm:$0xf]
        %v390 = vld [vmem:[%s319 + $0x4] sm:$0xf]
        %v391 = vld [vmem:[%s319 + $0x8] sm:$0x1]
        %v392 = vld [vmem:[%s319 + $0xc] sm:$0xf]
        %v393 = vld [vmem:[%s319 + $0x10] sm:$0xf]
        %v394 = vld [vmem:[%s319 + $0x14] sm:$0x1]
        %v395 = vld [vmem:[%s319 + $0x18] sm:$0xf]
        %v396 = vld [vmem:[%s319 + $0x1c] sm:$0xf]
        %v397 = vld [vmem:[%s319 + $0x20] sm:$0x1]
        %v398 = vld [vmem:[%s319 + $0x24] sm:$0xf]
        %v399 = vld [vmem:[%s319 + $0x28] sm:$0xf]
        %v400 = vld [vmem:[%s319 + $0x2c] sm:$0x1]
        %v401 = vld [vmem:[%s319 + $0x30] sm:$0xf]
        %v402 = vld [vmem:[%s319 + $0x34] sm:$0xf]
        %v403 = vld [vmem:[%s319 + $0x38] sm:$0x1]
        %v404 = vld [vmem:[%s319 + $0x3c] sm:$0xf]
        %v405 = vld [vmem:[%s319 + $0x40] sm:$0xf]
        %v406 = vld [vmem:[%s319 + $0x44] sm:$0x1]
        %v407 = vld [vmem:[%s319 + $0x48] sm:$0xf]
        %v408 = vld [vmem:[%s319 + $0x4c] sm:$0xf]
        %v409 = vld [vmem:[%s319 + $0x50] sm:$0x1]
        %v410 = vld [vmem:[%s319 + $0x54] sm:$0xf]
        %v411 = vld [vmem:[%s319 + $0x58] sm:$0xf]
        %v412 = vld [vmem:[%s319 + $0x5c] sm:$0x1]
        %v413 = vld [vmem:[%s319 + $0x60] sm:$0xf]
        %v414 = vld [vmem:[%s319 + $0x64] sm:$0xf]
        %v415 = vld [vmem:[%s319 + $0x68] sm:$0x1]
        %v416 = vld [vmem:[%s319 + $0x6c] sm:$0xf]
        %v417 = vld [vmem:[%s319 + $0x70] sm:$0xf]
        %v418 = vld [vmem:[%s319 + $0x74] sm:$0x1]
        %v419 = vld [vmem:[%s319 + $0x78] sm:$0xf]
        %v420 = vld [vmem:[%s319 + $0x7c] sm:$0xf]
        %v421 = vld [vmem:[%s319 + $0x80] sm:$0x1]
        %v422 = vld [vmem:[%s319 + $0x84] sm:$0xf]
        %v423 = vld [vmem:[%s319 + $0x88] sm:$0xf]
        %v424 = vld [vmem:[%s319 + $0x8c] sm:$0x1]
        %v425 = vld [vmem:[%s319 + $0x90] sm:$0xf]
        %v426 = vld [vmem:[%s319 + $0x94] sm:$0xf]
        %v427 = vld [vmem:[%s319 + $0x98] sm:$0x1]
        %v428 = vld [vmem:[%s319 + $0x9c] sm:$0xf]
        %v429 = vld [vmem:[%s319 + $0xa0] sm:$0xf]
        %v430 = vld [vmem:[%s319 + $0xa4] sm:$0x1]
        %v431 = vld [vmem:[%s319 + $0xa8] sm:$0xf]
        %v432 = vld [vmem:[%s319 + $0xac] sm:$0xf]
        %v433 = vld [vmem:[%s319 + $0xb0] sm:$0x1]
        %v434 = vld [vmem:[%s319 + $0xb4] sm:$0xf]
        %v435 = vld [vmem:[%s319 + $0xb8] sm:$0xf]
        %v436 = vld [vmem:[%s319 + $0xbc] sm:$0x1]
        %vm437 = vcmask 257024
        %438 = vst.msk [vmem:[#allocation2] sm:$0xf] %vm437, %v389
        %439 = vst.msk [vmem:[#allocation2 + $0x4] sm:$0xf] %vm437, %v390
        %vm440 = vcmask 253952
        %441 = vst.msk [vmem:[#allocation2 + $0x8] sm:$0x1] %vm440, %v391
        %442 = vst.msk [vmem:[#allocation2 + $0xc] sm:$0xf] %vm437, %v392
        %443 = vst.msk [vmem:[#allocation2 + $0x10] sm:$0xf] %vm437, %v393
        %444 = vst.msk [vmem:[#allocation2 + $0x14] sm:$0x1] %vm440, %v394
        %445 = vst.msk [vmem:[#allocation2 + $0x18] sm:$0xf] %vm437, %v395
        %446 = vst.msk [vmem:[#allocation2 + $0x1c] sm:$0xf] %vm437, %v396
        %447 = vst.msk [vmem:[#allocation2 + $0x20] sm:$0x1] %vm440, %v397
        %448 = vst.msk [vmem:[#allocation2 + $0x24] sm:$0xf] %vm437, %v398
        %449 = vst.msk [vmem:[#allocation2 + $0x28] sm:$0xf] %vm437, %v399
        %450 = vst.msk [vmem:[#allocation2 + $0x2c] sm:$0x1] %vm440, %v400
        %451 = vst.msk [vmem:[#allocation2 + $0x30] sm:$0xf] %vm437, %v401
        %452 = vst.msk [vmem:[#allocation2 + $0x34] sm:$0xf] %vm437, %v402
        %453 = vst.msk [vmem:[#allocation2 + $0x38] sm:$0x1] %vm440, %v403
        %454 = vst.msk [vmem:[#allocation2 + $0x3c] sm:$0xf] %vm437, %v404
        %455 = vst.msk [vmem:[#allocation2 + $0x40] sm:$0xf] %vm437, %v405
        %456 = vst.msk [vmem:[#allocation2 + $0x44] sm:$0x1] %vm440, %v406
        %457 = vst.msk [vmem:[#allocation2 + $0x48] sm:$0xf] %vm437, %v407
        %458 = vst.msk [vmem:[#allocation2 + $0x4c] sm:$0xf] %vm437, %v408
        %459 = vst.msk [vmem:[#allocation2 + $0x50] sm:$0x1] %vm440, %v409
        %460 = vst.msk [vmem:[#allocation2 + $0x54] sm:$0xf] %vm437, %v410
        %461 = vst.msk [vmem:[#allocation2 + $0x58] sm:$0xf] %vm437, %v411
        %462 = vst.msk [vmem:[#allocation2 + $0x5c] sm:$0x1] %vm440, %v412
        %463 = vst.msk [vmem:[#allocation2 + $0x60] sm:$0xf] %vm437, %v413
        %464 = vst.msk [vmem:[#allocation2 + $0x64] sm:$0xf] %vm437, %v414
        %465 = vst.msk [vmem:[#allocation2 + $0x68] sm:$0x1] %vm440, %v415
        %466 = vst.msk [vmem:[#allocation2 + $0x6c] sm:$0xf] %vm437, %v416
        %467 = vst.msk [vmem:[#allocation2 + $0x70] sm:$0xf] %vm437, %v417
        %468 = vst.msk [vmem:[#allocation2 + $0x74] sm:$0x1] %vm440, %v418
        %469 = vst.msk [vmem:[#allocation2 + $0x78] sm:$0xf] %vm437, %v419
        %470 = vst.msk [vmem:[#allocation2 + $0x7c] sm:$0xf] %vm437, %v420
        %471 = vst.msk [vmem:[#allocation2 + $0x80] sm:$0x1] %vm440, %v421
        %472 = vst.msk [vmem:[#allocation2 + $0x84] sm:$0xf] %vm437, %v422
        %473 = vst.msk [vmem:[#allocation2 + $0x88] sm:$0xf] %vm437, %v423
        %474 = vst.msk [vmem:[#allocation2 + $0x8c] sm:$0x1] %vm440, %v424
        %475 = vst.msk [vmem:[#allocation2 + $0x90] sm:$0xf] %vm437, %v425
        %476 = vst.msk [vmem:[#allocation2 + $0x94] sm:$0xf] %vm437, %v426
        %477 = vst.msk [vmem:[#allocation2 + $0x98] sm:$0x1] %vm440, %v427
        %478 = vst.msk [vmem:[#allocation2 + $0x9c] sm:$0xf] %vm437, %v428
        %479 = vst.msk [vmem:[#allocation2 + $0xa0] sm:$0xf] %vm437, %v429
        %480 = vst.msk [vmem:[#allocation2 + $0xa4] sm:$0x1] %vm440, %v430
        %481 = vst.msk [vmem:[#allocation2 + $0xa8] sm:$0xf] %vm437, %v431
        %482 = vst.msk [vmem:[#allocation2 + $0xac] sm:$0xf] %vm437, %v432
        %483 = vst.msk [vmem:[#allocation2 + $0xb0] sm:$0x1] %vm440, %v433
        %484 = vst.msk [vmem:[#allocation2 + $0xb4] sm:$0xf] %vm437, %v434
        %485 = vst.msk [vmem:[#allocation2 + $0xb8] sm:$0xf] %vm437, %v435
        %486 = vst.msk [vmem:[#allocation2 + $0xbc] sm:$0x1] %vm440, %v436
        %v487 = vld [vmem:[%s328] sm:$0xf]
        %v488 = vld [vmem:[%s328 + $0x4] sm:$0xf]
        %v489 = vld [vmem:[%s328 + $0x8] sm:$0x1]
        %v490 = vld [vmem:[%s328 + $0xc] sm:$0xf]
        %v491 = vld [vmem:[%s328 + $0x10] sm:$0xf]
        %v492 = vld [vmem:[%s328 + $0x14] sm:$0x1]
        %s493 = scalar_lea.vmem [#allocation2], 192
        %494 = vst.msk [vmem:[%s493] sm:$0xf] %vm437, %v487
        %495 = vst.msk [vmem:[%s493 + $0x4] sm:$0xf] %vm437, %v488
        %496 = vst.msk [vmem:[%s493 + $0x8] sm:$0x1] %vm440, %v489
        %497 = vst.msk [vmem:[%s493 + $0xc] sm:$0xf] %vm437, %v490
        %498 = vst.msk [vmem:[%s493 + $0x10] sm:$0xf] %vm437, %v491
        %499 = vst.msk [vmem:[%s493 + $0x14] sm:$0x1] %vm440, %v492
        %v500 = vld [vmem:[#allocation2] sm:$0xf]
        %v501 = vld [vmem:[#allocation2 + $0x4] sm:$0xf]
        %v502 = vld [vmem:[#allocation2 + $0x8] sm:$0x1]
        %v503 = vld [vmem:[#allocation2 + $0xc] sm:$0xf]
        %v504 = vld [vmem:[#allocation2 + $0x10] sm:$0xf]
        %v505 = vld [vmem:[#allocation2 + $0x14] sm:$0x1]
        %v506 = vld [vmem:[#allocation2 + $0x18] sm:$0xf]
        %v507 = vld [vmem:[#allocation2 + $0x1c] sm:$0xf]
        %v508 = vld [vmem:[#allocation2 + $0x20] sm:$0x1]
        %v509 = vld [vmem:[#allocation2 + $0x24] sm:$0xf]
        %v510 = vld [vmem:[#allocation2 + $0x28] sm:$0xf]
        %v511 = vld [vmem:[#allocation2 + $0x2c] sm:$0x1]
        %v512 = vld [vmem:[#allocation2 + $0x30] sm:$0xf]
        %v513 = vld [vmem:[#allocation2 + $0x34] sm:$0xf]
        %v514 = vld [vmem:[#allocation2 + $0x38] sm:$0x1]
        %v515 = vld [vmem:[#allocation2 + $0x3c] sm:$0xf]
        %v516 = vld [vmem:[#allocation2 + $0x40] sm:$0xf]
        %v517 = vld [vmem:[#allocation2 + $0x44] sm:$0x1]
        %v518 = vld [vmem:[#allocation2 + $0x48] sm:$0xf]
        %v519 = vld [vmem:[#allocation2 + $0x4c] sm:$0xf]
        %v520 = vld [vmem:[#allocation2 + $0x50] sm:$0x1]
        %v521 = vld [vmem:[#allocation2 + $0x54] sm:$0xf]
        %v522 = vld [vmem:[#allocation2 + $0x58] sm:$0xf]
        %v523 = vld [vmem:[#allocation2 + $0x5c] sm:$0x1]
        %v524 = vld [vmem:[#allocation2 + $0x60] sm:$0xf]
        %v525 = vld [vmem:[#allocation2 + $0x64] sm:$0xf]
        %v526 = vld [vmem:[#allocation2 + $0x68] sm:$0x1]
        %v527 = vld [vmem:[#allocation2 + $0x6c] sm:$0xf]
        %v528 = vld [vmem:[#allocation2 + $0x70] sm:$0xf]
        %v529 = vld [vmem:[#allocation2 + $0x74] sm:$0x1]
        %v530 = vld [vmem:[#allocation2 + $0x78] sm:$0xf]
        %v531 = vld [vmem:[#allocation2 + $0x7c] sm:$0xf]
        %v532 = vld [vmem:[#allocation2 + $0x80] sm:$0x1]
        %v533 = vld [vmem:[#allocation2 + $0x84] sm:$0xf]
        %v534 = vld [vmem:[#allocation2 + $0x88] sm:$0xf]
        %v535 = vld [vmem:[#allocation2 + $0x8c] sm:$0x1]
        %v536 = vld [vmem:[#allocation2 + $0x90] sm:$0xf]
        %v537 = vld [vmem:[#allocation2 + $0x94] sm:$0xf]
        %v538 = vld [vmem:[#allocation2 + $0x98] sm:$0x1]
        %v539 = vld [vmem:[#allocation2 + $0x9c] sm:$0xf]
        %v540 = vld [vmem:[#allocation2 + $0xa0] sm:$0xf]
        %v541 = vld [vmem:[#allocation2 + $0xa4] sm:$0x1]
        %v542 = vld [vmem:[#allocation2 + $0xa8] sm:$0xf]
        %v543 = vld [vmem:[#allocation2 + $0xac] sm:$0xf]
        %v544 = vld [vmem:[#allocation2 + $0xb0] sm:$0x1]
        %v545 = vld [vmem:[#allocation2 + $0xb4] sm:$0xf]
        %v546 = vld [vmem:[#allocation2 + $0xb8] sm:$0xf]
        %v547 = vld [vmem:[#allocation2 + $0xbc] sm:$0x1]
        %v548 = vld [vmem:[#allocation2 + $0xc0] sm:$0xf]
        %v549 = vld [vmem:[#allocation2 + $0xc4] sm:$0xf]
        %v550 = vld [vmem:[#allocation2 + $0xc8] sm:$0x1]
        %v551 = vld [vmem:[#allocation2 + $0xcc] sm:$0xf]
        %v552 = vld [vmem:[#allocation2 + $0xd0] sm:$0xf]
        %v553 = vld [vmem:[#allocation2 + $0xd4] sm:$0x1]
        %v554 = vld [vmem:[#allocation8] sm:$0xf]
        %v555 = vld [vmem:[#allocation8 + $0x4] sm:$0xf]
        %v556 = vld [vmem:[#allocation8 + $0x8] sm:$0xf]
        %v557 = vld [vmem:[#allocation8 + $0xc] sm:$0xf]
        %s558 = scalar_lea.vmem [#allocation8], 48
        %v559 = vld [vmem:[%s558] sm:$0xf]
        %v560 = vld [vmem:[%s558 + $0x4] sm:$0xf]
        %v561 = vld [vmem:[%s558 + $0x8] sm:$0xf]
        %v562 = vld [vmem:[%s558 + $0xc] sm:$0xf]
        %v595 = vunpack.c.l.b16 %v503
        %v596 = vunpack.c.l.b16 %v504
        %v597 = vunpack.c.l.b16 %v506
        %v598 = vunpack.c.l.b16 %v507
        %v599 = vunpack.c.l.b16 %v509
        %v600 = vunpack.c.l.b16 %v510
        %v601 = vunpack.c.l.b16 %v512
        %v602 = vunpack.c.l.b16 %v513
        %v603 = vunpack.c.l.b16 %v515
        %v604 = vunpack.c.l.b16 %v516
        %v605 = vunpack.c.l.b16 %v518
        %v606 = vunpack.c.l.b16 %v519
        %v607 = vunpack.c.l.b16 %v521
        %v608 = vunpack.c.l.b16 %v522
        %v609 = vunpack.c.l.b16 %v524
        %v610 = vunpack.c.l.b16 %v525
        %v611 = vunpack.c.l.b16 %v527
        %v612 = vunpack.c.l.b16 %v528
        %v613 = vunpack.c.l.b16 %v530
        %v614 = vunpack.c.l.b16 %v531
        %v615 = vunpack.c.l.b16 %v533
        %v616 = vunpack.c.l.b16 %v534
        %v617 = vunpack.c.l.b16 %v536
        %v618 = vunpack.c.l.b16 %v537
        %v619 = vunpack.c.l.b16 %v539
        %v620 = vunpack.c.l.b16 %v540
        %v621 = vunpack.c.l.b16 %v542
        %v622 = vunpack.c.l.b16 %v543
        %v623 = vunpack.c.l.b16 %v545
        %v624 = vunpack.c.l.b16 %v546
        %v625 = vunpack.c.l.b16 %v548
        %v626 = vunpack.c.l.b16 %v549
        %v627 = vpack.c.b16 %v596, %v595
        %v628 = vpack.c.b16 %v598, %v597
        %v629 = vpack.c.b16 %v600, %v599
        %v630 = vpack.c.b16 %v602, %v601
        %v631 = vpack.c.b16 %v604, %v603
        %v632 = vpack.c.b16 %v606, %v605
        %v633 = vpack.c.b16 %v608, %v607
        %v634 = vpack.c.b16 %v610, %v609
        %v635 = vpack.c.b16 %v612, %v611
        %v636 = vpack.c.b16 %v614, %v613
        %v637 = vpack.c.b16 %v616, %v615
        %v638 = vpack.c.b16 %v618, %v617
        %v639 = vpack.c.b16 %v620, %v619
        %v640 = vpack.c.b16 %v622, %v621
        %v641 = vpack.c.b16 %v624, %v623
        %v642 = vpack.c.b16 %v626, %v625
        %v647 = vunpack.c.l.b16 %v559
        %v648 = vunpack.c.l.b16 %v560
        %v649 = vunpack.c.l.b16 %v561
        %v650 = vunpack.c.l.b16 %v562
        %v651 = vpack.c.b16 %v648, %v647
        %v652 = vpack.c.b16 %v650, %v649
        %vm655 = vcmask 261120
        %v657 = vsel %vm655, %v627, 0
        %v660 = vsel %vm655, %v628, 0
        %v663 = vsel %vm655, %v629, 0
        %v666 = vsel %vm655, %v630, 0
        %v669 = vsel %vm655, %v631, 0
        %v672 = vsel %vm655, %v632, 0
        %v675 = vsel %vm655, %v633, 0
        %v678 = vsel %vm655, %v634, 0
        %v681 = vsel %vm655, %v635, 0
        %v684 = vsel %vm655, %v636, 0
        %v687 = vsel %vm655, %v637, 0
        %v690 = vsel %vm655, %v638, 0
        %v693 = vsel %vm655, %v639, 0
        %v696 = vsel %vm655, %v640, 0
        %v699 = vsel %vm655, %v641, 0
        %v702 = vsel %vm655, %v642, 0
        %704 = vmatprep.subr.bf16.mxu0 0
        %705 = vmatpush1.bf16.msra.mxu0 %v651
        %706 = vmatprep.subr.bf16.mxu0 0
        %707 = vmatpush1.bf16.msra.mxu0 %v652
        %708 = vmatprep.subr.bf16.mxu0 0
        %709 = vmatpush1.bf16.msra.mxu0 0
        %710 = vmatprep.subr.bf16.mxu0 0
        %711 = vmatpush1.bf16.msra.mxu0 0
        %712 = vmatprep.subr.bf16.mxu0 0
        %713 = vmatpush1.bf16.msra.mxu0 0
        %714 = vmatprep.subr.bf16.mxu0 0
        %715 = vmatpush1.bf16.msra.mxu0 0
        %716 = vmatprep.subr.bf16.mxu0 0
        %717 = vmatpush1.bf16.msra.mxu0 0
        %718 = vmatprep.subr.bf16.mxu0 0
        %719 = vmatpush1.bf16.msra.mxu0 0
        %720 = vmatprep.subr.bf16.mxu0 0
        %721 = vmatpush1.bf16.msra.mxu0 0
        %722 = vmatprep.subr.bf16.mxu0 0
        %723 = vmatpush1.bf16.msra.mxu0 0
        %724 = vmatprep.subr.bf16.mxu0 0
        %725 = vmatpush1.bf16.msra.mxu0 0
        %726 = vmatprep.subr.bf16.mxu0 0
        %727 = vmatpush1.bf16.msra.mxu0 0
        %728 = vmatprep.subr.bf16.mxu0 0
        %729 = vmatpush1.bf16.msra.mxu0 0
        %730 = vmatprep.subr.bf16.mxu0 0
        %731 = vmatpush1.bf16.msra.mxu0 0
        %732 = vmatprep.subr.bf16.mxu0 0
        %733 = vmatpush1.bf16.msra.mxu0 0
        %734 = vmatprep.subr.bf16.mxu0 0
        %735 = vmatpush1.bf16.msra.mxu0 0
        %736 = vmatprep.mubr.bf16.mxu0 0
        %737 = vmatmul.mubr.bf16.gmra.mrb[0].mxu0 %v657
        %v738 = vpop.f32.mrb[0].mxu0
        %v739 = vadd.f32 0.0, %v738
        %v740 = vpop.f32.mrb[0].mxu0
        %v741 = vpop.f32.mrb[0].mxu0
        %v742 = vadd.f32 0.0, %v741
        %v743 = vpop.f32.mrb[0].mxu0
        %744 = vmatprep.mubr.bf16.mxu0 0
        %745 = vmatmul.mubr.bf16.gmra.mrb[0].mxu0 %v660
        %v746 = vpop.f32.mrb[0].mxu0
        %v747 = vadd.f32 0.0, %v746
        %v748 = vpop.f32.mrb[0].mxu0
        %v749 = vpop.f32.mrb[0].mxu0
        %v750 = vadd.f32 0.0, %v749
        %v751 = vpop.f32.mrb[0].mxu0
        %752 = vmatprep.mubr.bf16.mxu0 0
        %753 = vmatmul.mubr.bf16.gmra.mrb[0].mxu0 %v663
        %v754 = vpop.f32.mrb[0].mxu0
        %v755 = vadd.f32 0.0, %v754
        %v756 = vpop.f32.mrb[0].mxu0
        %v757 = vpop.f32.mrb[0].mxu0
        %v758 = vadd.f32 0.0, %v757
        %v759 = vpop.f32.mrb[0].mxu0
        %760 = vmatprep.mubr.bf16.mxu0 0
        %761 = vmatmul.mubr.bf16.gmra.mrb[0].mxu0 %v666
        %v762 = vpop.f32.mrb[0].mxu0
        %v763 = vadd.f32 0.0, %v762
        %v764 = vpop.f32.mrb[0].mxu0
        %v765 = vpop.f32.mrb[0].mxu0
        %v766 = vadd.f32 0.0, %v765
        %v767 = vpop.f32.mrb[0].mxu0
        %768 = vmatprep.mubr.bf16.mxu0 0
        %769 = vmatmul.mubr.bf16.gmra.mrb[0].mxu0 %v669
        %v770 = vpop.f32.mrb[0].mxu0
        %v771 = vadd.f32 0.0, %v770
        %v772 = vpop.f32.mrb[0].mxu0
        %v773 = vpop.f32.mrb[0].mxu0
        %v774 = vadd.f32 0.0, %v773
        %v775 = vpop.f32.mrb[0].mxu0
        %776 = vmatprep.mubr.bf16.mxu0 0
        %777 = vmatmul.mubr.bf16.gmra.mrb[0].mxu0 %v672
        %v778 = vpop.f32.mrb[0].mxu0
        %v779 = vadd.f32 0.0, %v778
        %v780 = vpop.f32.mrb[0].mxu0
        %v781 = vpop.f32.mrb[0].mxu0
        %v782 = vadd.f32 0.0, %v781
        %v783 = vpop.f32.mrb[0].mxu0
        %784 = vmatprep.mubr.bf16.mxu0 0
        %785 = vmatmul.mubr.bf16.gmra.mrb[0].mxu0 %v675
        %v786 = vpop.f32.mrb[0].mxu0
        %v787 = vadd.f32 0.0, %v786
        %v788 = vpop.f32.mrb[0].mxu0
        %v789 = vpop.f32.mrb[0].mxu0
        %v790 = vadd.f32 0.0, %v789
        %v791 = vpop.f32.mrb[0].mxu0
        %792 = vmatprep.mubr.bf16.mxu0 0
        %793 = vmatmul.mubr.bf16.gmra.mrb[0].mxu0 %v678
        %v794 = vpop.f32.mrb[0].mxu0
        %v795 = vadd.f32 0.0, %v794
        %v796 = vpop.f32.mrb[0].mxu0
        %v797 = vpop.f32.mrb[0].mxu0
        %v798 = vadd.f32 0.0, %v797
        %v799 = vpop.f32.mrb[0].mxu0
        %800 = vmatprep.mubr.bf16.mxu0 0
        %801 = vmatmul.mubr.bf16.gmra.mrb[0].mxu0 %v681
        %v802 = vpop.f32.mrb[0].mxu0
        %v803 = vadd.f32 0.0, %v802
        %v804 = vpop.f32.mrb[0].mxu0
        %v805 = vpop.f32.mrb[0].mxu0
        %v806 = vadd.f32 0.0, %v805
        %v807 = vpop.f32.mrb[0].mxu0
        %808 = vmatprep.mubr.bf16.mxu0 0
        %809 = vmatmul.mubr.bf16.gmra.mrb[0].mxu0 %v684
        %v810 = vpop.f32.mrb[0].mxu0
        %v811 = vadd.f32 0.0, %v810
        %v812 = vpop.f32.mrb[0].mxu0
        %v813 = vpop.f32.mrb[0].mxu0
        %v814 = vadd.f32 0.0, %v813
        %v815 = vpop.f32.mrb[0].mxu0
        %816 = vmatprep.mubr.bf16.mxu0 0
        %817 = vmatmul.mubr.bf16.gmra.mrb[0].mxu0 %v687
        %v818 = vpop.f32.mrb[0].mxu0
        %v819 = vadd.f32 0.0, %v818
        %v820 = vpop.f32.mrb[0].mxu0
        %v821 = vpop.f32.mrb[0].mxu0
        %v822 = vadd.f32 0.0, %v821
        %v823 = vpop.f32.mrb[0].mxu0
        %824 = vmatprep.mubr.bf16.mxu0 0
        %825 = vmatmul.mubr.bf16.gmra.mrb[0].mxu0 %v690
        %v826 = vpop.f32.mrb[0].mxu0
        %v827 = vadd.f32 0.0, %v826
        %v828 = vpop.f32.mrb[0].mxu0
        %v829 = vpop.f32.mrb[0].mxu0
        %v830 = vadd.f32 0.0, %v829
        %v831 = vpop.f32.mrb[0].mxu0
        %832 = vmatprep.mubr.bf16.mxu0 0
        %833 = vmatmul.mubr.bf16.gmra.mrb[0].mxu0 %v693
        %v834 = vpop.f32.mrb[0].mxu0
        %v835 = vadd.f32 0.0, %v834
        %v836 = vpop.f32.mrb[0].mxu0
        %v837 = vpop.f32.mrb[0].mxu0
        %v838 = vadd.f32 0.0, %v837
        %v839 = vpop.f32.mrb[0].mxu0
        %840 = vmatprep.mubr.bf16.mxu0 0
        %841 = vmatmul.mubr.bf16.gmra.mrb[0].mxu0 %v696
        %v842 = vpop.f32.mrb[0].mxu0
        %v843 = vadd.f32 0.0, %v842
        %v844 = vpop.f32.mrb[0].mxu0
        %v845 = vpop.f32.mrb[0].mxu0
        %v846 = vadd.f32 0.0, %v845
        %v847 = vpop.f32.mrb[0].mxu0
        %848 = vmatprep.mubr.bf16.mxu0 0
        %849 = vmatmul.mubr.bf16.gmra.mrb[0].mxu0 %v699
        %v850 = vpop.f32.mrb[0].mxu0
        %v851 = vadd.f32 0.0, %v850
        %v852 = vpop.f32.mrb[0].mxu0
        %v853 = vpop.f32.mrb[0].mxu0
        %v854 = vadd.f32 0.0, %v853
        %v855 = vpop.f32.mrb[0].mxu0
        %856 = vmatprep.mubr.bf16.mxu0 0
        %857 = vmatmul.mubr.bf16.gmra.mrb[0].mxu0 %v702
        %v858 = vpop.f32.mrb[0].mxu0
        %v859 = vadd.f32 0.0, %v858
        %v860 = vpop.f32.mrb[0].mxu0
        %v861 = vpop.f32.mrb[0].mxu0
        %v862 = vadd.f32 0.0, %v861
        %v863 = vpop.f32.mrb[0].mxu0
        %864 = vdwg.mxu0
        %v867 = vunpack.c.l.b16 %v500
        %v868 = vunpack.c.l.b16 %v501
        %v869 = vpack.c.b16 %v868, %v867
        %v874 = vunpack.c.l.b16 %v554
        %v875 = vunpack.c.l.b16 %v555
        %v876 = vunpack.c.l.b16 %v556
        %v877 = vunpack.c.l.b16 %v557
        %v878 = vpack.c.b16 %v875, %v874
        %v879 = vpack.c.b16 %v877, %v876
        %v883 = vsel %vm655, %v869, 0
        %885 = vmatprep.subr.bf16.mxu0 0
        %886 = vmatpush1.bf16.msra.mxu0 %v878
        %887 = vmatprep.subr.bf16.mxu0 0
        %888 = vmatpush1.bf16.msra.mxu0 %v879
        %889 = vmatprep.subr.bf16.mxu0 0
        %890 = vmatpush1.bf16.msra.mxu0 0
        %891 = vmatprep.subr.bf16.mxu0 0
        %892 = vmatpush1.bf16.msra.mxu0 0
        %893 = vmatprep.subr.bf16.mxu0 0
        %894 = vmatpush1.bf16.msra.mxu0 0
        %895 = vmatprep.subr.bf16.mxu0 0
        %896 = vmatpush1.bf16.msra.mxu0 0
        %897 = vmatprep.subr.bf16.mxu0 0
        %898 = vmatpush1.bf16.msra.mxu0 0
        %899 = vmatprep.subr.bf16.mxu0 0
        %900 = vmatpush1.bf16.msra.mxu0 0
        %901 = vmatprep.subr.bf16.mxu0 0
        %902 = vmatpush1.bf16.msra.mxu0 0
        %903 = vmatprep.subr.bf16.mxu0 0
        %904 = vmatpush1.bf16.msra.mxu0 0
        %905 = vmatprep.subr.bf16.mxu0 0
        %906 = vmatpush1.bf16.msra.mxu0 0
        %907 = vmatprep.subr.bf16.mxu0 0
        %908 = vmatpush1.bf16.msra.mxu0 0
        %909 = vmatprep.subr.bf16.mxu0 0
        %910 = vmatpush1.bf16.msra.mxu0 0
        %911 = vmatprep.subr.bf16.mxu0 0
        %912 = vmatpush1.bf16.msra.mxu0 0
        %913 = vmatprep.subr.bf16.mxu0 0
        %914 = vmatpush1.bf16.msra.mxu0 0
        %915 = vmatprep.subr.bf16.mxu0 0
        %916 = vmatpush1.bf16.msra.mxu0 0
        %917 = vmatprep.mubr.bf16.mxu0 0
        %918 = vmatmul.mubr.bf16.gmra.mrb[0].mxu0 %v883
        %v919 = vpop.f32.mrb[0].mxu0
        %v920 = vadd.f32 %v739, %v919
        %v921 = vpop.f32.mrb[0].mxu0
        %v922 = vpop.f32.mrb[0].mxu0
        %v923 = vadd.f32 %v742, %v922
        %v924 = vpop.f32.mrb[0].mxu0
        %925 = vmatprep.mubr.bf16.mxu0 0
        %926 = vmatmul.mubr.bf16.gmra.mrb[0].mxu0 %v657
        %v927 = vpop.f32.mrb[0].mxu0
        %v928 = vadd.f32 %v747, %v927
        %v929 = vpop.f32.mrb[0].mxu0
        %v930 = vpop.f32.mrb[0].mxu0
        %v931 = vadd.f32 %v750, %v930
        %v932 = vpop.f32.mrb[0].mxu0
        %933 = vmatprep.mubr.bf16.mxu0 0
        %934 = vmatmul.mubr.bf16.gmra.mrb[0].mxu0 %v660
        %v935 = vpop.f32.mrb[0].mxu0
        %v936 = vadd.f32 %v755, %v935
        %v937 = vpop.f32.mrb[0].mxu0
        %v938 = vpop.f32.mrb[0].mxu0
        %v939 = vadd.f32 %v758, %v938
        %v940 = vpop.f32.mrb[0].mxu0
        %941 = vmatprep.mubr.bf16.mxu0 0
        %942 = vmatmul.mubr.bf16.gmra.mrb[0].mxu0 %v663
        %v943 = vpop.f32.mrb[0].mxu0
        %v944 = vadd.f32 %v763, %v943
        %v945 = vpop.f32.mrb[0].mxu0
        %v946 = vpop.f32.mrb[0].mxu0
        %v947 = vadd.f32 %v766, %v946
        %v948 = vpop.f32.mrb[0].mxu0
        %949 = vmatprep.mubr.bf16.mxu0 0
        %950 = vmatmul.mubr.bf16.gmra.mrb[0].mxu0 %v666
        %v951 = vpop.f32.mrb[0].mxu0
        %v952 = vadd.f32 %v771, %v951
        %v953 = vpop.f32.mrb[0].mxu0
        %v954 = vpop.f32.mrb[0].mxu0
        %v955 = vadd.f32 %v774, %v954
        %v956 = vpop.f32.mrb[0].mxu0
        %957 = vmatprep.mubr.bf16.mxu0 0
        %958 = vmatmul.mubr.bf16.gmra.mrb[0].mxu0 %v669
        %v959 = vpop.f32.mrb[0].mxu0
        %v960 = vadd.f32 %v779, %v959
        %v961 = vpop.f32.mrb[0].mxu0
        %v962 = vpop.f32.mrb[0].mxu0
        %v963 = vadd.f32 %v782, %v962
        %v964 = vpop.f32.mrb[0].mxu0
        %965 = vmatprep.mubr.bf16.mxu0 0
        %966 = vmatmul.mubr.bf16.gmra.mrb[0].mxu0 %v672
        %v967 = vpop.f32.mrb[0].mxu0
        %v968 = vadd.f32 %v787, %v967
        %v969 = vpop.f32.mrb[0].mxu0
        %v970 = vpop.f32.mrb[0].mxu0
        %v971 = vadd.f32 %v790, %v970
        %v972 = vpop.f32.mrb[0].mxu0
        %973 = vmatprep.mubr.bf16.mxu0 0
        %974 = vmatmul.mubr.bf16.gmra.mrb[0].mxu0 %v675
        %v975 = vpop.f32.mrb[0].mxu0
        %v976 = vadd.f32 %v795, %v975
        %v977 = vpop.f32.mrb[0].mxu0
        %v978 = vpop.f32.mrb[0].mxu0
        %v979 = vadd.f32 %v798, %v978
        %v980 = vpop.f32.mrb[0].mxu0
        %981 = vmatprep.mubr.bf16.mxu0 0
        %982 = vmatmul.mubr.bf16.gmra.mrb[0].mxu0 %v678
        %v983 = vpop.f32.mrb[0].mxu0
        %v984 = vadd.f32 %v803, %v983
        %v985 = vpop.f32.mrb[0].mxu0
        %v986 = vpop.f32.mrb[0].mxu0
        %v987 = vadd.f32 %v806, %v986
        %v988 = vpop.f32.mrb[0].mxu0
        %989 = vmatprep.mubr.bf16.mxu0 0
        %990 = vmatmul.mubr.bf16.gmra.mrb[0].mxu0 %v681
        %v991 = vpop.f32.mrb[0].mxu0
        %v992 = vadd.f32 %v811, %v991
        %v993 = vpop.f32.mrb[0].mxu0
        %v994 = vpop.f32.mrb[0].mxu0
        %v995 = vadd.f32 %v814, %v994
        %v996 = vpop.f32.mrb[0].mxu0
        %997 = vmatprep.mubr.bf16.mxu0 0
        %998 = vmatmul.mubr.bf16.gmra.mrb[0].mxu0 %v684
        %v999 = vpop.f32.mrb[0].mxu0
        %v1000 = vadd.f32 %v819, %v999
        %v1001 = vpop.f32.mrb[0].mxu0
        %v1002 = vpop.f32.mrb[0].mxu0
        %v1003 = vadd.f32 %v822, %v1002
        %v1004 = vpop.f32.mrb[0].mxu0
        %1005 = vmatprep.mubr.bf16.mxu0 0
        %1006 = vmatmul.mubr.bf16.gmra.mrb[0].mxu0 %v687
        %v1007 = vpop.f32.mrb[0].mxu0
        %v1008 = vadd.f32 %v827, %v1007
        %v1009 = vpop.f32.mrb[0].mxu0
        %v1010 = vpop.f32.mrb[0].mxu0
        %v1011 = vadd.f32 %v830, %v1010
        %v1012 = vpop.f32.mrb[0].mxu0
        %1013 = vmatprep.mubr.bf16.mxu0 0
        %1014 = vmatmul.mubr.bf16.gmra.mrb[0].mxu0 %v690
        %v1015 = vpop.f32.mrb[0].mxu0
        %v1016 = vadd.f32 %v835, %v1015
        %v1017 = vpop.f32.mrb[0].mxu0
        %v1018 = vpop.f32.mrb[0].mxu0
        %v1019 = vadd.f32 %v838, %v1018
        %v1020 = vpop.f32.mrb[0].mxu0
        %1021 = vmatprep.mubr.bf16.mxu0 0
        %1022 = vmatmul.mubr.bf16.gmra.mrb[0].mxu0 %v693
        %v1023 = vpop.f32.mrb[0].mxu0
        %v1024 = vadd.f32 %v843, %v1023
        %v1025 = vpop.f32.mrb[0].mxu0
        %v1026 = vpop.f32.mrb[0].mxu0
        %v1027 = vadd.f32 %v846, %v1026
        %v1028 = vpop.f32.mrb[0].mxu0
        %1029 = vmatprep.mubr.bf16.mxu0 0
        %1030 = vmatmul.mubr.bf16.gmra.mrb[0].mxu0 %v696
        %v1031 = vpop.f32.mrb[0].mxu0
        %v1032 = vadd.f32 %v851, %v1031
        %v1033 = vpop.f32.mrb[0].mxu0
        %v1034 = vpop.f32.mrb[0].mxu0
        %v1035 = vadd.f32 %v854, %v1034
        %v1036 = vpop.f32.mrb[0].mxu0
        %1037 = vmatprep.mubr.bf16.mxu0 0
        %1038 = vmatmul.mubr.bf16.gmra.mrb[0].mxu0 %v699
        %v1039 = vpop.f32.mrb[0].mxu0
        %v1040 = vadd.f32 %v859, %v1039
        %v1041 = vpop.f32.mrb[0].mxu0
        %v1042 = vpop.f32.mrb[0].mxu0
        %v1043 = vadd.f32 %v862, %v1042
        %v1044 = vpop.f32.mrb[0].mxu0
        %1045 = vdwg.mxu0
        %s1046 = scalar_lea.vmem [#allocation8], 96
        %v1047 = vld [vmem:[%s1046] sm:$0xf]
        %v1048 = vld [vmem:[%s1046 + $0x4] sm:$0xf]
        %v1049 = vld [vmem:[%s1046 + $0x8] sm:$0xf]
        %v1050 = vld [vmem:[%s1046 + $0xc] sm:$0xf]
        %v1053 = vunpack.c.l.b16 %v551
        %v1054 = vunpack.c.l.b16 %v552
        %v1055 = vpack.c.b16 %v1054, %v1053
        %v1060 = vunpack.c.l.b16 %v1047
        %v1061 = vunpack.c.l.b16 %v1048
        %v1062 = vunpack.c.l.b16 %v1049
        %v1063 = vunpack.c.l.b16 %v1050
        %v1064 = vpack.c.b16 %v1061, %v1060
        %v1065 = vpack.c.b16 %v1063, %v1062
        %v1069 = vsel %vm655, %v1055, 0
        %1071 = vmatprep.subr.bf16.mxu0 0
        %1072 = vmatpush1.bf16.msra.mxu0 %v1064
        %1073 = vmatprep.subr.bf16.mxu0 0
        %1074 = vmatpush1.bf16.msra.mxu0 %v1065
        %1075 = vmatprep.subr.bf16.mxu0 0
        %1076 = vmatpush1.bf16.msra.mxu0 0
        %1077 = vmatprep.subr.bf16.mxu0 0
        %1078 = vmatpush1.bf16.msra.mxu0 0
        %1079 = vmatprep.subr.bf16.mxu0 0
        %1080 = vmatpush1.bf16.msra.mxu0 0
        %1081 = vmatprep.subr.bf16.mxu0 0
        %1082 = vmatpush1.bf16.msra.mxu0 0
        %1083 = vmatprep.subr.bf16.mxu0 0
        %1084 = vmatpush1.bf16.msra.mxu0 0
        %1085 = vmatprep.subr.bf16.mxu0 0
        %1086 = vmatpush1.bf16.msra.mxu0 0
        %1087 = vmatprep.subr.bf16.mxu0 0
        %1088 = vmatpush1.bf16.msra.mxu0 0
        %1089 = vmatprep.subr.bf16.mxu0 0
        %1090 = vmatpush1.bf16.msra.mxu0 0
        %1091 = vmatprep.subr.bf16.mxu0 0
        %1092 = vmatpush1.bf16.msra.mxu0 0
        %1093 = vmatprep.subr.bf16.mxu0 0
        %1094 = vmatpush1.bf16.msra.mxu0 0
        %1095 = vmatprep.subr.bf16.mxu0 0
        %1096 = vmatpush1.bf16.msra.mxu0 0
        %1097 = vmatprep.subr.bf16.mxu0 0
        %1098 = vmatpush1.bf16.msra.mxu0 0
        %1099 = vmatprep.subr.bf16.mxu0 0
        %1100 = vmatpush1.bf16.msra.mxu0 0
        %1101 = vmatprep.subr.bf16.mxu0 0
        %1102 = vmatpush1.bf16.msra.mxu0 0
        %1103 = vmatprep.mubr.bf16.mxu0 0
        %1104 = vmatmul.mubr.bf16.gmra.mrb[0].mxu0 %v660
        %v1105 = vpop.f32.mrb[0].mxu0
        %v1106 = vadd.f32 0.0, %v1105
        %v1107 = vpop.f32.mrb[0].mxu0
        %v1108 = vpop.f32.mrb[0].mxu0
        %v1109 = vadd.f32 0.0, %v1108
        %v1110 = vpop.f32.mrb[0].mxu0
        %1111 = vmatprep.mubr.bf16.mxu0 0
        %1112 = vmatmul.mubr.bf16.gmra.mrb[0].mxu0 %v663
        %v1113 = vpop.f32.mrb[0].mxu0
        %v1114 = vadd.f32 0.0, %v1113
        %v1115 = vpop.f32.mrb[0].mxu0
        %v1116 = vpop.f32.mrb[0].mxu0
        %v1117 = vadd.f32 0.0, %v1116
        %v1118 = vpop.f32.mrb[0].mxu0
        %1119 = vmatprep.mubr.bf16.mxu0 0
        %1120 = vmatmul.mubr.bf16.gmra.mrb[0].mxu0 %v666
        %v1121 = vpop.f32.mrb[0].mxu0
        %v1122 = vadd.f32 0.0, %v1121
        %v1123 = vpop.f32.mrb[0].mxu0
        %v1124 = vpop.f32.mrb[0].mxu0
        %v1125 = vadd.f32 0.0, %v1124
        %v1126 = vpop.f32.mrb[0].mxu0
        %1127 = vmatprep.mubr.bf16.mxu0 0
        %1128 = vmatmul.mubr.bf16.gmra.mrb[0].mxu0 %v669
        %v1129 = vpop.f32.mrb[0].mxu0
        %v1130 = vadd.f32 0.0, %v1129
        %v1131 = vpop.f32.mrb[0].mxu0
        %v1132 = vpop.f32.mrb[0].mxu0
        %v1133 = vadd.f32 0.0, %v1132
        %v1134 = vpop.f32.mrb[0].mxu0
        %1135 = vmatprep.mubr.bf16.mxu0 0
        %1136 = vmatmul.mubr.bf16.gmra.mrb[0].mxu0 %v672
        %v1137 = vpop.f32.mrb[0].mxu0
        %v1138 = vadd.f32 0.0, %v1137
        %v1139 = vpop.f32.mrb[0].mxu0
        %v1140 = vpop.f32.mrb[0].mxu0
        %v1141 = vadd.f32 0.0, %v1140
        %v1142 = vpop.f32.mrb[0].mxu0
        %1143 = vmatprep.mubr.bf16.mxu0 0
        %1144 = vmatmul.mubr.bf16.gmra.mrb[0].mxu0 %v675
        %v1145 = vpop.f32.mrb[0].mxu0
        %v1146 = vadd.f32 0.0, %v1145
        %v1147 = vpop.f32.mrb[0].mxu0
        %v1148 = vpop.f32.mrb[0].mxu0
        %v1149 = vadd.f32 0.0, %v1148
        %v1150 = vpop.f32.mrb[0].mxu0
        %1151 = vmatprep.mubr.bf16.mxu0 0
        %1152 = vmatmul.mubr.bf16.gmra.mrb[0].mxu0 %v678
        %v1153 = vpop.f32.mrb[0].mxu0
        %v1154 = vadd.f32 0.0, %v1153
        %v1155 = vpop.f32.mrb[0].mxu0
        %v1156 = vpop.f32.mrb[0].mxu0
        %v1157 = vadd.f32 0.0, %v1156
        %v1158 = vpop.f32.mrb[0].mxu0
        %1159 = vmatprep.mubr.bf16.mxu0 0
        %1160 = vmatmul.mubr.bf16.gmra.mrb[0].mxu0 %v681
        %v1161 = vpop.f32.mrb[0].mxu0
        %v1162 = vadd.f32 0.0, %v1161
        %v1163 = vpop.f32.mrb[0].mxu0
        %v1164 = vpop.f32.mrb[0].mxu0
        %v1165 = vadd.f32 0.0, %v1164
        %v1166 = vpop.f32.mrb[0].mxu0
        %1167 = vmatprep.mubr.bf16.mxu0 0
        %1168 = vmatmul.mubr.bf16.gmra.mrb[0].mxu0 %v684
        %v1169 = vpop.f32.mrb[0].mxu0
        %v1170 = vadd.f32 0.0, %v1169
        %v1171 = vpop.f32.mrb[0].mxu0
        %v1172 = vpop.f32.mrb[0].mxu0
        %v1173 = vadd.f32 0.0, %v1172
        %v1174 = vpop.f32.mrb[0].mxu0
        %1175 = vmatprep.mubr.bf16.mxu0 0
        %1176 = vmatmul.mubr.bf16.gmra.mrb[0].mxu0 %v687
        %v1177 = vpop.f32.mrb[0].mxu0
        %v1178 = vadd.f32 0.0, %v1177
        %v1179 = vpop.f32.mrb[0].mxu0
        %v1180 = vpop.f32.mrb[0].mxu0
        %v1181 = vadd.f32 0.0, %v1180
        %v1182 = vpop.f32.mrb[0].mxu0
        %1183 = vmatprep.mubr.bf16.mxu0 0
        %1184 = vmatmul.mubr.bf16.gmra.mrb[0].mxu0 %v690
        %v1185 = vpop.f32.mrb[0].mxu0
        %v1186 = vadd.f32 0.0, %v1185
        %v1187 = vpop.f32.mrb[0].mxu0
        %v1188 = vpop.f32.mrb[0].mxu0
        %v1189 = vadd.f32 0.0, %v1188
        %v1190 = vpop.f32.mrb[0].mxu0
        %1191 = vmatprep.mubr.bf16.mxu0 0
        %1192 = vmatmul.mubr.bf16.gmra.mrb[0].mxu0 %v693
        %v1193 = vpop.f32.mrb[0].mxu0
        %v1194 = vadd.f32 0.0, %v1193
        %v1195 = vpop.f32.mrb[0].mxu0
        %v1196 = vpop.f32.mrb[0].mxu0
        %v1197 = vadd.f32 0.0, %v1196
        %v1198 = vpop.f32.mrb[0].mxu0
        %1199 = vmatprep.mubr.bf16.mxu0 0
        %1200 = vmatmul.mubr.bf16.gmra.mrb[0].mxu0 %v696
        %v1201 = vpop.f32.mrb[0].mxu0
        %v1202 = vadd.f32 0.0, %v1201
        %v1203 = vpop.f32.mrb[0].mxu0
        %v1204 = vpop.f32.mrb[0].mxu0
        %v1205 = vadd.f32 0.0, %v1204
        %v1206 = vpop.f32.mrb[0].mxu0
        %1207 = vmatprep.mubr.bf16.mxu0 0
        %1208 = vmatmul.mubr.bf16.gmra.mrb[0].mxu0 %v699
        %v1209 = vpop.f32.mrb[0].mxu0
        %v1210 = vadd.f32 0.0, %v1209
        %v1211 = vpop.f32.mrb[0].mxu0
        %v1212 = vpop.f32.mrb[0].mxu0
        %v1213 = vadd.f32 0.0, %v1212
        %v1214 = vpop.f32.mrb[0].mxu0
        %1215 = vmatprep.mubr.bf16.mxu0 0
        %1216 = vmatmul.mubr.bf16.gmra.mrb[0].mxu0 %v702
        %v1217 = vpop.f32.mrb[0].mxu0
        %v1218 = vadd.f32 0.0, %v1217
        %v1219 = vpop.f32.mrb[0].mxu0
        %v1220 = vpop.f32.mrb[0].mxu0
        %v1221 = vadd.f32 0.0, %v1220
        %v1222 = vpop.f32.mrb[0].mxu0
        %1223 = vmatprep.mubr.bf16.mxu0 0
        %1224 = vmatmul.mubr.bf16.gmra.mrb[0].mxu0 %v1069
        %v1225 = vpop.f32.mrb[0].mxu0
        %v1226 = vadd.f32 0.0, %v1225
        %v1227 = vpop.f32.mrb[0].mxu0
        %v1228 = vpop.f32.mrb[0].mxu0
        %v1229 = vadd.f32 0.0, %v1228
        %v1230 = vpop.f32.mrb[0].mxu0
        %1231 = vdwg.mxu0
        %v1232 = vadd.f32 %v920, %v1106
        %v1233 = vadd.f32 %v923, %v1109
        %v1234 = vadd.f32 %v928, %v1114
        %v1235 = vadd.f32 %v931, %v1117
        %v1236 = vadd.f32 %v936, %v1122
        %v1237 = vadd.f32 %v939, %v1125
        %v1238 = vadd.f32 %v944, %v1130
        %v1239 = vadd.f32 %v947, %v1133
        %v1240 = vadd.f32 %v952, %v1138
        %v1241 = vadd.f32 %v955, %v1141
        %v1242 = vadd.f32 %v960, %v1146
        %v1243 = vadd.f32 %v963, %v1149
        %v1244 = vadd.f32 %v968, %v1154
        %v1245 = vadd.f32 %v971, %v1157
        %v1246 = vadd.f32 %v976, %v1162
        %v1247 = vadd.f32 %v979, %v1165
        %v1248 = vadd.f32 %v984, %v1170
        %v1249 = vadd.f32 %v987, %v1173
        %v1250 = vadd.f32 %v992, %v1178
        %v1251 = vadd.f32 %v995, %v1181
        %v1252 = vadd.f32 %v1000, %v1186
        %v1253 = vadd.f32 %v1003, %v1189
        %v1254 = vadd.f32 %v1008, %v1194
        %v1255 = vadd.f32 %v1011, %v1197
        %v1256 = vadd.f32 %v1016, %v1202
        %v1257 = vadd.f32 %v1019, %v1205
        %v1258 = vadd.f32 %v1024, %v1210
        %v1259 = vadd.f32 %v1027, %v1213
        %v1260 = vadd.f32 %v1032, %v1218
        %v1261 = vadd.f32 %v1035, %v1221
        %v1262 = vadd.f32 %v1040, %v1226
        %v1263 = vadd.f32 %v1043, %v1229
        %vm1264 = vsmask.f32 3328
        %vm1265 = vsmask.f32 7440
        %vm1266 = vmor %vm1264, %vm1265
        %v1268 = vshrl.u32 %v500, 16
        %v1270 = vrot.slane %v1268, 4
        %v1271 = vshll.u32 %v500, 16
        %v1273 = vrot.slane %v1271, 5
        %v1274 = vor.u32 %v1270, %v1273
        %v1275 = vrot.slane %v1274, 4
        %v1277 = vshll.u32 %v501, 16
        %v1279 = vrot.slane %v1277, 5
        %v1280 = vsel %vm1266, %v1275, %v1279
        %v1281 = vshrl.u32 %v501, 16
        %v1283 = vrot.slane %v1281, 4
        %v1284 = vor.u32 %v1283, %v1279
        %v1285 = vrot.slane %v1284, 4
        %v1287 = vshll.u32 %v502, 16
        %v1289 = vrot.slane %v1287, 5
        %v1290 = vsel %vm1266, %v1285, %v1289
        %v1292 = vshrl.u32 %v503, 16
        %v1294 = vrot.slane %v1292, 4
        %v1295 = vshll.u32 %v503, 16
        %v1297 = vrot.slane %v1295, 5
        %v1298 = vor.u32 %v1294, %v1297
        %v1299 = vrot.slane %v1298, 4
        %v1301 = vshll.u32 %v504, 16
        %v1303 = vrot.slane %v1301, 5
        %v1304 = vsel %vm1266, %v1299, %v1303
        %v1305 = vshrl.u32 %v504, 16
        %v1307 = vrot.slane %v1305, 4
        %v1308 = vor.u32 %v1307, %v1303
        %v1309 = vrot.slane %v1308, 4
        %v1311 = vshll.u32 %v505, 16
        %v1313 = vrot.slane %v1311, 5
        %v1314 = vsel %vm1266, %v1309, %v1313
        %v1316 = vshrl.u32 %v506, 16
        %v1318 = vrot.slane %v1316, 4
        %v1319 = vshll.u32 %v506, 16
        %v1321 = vrot.slane %v1319, 5
        %v1322 = vor.u32 %v1318, %v1321
        %v1323 = vrot.slane %v1322, 4
        %v1325 = vshll.u32 %v507, 16
        %v1327 = vrot.slane %v1325, 5
        %v1328 = vsel %vm1266, %v1323, %v1327
        %v1329 = vshrl.u32 %v507, 16
        %v1331 = vrot.slane %v1329, 4
        %v1332 = vor.u32 %v1331, %v1327
        %v1333 = vrot.slane %v1332, 4
        %v1335 = vshll.u32 %v508, 16
        %v1337 = vrot.slane %v1335, 5
        %v1338 = vsel %vm1266, %v1333, %v1337
        %v1340 = vshrl.u32 %v509, 16
        %v1342 = vrot.slane %v1340, 4
        %v1343 = vshll.u32 %v509, 16
        %v1345 = vrot.slane %v1343, 5
        %v1346 = vor.u32 %v1342, %v1345
        %v1347 = vrot.slane %v1346, 4
        %v1349 = vshll.u32 %v510, 16
        %v1351 = vrot.slane %v1349, 5
        %v1352 = vsel %vm1266, %v1347, %v1351
        %v1353 = vshrl.u32 %v510, 16
        %v1355 = vrot.slane %v1353, 4
        %v1356 = vor.u32 %v1355, %v1351
        %v1357 = vrot.slane %v1356, 4
        %v1359 = vshll.u32 %v511, 16
        %v1361 = vrot.slane %v1359, 5
        %v1362 = vsel %vm1266, %v1357, %v1361
        %v1364 = vshrl.u32 %v512, 16
        %v1366 = vrot.slane %v1364, 4
        %v1367 = vshll.u32 %v512, 16
        %v1369 = vrot.slane %v1367, 5
        %v1370 = vor.u32 %v1366, %v1369
        %v1371 = vrot.slane %v1370, 4
        %v1373 = vshll.u32 %v513, 16
        %v1375 = vrot.slane %v1373, 5
        %v1376 = vsel %vm1266, %v1371, %v1375
        %v1377 = vshrl.u32 %v513, 16
        %v1379 = vrot.slane %v1377, 4
        %v1380 = vor.u32 %v1379, %v1375
        %v1381 = vrot.slane %v1380, 4
        %v1383 = vshll.u32 %v514, 16
        %v1385 = vrot.slane %v1383, 5
        %v1386 = vsel %vm1266, %v1381, %v1385
        %v1388 = vshrl.u32 %v515, 16
        %v1390 = vrot.slane %v1388, 4
        %v1391 = vshll.u32 %v515, 16
        %v1393 = vrot.slane %v1391, 5
        %v1394 = vor.u32 %v1390, %v1393
        %v1395 = vrot.slane %v1394, 4
        %v1397 = vshll.u32 %v516, 16
        %v1399 = vrot.slane %v1397, 5
        %v1400 = vsel %vm1266, %v1395, %v1399
        %v1401 = vshrl.u32 %v516, 16
        %v1403 = vrot.slane %v1401, 4
        %v1404 = vor.u32 %v1403, %v1399
        %v1405 = vrot.slane %v1404, 4
        %v1407 = vshll.u32 %v517, 16
        %v1409 = vrot.slane %v1407, 5
        %v1410 = vsel %vm1266, %v1405, %v1409
        %v1412 = vshrl.u32 %v518, 16
        %v1414 = vrot.slane %v1412, 4
        %v1415 = vshll.u32 %v518, 16
        %v1417 = vrot.slane %v1415, 5
        %v1418 = vor.u32 %v1414, %v1417
        %v1419 = vrot.slane %v1418, 4
        %v1421 = vshll.u32 %v519, 16
        %v1423 = vrot.slane %v1421, 5
        %v1424 = vsel %vm1266, %v1419, %v1423
        %v1425 = vshrl.u32 %v519, 16
        %v1427 = vrot.slane %v1425, 4
        %v1428 = vor.u32 %v1427, %v1423
        %v1429 = vrot.slane %v1428, 4
        %v1431 = vshll.u32 %v520, 16
        %v1433 = vrot.slane %v1431, 5
        %v1434 = vsel %vm1266, %v1429, %v1433
        %v1436 = vshrl.u32 %v521, 16
        %v1438 = vrot.slane %v1436, 4
        %v1439 = vshll.u32 %v521, 16
        %v1441 = vrot.slane %v1439, 5
        %v1442 = vor.u32 %v1438, %v1441
        %v1443 = vrot.slane %v1442, 4
        %v1445 = vshll.u32 %v522, 16
        %v1447 = vrot.slane %v1445, 5
        %v1448 = vsel %vm1266, %v1443, %v1447
        %v1449 = vshrl.u32 %v522, 16
        %v1451 = vrot.slane %v1449, 4
        %v1452 = vor.u32 %v1451, %v1447
        %v1453 = vrot.slane %v1452, 4
        %v1455 = vshll.u32 %v523, 16
        %v1457 = vrot.slane %v1455, 5
        %v1458 = vsel %vm1266, %v1453, %v1457
        %v1460 = vshrl.u32 %v524, 16
        %v1462 = vrot.slane %v1460, 4
        %v1463 = vshll.u32 %v524, 16
        %v1465 = vrot.slane %v1463, 5
        %v1466 = vor.u32 %v1462, %v1465
        %v1467 = vrot.slane %v1466, 4
        %v1469 = vshll.u32 %v525, 16
        %v1471 = vrot.slane %v1469, 5
        %v1472 = vsel %vm1266, %v1467, %v1471
        %v1473 = vshrl.u32 %v525, 16
        %v1475 = vrot.slane %v1473, 4
        %v1476 = vor.u32 %v1475, %v1471
        %v1477 = vrot.slane %v1476, 4
        %v1479 = vshll.u32 %v526, 16
        %v1481 = vrot.slane %v1479, 5
        %v1482 = vsel %vm1266, %v1477, %v1481
        %v1484 = vshrl.u32 %v527, 16
        %v1486 = vrot.slane %v1484, 4
        %v1487 = vshll.u32 %v527, 16
        %v1489 = vrot.slane %v1487, 5
        %v1490 = vor.u32 %v1486, %v1489
        %v1491 = vrot.slane %v1490, 4
        %v1493 = vshll.u32 %v528, 16
        %v1495 = vrot.slane %v1493, 5
        %v1496 = vsel %vm1266, %v1491, %v1495
        %v1497 = vshrl.u32 %v528, 16
        %v1499 = vrot.slane %v1497, 4
        %v1500 = vor.u32 %v1499, %v1495
        %v1501 = vrot.slane %v1500, 4
        %v1503 = vshll.u32 %v529, 16
        %v1505 = vrot.slane %v1503, 5
        %v1506 = vsel %vm1266, %v1501, %v1505
        %v1508 = vshrl.u32 %v530, 16
        %v1510 = vrot.slane %v1508, 4
        %v1511 = vshll.u32 %v530, 16
        %v1513 = vrot.slane %v1511, 5
        %v1514 = vor.u32 %v1510, %v1513
        %v1515 = vrot.slane %v1514, 4
        %v1517 = vshll.u32 %v531, 16
        %v1519 = vrot.slane %v1517, 5
        %v1520 = vsel %vm1266, %v1515, %v1519
        %v1521 = vshrl.u32 %v531, 16
        %v1523 = vrot.slane %v1521, 4
        %v1524 = vor.u32 %v1523, %v1519
        %v1525 = vrot.slane %v1524, 4
        %v1527 = vshll.u32 %v532, 16
        %v1529 = vrot.slane %v1527, 5
        %v1530 = vsel %vm1266, %v1525, %v1529
        %v1532 = vshrl.u32 %v533, 16
        %v1534 = vrot.slane %v1532, 4
        %v1535 = vshll.u32 %v533, 16
        %v1537 = vrot.slane %v1535, 5
        %v1538 = vor.u32 %v1534, %v1537
        %v1539 = vrot.slane %v1538, 4
        %v1541 = vshll.u32 %v534, 16
        %v1543 = vrot.slane %v1541, 5
        %v1544 = vsel %vm1266, %v1539, %v1543
        %v1545 = vshrl.u32 %v534, 16
        %v1547 = vrot.slane %v1545, 4
        %v1548 = vor.u32 %v1547, %v1543
        %v1549 = vrot.slane %v1548, 4
        %v1551 = vshll.u32 %v535, 16
        %v1553 = vrot.slane %v1551, 5
        %v1554 = vsel %vm1266, %v1549, %v1553
        %v1556 = vshrl.u32 %v536, 16
        %v1558 = vrot.slane %v1556, 4
        %v1559 = vshll.u32 %v536, 16
        %v1561 = vrot.slane %v1559, 5
        %v1562 = vor.u32 %v1558, %v1561
        %v1563 = vrot.slane %v1562, 4
        %v1565 = vshll.u32 %v537, 16
        %v1567 = vrot.slane %v1565, 5
        %v1568 = vsel %vm1266, %v1563, %v1567
        %v1569 = vshrl.u32 %v537, 16
        %v1571 = vrot.slane %v1569, 4
        %v1572 = vor.u32 %v1571, %v1567
        %v1573 = vrot.slane %v1572, 4
        %v1575 = vshll.u32 %v538, 16
        %v1577 = vrot.slane %v1575, 5
        %v1578 = vsel %vm1266, %v1573, %v1577
        %v1580 = vshrl.u32 %v539, 16
        %v1582 = vrot.slane %v1580, 4
        %v1583 = vshll.u32 %v539, 16
        %v1585 = vrot.slane %v1583, 5
        %v1586 = vor.u32 %v1582, %v1585
        %v1587 = vrot.slane %v1586, 4
        %v1589 = vshll.u32 %v540, 16
        %v1591 = vrot.slane %v1589, 5
        %v1592 = vsel %vm1266, %v1587, %v1591
        %v1593 = vshrl.u32 %v540, 16
        %v1595 = vrot.slane %v1593, 4
        %v1596 = vor.u32 %v1595, %v1591
        %v1597 = vrot.slane %v1596, 4
        %v1599 = vshll.u32 %v541, 16
        %v1601 = vrot.slane %v1599, 5
        %v1602 = vsel %vm1266, %v1597, %v1601
        %v1604 = vshrl.u32 %v542, 16
        %v1606 = vrot.slane %v1604, 4
        %v1607 = vshll.u32 %v542, 16
        %v1609 = vrot.slane %v1607, 5
        %v1610 = vor.u32 %v1606, %v1609
        %v1611 = vrot.slane %v1610, 4
        %v1613 = vshll.u32 %v543, 16
        %v1615 = vrot.slane %v1613, 5
        %v1616 = vsel %vm1266, %v1611, %v1615
        %v1617 = vshrl.u32 %v543, 16
        %v1619 = vrot.slane %v1617, 4
        %v1620 = vor.u32 %v1619, %v1615
        %v1621 = vrot.slane %v1620, 4
        %v1623 = vshll.u32 %v544, 16
        %v1625 = vrot.slane %v1623, 5
        %v1626 = vsel %vm1266, %v1621, %v1625
        %v1628 = vshrl.u32 %v545, 16
        %v1630 = vrot.slane %v1628, 4
        %v1631 = vshll.u32 %v545, 16
        %v1633 = vrot.slane %v1631, 5
        %v1634 = vor.u32 %v1630, %v1633
        %v1635 = vrot.slane %v1634, 4
        %v1637 = vshll.u32 %v546, 16
        %v1639 = vrot.slane %v1637, 5
        %v1640 = vsel %vm1266, %v1635, %v1639
        %v1641 = vshrl.u32 %v546, 16
        %v1643 = vrot.slane %v1641, 4
        %v1644 = vor.u32 %v1643, %v1639
        %v1645 = vrot.slane %v1644, 4
        %v1647 = vshll.u32 %v547, 16
        %v1649 = vrot.slane %v1647, 5
        %v1650 = vsel %vm1266, %v1645, %v1649
        %s1651 = scalar_lea.vmem [#allocation8], 16
        %v1652 = vld [vmem:[%s1651] sm:$0xf]
        %v1653 = vld [vmem:[%s1651 + $0x4] sm:$0xf]
        %v1654 = vld [vmem:[%s1651 + $0x8] sm:$0xf]
        %v1655 = vld [vmem:[%s1651 + $0xc] sm:$0xf]
        %v1656 = vunpack.c.l.b16 %v1280
        %v1657 = vunpack.c.l.b16 %v1290
        %v1658 = vunpack.c.l.b16 %v1304
        %v1659 = vunpack.c.l.b16 %v1314
        %v1660 = vunpack.c.l.b16 %v1328
        %v1661 = vunpack.c.l.b16 %v1338
        %v1662 = vunpack.c.l.b16 %v1352
        %v1663 = vunpack.c.l.b16 %v1362
        %v1664 = vunpack.c.l.b16 %v1376
        %v1665 = vunpack.c.l.b16 %v1386
        %v1666 = vunpack.c.l.b16 %v1400
        %v1667 = vunpack.c.l.b16 %v1410
        %v1668 = vunpack.c.l.b16 %v1424
        %v1669 = vunpack.c.l.b16 %v1434
        %v1670 = vunpack.c.l.b16 %v1448
        %v1671 = vunpack.c.l.b16 %v1458
        %v1672 = vunpack.c.l.b16 %v1472
        %v1673 = vunpack.c.l.b16 %v1482
        %v1674 = vunpack.c.l.b16 %v1496
        %v1675 = vunpack.c.l.b16 %v1506
        %v1676 = vunpack.c.l.b16 %v1520
        %v1677 = vunpack.c.l.b16 %v1530
        %v1678 = vunpack.c.l.b16 %v1544
        %v1679 = vunpack.c.l.b16 %v1554
        %v1680 = vunpack.c.l.b16 %v1568
        %v1681 = vunpack.c.l.b16 %v1578
        %v1682 = vunpack.c.l.b16 %v1592
        %v1683 = vunpack.c.l.b16 %v1602
        %v1684 = vunpack.c.l.b16 %v1616
        %v1685 = vunpack.c.l.b16 %v1626
        %v1686 = vunpack.c.l.b16 %v1640
        %v1687 = vunpack.c.l.b16 %v1650
        %v1688 = vpack.c.b16 %v1657, %v1656
        %v1689 = vpack.c.b16 %v1659, %v1658
        %v1690 = vpack.c.b16 %v1661, %v1660
        %v1691 = vpack.c.b16 %v1663, %v1662
        %v1692 = vpack.c.b16 %v1665, %v1664
        %v1693 = vpack.c.b16 %v1667, %v1666
        %v1694 = vpack.c.b16 %v1669, %v1668
        %v1695 = vpack.c.b16 %v1671, %v1670
        %v1696 = vpack.c.b16 %v1673, %v1672
        %v1697 = vpack.c.b16 %v1675, %v1674
        %v1698 = vpack.c.b16 %v1677, %v1676
        %v1699 = vpack.c.b16 %v1679, %v1678
        %v1700 = vpack.c.b16 %v1681, %v1680
        %v1701 = vpack.c.b16 %v1683, %v1682
        %v1702 = vpack.c.b16 %v1685, %v1684
        %v1703 = vpack.c.b16 %v1687, %v1686
        %v1708 = vunpack.c.l.b16 %v1652
        %v1709 = vunpack.c.l.b16 %v1653
        %v1710 = vunpack.c.l.b16 %v1654
        %v1711 = vunpack.c.l.b16 %v1655
        %v1712 = vpack.c.b16 %v1709, %v1708
        %v1713 = vpack.c.b16 %v1711, %v1710
        %v1717 = vsel %vm655, %v1688, 0
        %v1720 = vsel %vm655, %v1689, 0
        %v1723 = vsel %vm655, %v1690, 0
        %v1726 = vsel %vm655, %v1691, 0
        %v1729 = vsel %vm655, %v1692, 0
        %v1732 = vsel %vm655, %v1693, 0
        %v1735 = vsel %vm655, %v1694, 0
        %v1738 = vsel %vm655, %v1695, 0
        %v1741 = vsel %vm655, %v1696, 0
        %v1744 = vsel %vm655, %v1697, 0
        %v1747 = vsel %vm655, %v1698, 0
        %v1750 = vsel %vm655, %v1699, 0
        %v1753 = vsel %vm655, %v1700, 0
        %v1756 = vsel %vm655, %v1701, 0
        %v1759 = vsel %vm655, %v1702, 0
        %v1762 = vsel %vm655, %v1703, 0
        %1764 = vmatprep.subr.bf16.mxu0 0
        %1765 = vmatpush1.bf16.msra.mxu0 %v1712
        %1766 = vmatprep.subr.bf16.mxu0 0
        %1767 = vmatpush1.bf16.msra.mxu0 %v1713
        %1768 = vmatprep.subr.bf16.mxu0 0
        %1769 = vmatpush1.bf16.msra.mxu0 0
        %1770 = vmatprep.subr.bf16.mxu0 0
        %1771 = vmatpush1.bf16.msra.mxu0 0
        %1772 = vmatprep.subr.bf16.mxu0 0
        %1773 = vmatpush1.bf16.msra.mxu0 0
        %1774 = vmatprep.subr.bf16.mxu0 0
        %1775 = vmatpush1.bf16.msra.mxu0 0
        %1776 = vmatprep.subr.bf16.mxu0 0
        %1777 = vmatpush1.bf16.msra.mxu0 0
        %1778 = vmatprep.subr.bf16.mxu0 0
        %1779 = vmatpush1.bf16.msra.mxu0 0
        %1780 = vmatprep.subr.bf16.mxu0 0
        %1781 = vmatpush1.bf16.msra.mxu0 0
        %1782 = vmatprep.subr.bf16.mxu0 0
        %1783 = vmatpush1.bf16.msra.mxu0 0
        %1784 = vmatprep.subr.bf16.mxu0 0
        %1785 = vmatpush1.bf16.msra.mxu0 0
        %1786 = vmatprep.subr.bf16.mxu0 0
        %1787 = vmatpush1.bf16.msra.mxu0 0
        %1788 = vmatprep.subr.bf16.mxu0 0
        %1789 = vmatpush1.bf16.msra.mxu0 0
        %1790 = vmatprep.subr.bf16.mxu0 0
        %1791 = vmatpush1.bf16.msra.mxu0 0
        %1792 = vmatprep.subr.bf16.mxu0 0
        %1793 = vmatpush1.bf16.msra.mxu0 0
        %1794 = vmatprep.subr.bf16.mxu0 0
        %1795 = vmatpush1.bf16.msra.mxu0 0
        %1796 = vmatprep.mubr.bf16.mxu0 0
        %1797 = vmatmul.mubr.bf16.gmra.mrb[0].mxu0 %v1717
        %v1798 = vpop.f32.mrb[0].mxu0
        %v1799 = vadd.f32 0.0, %v1798
        %v1800 = vpop.f32.mrb[0].mxu0
        %v1801 = vpop.f32.mrb[0].mxu0
        %v1802 = vadd.f32 0.0, %v1801
        %v1803 = vpop.f32.mrb[0].mxu0
        %1804 = vmatprep.mubr.bf16.mxu0 0
        %1805 = vmatmul.mubr.bf16.gmra.mrb[0].mxu0 %v1720
        %v1806 = vpop.f32.mrb[0].mxu0
        %v1807 = vadd.f32 0.0, %v1806
        %v1808 = vpop.f32.mrb[0].mxu0
        %v1809 = vpop.f32.mrb[0].mxu0
        %v1810 = vadd.f32 0.0, %v1809
        %v1811 = vpop.f32.mrb[0].mxu0
        %1812 = vmatprep.mubr.bf16.mxu0 0
        %1813 = vmatmul.mubr.bf16.gmra.mrb[0].mxu0 %v1723
        %v1814 = vpop.f32.mrb[0].mxu0
        %v1815 = vadd.f32 0.0, %v1814
        %v1816 = vpop.f32.mrb[0].mxu0
        %v1817 = vpop.f32.mrb[0].mxu0
        %v1818 = vadd.f32 0.0, %v1817
        %v1819 = vpop.f32.mrb[0].mxu0
        %1820 = vmatprep.mubr.bf16.mxu0 0
        %1821 = vmatmul.mubr.bf16.gmra.mrb[0].mxu0 %v1726
        %v1822 = vpop.f32.mrb[0].mxu0
        %v1823 = vadd.f32 0.0, %v1822
        %v1824 = vpop.f32.mrb[0].mxu0
        %v1825 = vpop.f32.mrb[0].mxu0
        %v1826 = vadd.f32 0.0, %v1825
        %v1827 = vpop.f32.mrb[0].mxu0
        %1828 = vmatprep.mubr.bf16.mxu0 0
        %1829 = vmatmul.mubr.bf16.gmra.mrb[0].mxu0 %v1729
        %v1830 = vpop.f32.mrb[0].mxu0
        %v1831 = vadd.f32 0.0, %v1830
        %v1832 = vpop.f32.mrb[0].mxu0
        %v1833 = vpop.f32.mrb[0].mxu0
        %v1834 = vadd.f32 0.0, %v1833
        %v1835 = vpop.f32.mrb[0].mxu0
        %1836 = vmatprep.mubr.bf16.mxu0 0
        %1837 = vmatmul.mubr.bf16.gmra.mrb[0].mxu0 %v1732
        %v1838 = vpop.f32.mrb[0].mxu0
        %v1839 = vadd.f32 0.0, %v1838
        %v1840 = vpop.f32.mrb[0].mxu0
        %v1841 = vpop.f32.mrb[0].mxu0
        %v1842 = vadd.f32 0.0, %v1841
        %v1843 = vpop.f32.mrb[0].mxu0
        %1844 = vmatprep.mubr.bf16.mxu0 0
        %1845 = vmatmul.mubr.bf16.gmra.mrb[0].mxu0 %v1735
        %v1846 = vpop.f32.mrb[0].mxu0
        %v1847 = vadd.f32 0.0, %v1846
        %v1848 = vpop.f32.mrb[0].mxu0
        %v1849 = vpop.f32.mrb[0].mxu0
        %v1850 = vadd.f32 0.0, %v1849
        %v1851 = vpop.f32.mrb[0].mxu0
        %1852 = vmatprep.mubr.bf16.mxu0 0
        %1853 = vmatmul.mubr.bf16.gmra.mrb[0].mxu0 %v1738
        %v1854 = vpop.f32.mrb[0].mxu0
        %v1855 = vadd.f32 0.0, %v1854
        %v1856 = vpop.f32.mrb[0].mxu0
        %v1857 = vpop.f32.mrb[0].mxu0
        %v1858 = vadd.f32 0.0, %v1857
        %v1859 = vpop.f32.mrb[0].mxu0
        %1860 = vmatprep.mubr.bf16.mxu0 0
        %1861 = vmatmul.mubr.bf16.gmra.mrb[0].mxu0 %v1741
        %v1862 = vpop.f32.mrb[0].mxu0
        %v1863 = vadd.f32 0.0, %v1862
        %v1864 = vpop.f32.mrb[0].mxu0
        %v1865 = vpop.f32.mrb[0].mxu0
        %v1866 = vadd.f32 0.0, %v1865
        %v1867 = vpop.f32.mrb[0].mxu0
        %1868 = vmatprep.mubr.bf16.mxu0 0
        %1869 = vmatmul.mubr.bf16.gmra.mrb[0].mxu0 %v1744
        %v1870 = vpop.f32.mrb[0].mxu0
        %v1871 = vadd.f32 0.0, %v1870
        %v1872 = vpop.f32.mrb[0].mxu0
        %v1873 = vpop.f32.mrb[0].mxu0
        %v1874 = vadd.f32 0.0, %v1873
        %v1875 = vpop.f32.mrb[0].mxu0
        %1876 = vmatprep.mubr.bf16.mxu0 0
        %1877 = vmatmul.mubr.bf16.gmra.mrb[0].mxu0 %v1747
        %v1878 = vpop.f32.mrb[0].mxu0
        %v1879 = vadd.f32 0.0, %v1878
        %v1880 = vpop.f32.mrb[0].mxu0
        %v1881 = vpop.f32.mrb[0].mxu0
        %v1882 = vadd.f32 0.0, %v1881
        %v1883 = vpop.f32.mrb[0].mxu0
        %1884 = vmatprep.mubr.bf16.mxu0 0
        %1885 = vmatmul.mubr.bf16.gmra.mrb[0].mxu0 %v1750
        %v1886 = vpop.f32.mrb[0].mxu0
        %v1887 = vadd.f32 0.0, %v1886
        %v1888 = vpop.f32.mrb[0].mxu0
        %v1889 = vpop.f32.mrb[0].mxu0
        %v1890 = vadd.f32 0.0, %v1889
        %v1891 = vpop.f32.mrb[0].mxu0
        %1892 = vmatprep.mubr.bf16.mxu0 0
        %1893 = vmatmul.mubr.bf16.gmra.mrb[0].mxu0 %v1753
        %v1894 = vpop.f32.mrb[0].mxu0
        %v1895 = vadd.f32 0.0, %v1894
        %v1896 = vpop.f32.mrb[0].mxu0
        %v1897 = vpop.f32.mrb[0].mxu0
        %v1898 = vadd.f32 0.0, %v1897
        %v1899 = vpop.f32.mrb[0].mxu0
        %1900 = vmatprep.mubr.bf16.mxu0 0
        %1901 = vmatmul.mubr.bf16.gmra.mrb[0].mxu0 %v1756
        %v1902 = vpop.f32.mrb[0].mxu0
        %v1903 = vadd.f32 0.0, %v1902
        %v1904 = vpop.f32.mrb[0].mxu0
        %v1905 = vpop.f32.mrb[0].mxu0
        %v1906 = vadd.f32 0.0, %v1905
        %v1907 = vpop.f32.mrb[0].mxu0
        %1908 = vmatprep.mubr.bf16.mxu0 0
        %1909 = vmatmul.mubr.bf16.gmra.mrb[0].mxu0 %v1759
        %v1910 = vpop.f32.mrb[0].mxu0
        %v1911 = vadd.f32 0.0, %v1910
        %v1912 = vpop.f32.mrb[0].mxu0
        %v1913 = vpop.f32.mrb[0].mxu0
        %v1914 = vadd.f32 0.0, %v1913
        %v1915 = vpop.f32.mrb[0].mxu0
        %1916 = vmatprep.mubr.bf16.mxu0 0
        %1917 = vmatmul.mubr.bf16.gmra.mrb[0].mxu0 %v1762
        %v1918 = vpop.f32.mrb[0].mxu0
        %v1919 = vadd.f32 0.0, %v1918
        %v1920 = vpop.f32.mrb[0].mxu0
        %v1921 = vpop.f32.mrb[0].mxu0
        %v1922 = vadd.f32 0.0, %v1921
        %v1923 = vpop.f32.mrb[0].mxu0
        %1924 = vdwg.mxu0
        %v1925 = vadd.f32 %v1232, %v1799
        %v1926 = vadd.f32 %v1233, %v1802
        %v1927 = vadd.f32 %v1234, %v1807
        %v1928 = vadd.f32 %v1235, %v1810
        %v1929 = vadd.f32 %v1236, %v1815
        %v1930 = vadd.f32 %v1237, %v1818
        %v1931 = vadd.f32 %v1238, %v1823
        %v1932 = vadd.f32 %v1239, %v1826
        %v1933 = vadd.f32 %v1240, %v1831
        %v1934 = vadd.f32 %v1241, %v1834
        %v1935 = vadd.f32 %v1242, %v1839
        %v1936 = vadd.f32 %v1243, %v1842
        %v1937 = vadd.f32 %v1244, %v1847
        %v1938 = vadd.f32 %v1245, %v1850
        %v1939 = vadd.f32 %v1246, %v1855
        %v1940 = vadd.f32 %v1247, %v1858
        %v1941 = vadd.f32 %v1248, %v1863
        %v1942 = vadd.f32 %v1249, %v1866
        %v1943 = vadd.f32 %v1250, %v1871
        %v1944 = vadd.f32 %v1251, %v1874
        %v1945 = vadd.f32 %v1252, %v1879
        %v1946 = vadd.f32 %v1253, %v1882
        %v1947 = vadd.f32 %v1254, %v1887
        %v1948 = vadd.f32 %v1255, %v1890
        %v1949 = vadd.f32 %v1256, %v1895
        %v1950 = vadd.f32 %v1257, %v1898
        %v1951 = vadd.f32 %v1258, %v1903
        %v1952 = vadd.f32 %v1259, %v1906
        %v1953 = vadd.f32 %v1260, %v1911
        %v1954 = vadd.f32 %v1261, %v1914
        %v1955 = vadd.f32 %v1262, %v1919
        %v1956 = vadd.f32 %v1263, %v1922
        %v1958 = vshrl.u32 %v548, 16
        %v1960 = vrot.slane %v1958, 4
        %v1961 = vshll.u32 %v548, 16
        %v1963 = vrot.slane %v1961, 5
        %v1964 = vor.u32 %v1960, %v1963
        %v1965 = vrot.slane %v1964, 4
        %v1967 = vshll.u32 %v549, 16
        %v1969 = vrot.slane %v1967, 5
        %v1970 = vsel %vm1266, %v1965, %v1969
        %v1971 = vshrl.u32 %v549, 16
        %v1973 = vrot.slane %v1971, 4
        %v1974 = vor.u32 %v1973, %v1969
        %v1975 = vrot.slane %v1974, 4
        %v1977 = vshll.u32 %v550, 16
        %v1979 = vrot.slane %v1977, 5
        %v1980 = vsel %vm1266, %v1975, %v1979
        %s1981 = scalar_lea.vmem [#allocation8], 64
        %v1982 = vld [vmem:[%s1981] sm:$0xf]
        %v1983 = vld [vmem:[%s1981 + $0x4] sm:$0xf]
        %v1984 = vld [vmem:[%s1981 + $0x8] sm:$0xf]
        %v1985 = vld [vmem:[%s1981 + $0xc] sm:$0xf]
        %v1986 = vunpack.c.l.b16 %v1970
        %v1987 = vunpack.c.l.b16 %v1980
        %v1988 = vpack.c.b16 %v1987, %v1986
        %v1993 = vunpack.c.l.b16 %v1982
        %v1994 = vunpack.c.l.b16 %v1983
        %v1995 = vunpack.c.l.b16 %v1984
        %v1996 = vunpack.c.l.b16 %v1985
        %v1997 = vpack.c.b16 %v1994, %v1993
        %v1998 = vpack.c.b16 %v1996, %v1995
        %v2002 = vsel %vm655, %v1988, 0
        %2004 = vmatprep.subr.bf16.mxu0 0
        %2005 = vmatpush1.bf16.msra.mxu0 %v1997
        %2006 = vmatprep.subr.bf16.mxu0 0
        %2007 = vmatpush1.bf16.msra.mxu0 %v1998
        %2008 = vmatprep.subr.bf16.mxu0 0
        %2009 = vmatpush1.bf16.msra.mxu0 0
        %2010 = vmatprep.subr.bf16.mxu0 0
        %2011 = vmatpush1.bf16.msra.mxu0 0
        %2012 = vmatprep.subr.bf16.mxu0 0
        %2013 = vmatpush1.bf16.msra.mxu0 0
        %2014 = vmatprep.subr.bf16.mxu0 0
        %2015 = vmatpush1.bf16.msra.mxu0 0
        %2016 = vmatprep.subr.bf16.mxu0 0
        %2017 = vmatpush1.bf16.msra.mxu0 0
        %2018 = vmatprep.subr.bf16.mxu0 0
        %2019 = vmatpush1.bf16.msra.mxu0 0
        %2020 = vmatprep.subr.bf16.mxu0 0
        %2021 = vmatpush1.bf16.msra.mxu0 0
        %2022 = vmatprep.subr.bf16.mxu0 0
        %2023 = vmatpush1.bf16.msra.mxu0 0
        %2024 = vmatprep.subr.bf16.mxu0 0
        %2025 = vmatpush1.bf16.msra.mxu0 0
        %2026 = vmatprep.subr.bf16.mxu0 0
        %2027 = vmatpush1.bf16.msra.mxu0 0
        %2028 = vmatprep.subr.bf16.mxu0 0
        %2029 = vmatpush1.bf16.msra.mxu0 0
        %2030 = vmatprep.subr.bf16.mxu0 0
        %2031 = vmatpush1.bf16.msra.mxu0 0
        %2032 = vmatprep.subr.bf16.mxu0 0
        %2033 = vmatpush1.bf16.msra.mxu0 0
        %2034 = vmatprep.subr.bf16.mxu0 0
        %2035 = vmatpush1.bf16.msra.mxu0 0
        %2036 = vmatprep.mubr.bf16.mxu0 0
        %2037 = vmatmul.mubr.bf16.gmra.mrb[0].mxu0 %v1720
        %v2038 = vpop.f32.mrb[0].mxu0
        %v2039 = vadd.f32 0.0, %v2038
        %v2040 = vpop.f32.mrb[0].mxu0
        %v2041 = vpop.f32.mrb[0].mxu0
        %v2042 = vadd.f32 0.0, %v2041
        %v2043 = vpop.f32.mrb[0].mxu0
        %2044 = vmatprep.mubr.bf16.mxu0 0
        %2045 = vmatmul.mubr.bf16.gmra.mrb[0].mxu0 %v1723
        %v2046 = vpop.f32.mrb[0].mxu0
        %v2047 = vadd.f32 0.0, %v2046
        %v2048 = vpop.f32.mrb[0].mxu0
        %v2049 = vpop.f32.mrb[0].mxu0
        %v2050 = vadd.f32 0.0, %v2049
        %v2051 = vpop.f32.mrb[0].mxu0
        %2052 = vmatprep.mubr.bf16.mxu0 0
        %2053 = vmatmul.mubr.bf16.gmra.mrb[0].mxu0 %v1726
        %v2054 = vpop.f32.mrb[0].mxu0
        %v2055 = vadd.f32 0.0, %v2054
        %v2056 = vpop.f32.mrb[0].mxu0
        %v2057 = vpop.f32.mrb[0].mxu0
        %v2058 = vadd.f32 0.0, %v2057
        %v2059 = vpop.f32.mrb[0].mxu0
        %2060 = vmatprep.mubr.bf16.mxu0 0
        %2061 = vmatmul.mubr.bf16.gmra.mrb[0].mxu0 %v1729
        %v2062 = vpop.f32.mrb[0].mxu0
        %v2063 = vadd.f32 0.0, %v2062
        %v2064 = vpop.f32.mrb[0].mxu0
        %v2065 = vpop.f32.mrb[0].mxu0
        %v2066 = vadd.f32 0.0, %v2065
        %v2067 = vpop.f32.mrb[0].mxu0
        %2068 = vmatprep.mubr.bf16.mxu0 0
        %2069 = vmatmul.mubr.bf16.gmra.mrb[0].mxu0 %v1732
        %v2070 = vpop.f32.mrb[0].mxu0
        %v2071 = vadd.f32 0.0, %v2070
        %v2072 = vpop.f32.mrb[0].mxu0
        %v2073 = vpop.f32.mrb[0].mxu0
        %v2074 = vadd.f32 0.0, %v2073
        %v2075 = vpop.f32.mrb[0].mxu0
        %2076 = vmatprep.mubr.bf16.mxu0 0
        %2077 = vmatmul.mubr.bf16.gmra.mrb[0].mxu0 %v1735
        %v2078 = vpop.f32.mrb[0].mxu0
        %v2079 = vadd.f32 0.0, %v2078
        %v2080 = vpop.f32.mrb[0].mxu0
        %v2081 = vpop.f32.mrb[0].mxu0
        %v2082 = vadd.f32 0.0, %v2081
        %v2083 = vpop.f32.mrb[0].mxu0
        %2084 = vmatprep.mubr.bf16.mxu0 0
        %2085 = vmatmul.mubr.bf16.gmra.mrb[0].mxu0 %v1738
        %v2086 = vpop.f32.mrb[0].mxu0
        %v2087 = vadd.f32 0.0, %v2086
        %v2088 = vpop.f32.mrb[0].mxu0
        %v2089 = vpop.f32.mrb[0].mxu0
        %v2090 = vadd.f32 0.0, %v2089
        %v2091 = vpop.f32.mrb[0].mxu0
        %2092 = vmatprep.mubr.bf16.mxu0 0
        %2093 = vmatmul.mubr.bf16.gmra.mrb[0].mxu0 %v1741
        %v2094 = vpop.f32.mrb[0].mxu0
        %v2095 = vadd.f32 0.0, %v2094
        %v2096 = vpop.f32.mrb[0].mxu0
        %v2097 = vpop.f32.mrb[0].mxu0
        %v2098 = vadd.f32 0.0, %v2097
        %v2099 = vpop.f32.mrb[0].mxu0
        %2100 = vmatprep.mubr.bf16.mxu0 0
        %2101 = vmatmul.mubr.bf16.gmra.mrb[0].mxu0 %v1744
        %v2102 = vpop.f32.mrb[0].mxu0
        %v2103 = vadd.f32 0.0, %v2102
        %v2104 = vpop.f32.mrb[0].mxu0
        %v2105 = vpop.f32.mrb[0].mxu0
        %v2106 = vadd.f32 0.0, %v2105
        %v2107 = vpop.f32.mrb[0].mxu0
        %2108 = vmatprep.mubr.bf16.mxu0 0
        %2109 = vmatmul.mubr.bf16.gmra.mrb[0].mxu0 %v1747
        %v2110 = vpop.f32.mrb[0].mxu0
        %v2111 = vadd.f32 0.0, %v2110
        %v2112 = vpop.f32.mrb[0].mxu0
        %v2113 = vpop.f32.mrb[0].mxu0
        %v2114 = vadd.f32 0.0, %v2113
        %v2115 = vpop.f32.mrb[0].mxu0
        %2116 = vmatprep.mubr.bf16.mxu0 0
        %2117 = vmatmul.mubr.bf16.gmra.mrb[0].mxu0 %v1750
        %v2118 = vpop.f32.mrb[0].mxu0
        %v2119 = vadd.f32 0.0, %v2118
        %v2120 = vpop.f32.mrb[0].mxu0
        %v2121 = vpop.f32.mrb[0].mxu0
        %v2122 = vadd.f32 0.0, %v2121
        %v2123 = vpop.f32.mrb[0].mxu0
        %2124 = vmatprep.mubr.bf16.mxu0 0
        %2125 = vmatmul.mubr.bf16.gmra.mrb[0].mxu0 %v1753
        %v2126 = vpop.f32.mrb[0].mxu0
        %v2127 = vadd.f32 0.0, %v2126
        %v2128 = vpop.f32.mrb[0].mxu0
        %v2129 = vpop.f32.mrb[0].mxu0
        %v2130 = vadd.f32 0.0, %v2129
        %v2131 = vpop.f32.mrb[0].mxu0
        %2132 = vmatprep.mubr.bf16.mxu0 0
        %2133 = vmatmul.mubr.bf16.gmra.mrb[0].mxu0 %v1756
        %v2134 = vpop.f32.mrb[0].mxu0
        %v2135 = vadd.f32 0.0, %v2134
        %v2136 = vpop.f32.mrb[0].mxu0
        %v2137 = vpop.f32.mrb[0].mxu0
        %v2138 = vadd.f32 0.0, %v2137
        %v2139 = vpop.f32.mrb[0].mxu0
        %2140 = vmatprep.mubr.bf16.mxu0 0
        %2141 = vmatmul.mubr.bf16.gmra.mrb[0].mxu0 %v1759
        %v2142 = vpop.f32.mrb[0].mxu0
        %v2143 = vadd.f32 0.0, %v2142
        %v2144 = vpop.f32.mrb[0].mxu0
        %v2145 = vpop.f32.mrb[0].mxu0
        %v2146 = vadd.f32 0.0, %v2145
        %v2147 = vpop.f32.mrb[0].mxu0
        %2148 = vmatprep.mubr.bf16.mxu0 0
        %2149 = vmatmul.mubr.bf16.gmra.mrb[0].mxu0 %v1762
        %v2150 = vpop.f32.mrb[0].mxu0
        %v2151 = vadd.f32 0.0, %v2150
        %v2152 = vpop.f32.mrb[0].mxu0
        %v2153 = vpop.f32.mrb[0].mxu0
        %v2154 = vadd.f32 0.0, %v2153
        %v2155 = vpop.f32.mrb[0].mxu0
        %2156 = vmatprep.mubr.bf16.mxu0 0
        %2157 = vmatmul.mubr.bf16.gmra.mrb[0].mxu0 %v2002
        %v2158 = vpop.f32.mrb[0].mxu0
        %v2159 = vadd.f32 0.0, %v2158
        %v2160 = vpop.f32.mrb[0].mxu0
        %v2161 = vpop.f32.mrb[0].mxu0
        %v2162 = vadd.f32 0.0, %v2161
        %v2163 = vpop.f32.mrb[0].mxu0
        %2164 = vdwg.mxu0
        %v2165 = vadd.f32 %v1925, %v2039
        %v2166 = vadd.f32 %v1926, %v2042
        %v2167 = vadd.f32 %v1927, %v2047
        %v2168 = vadd.f32 %v1928, %v2050
        %v2169 = vadd.f32 %v1929, %v2055
        %v2170 = vadd.f32 %v1930, %v2058
        %v2171 = vadd.f32 %v1931, %v2063
        %v2172 = vadd.f32 %v1932, %v2066
        %v2173 = vadd.f32 %v1933, %v2071
        %v2174 = vadd.f32 %v1934, %v2074
        %v2175 = vadd.f32 %v1935, %v2079
        %v2176 = vadd.f32 %v1936, %v2082
        %v2177 = vadd.f32 %v1937, %v2087
        %v2178 = vadd.f32 %v1938, %v2090
        %v2179 = vadd.f32 %v1939, %v2095
        %v2180 = vadd.f32 %v1940, %v2098
        %v2181 = vadd.f32 %v1941, %v2103
        %v2182 = vadd.f32 %v1942, %v2106
        %v2183 = vadd.f32 %v1943, %v2111
        %v2184 = vadd.f32 %v1944, %v2114
        %v2185 = vadd.f32 %v1945, %v2119
        %v2186 = vadd.f32 %v1946, %v2122
        %v2187 = vadd.f32 %v1947, %v2127
        %v2188 = vadd.f32 %v1948, %v2130
        %v2189 = vadd.f32 %v1949, %v2135
        %v2190 = vadd.f32 %v1950, %v2138
        %v2191 = vadd.f32 %v1951, %v2143
        %v2192 = vadd.f32 %v1952, %v2146
        %v2193 = vadd.f32 %v1953, %v2151
        %v2194 = vadd.f32 %v1954, %v2154
        %v2195 = vadd.f32 %v1955, %v2159
        %v2196 = vadd.f32 %v1956, %v2162
        %v2198 = vshrl.u32 %v551, 16
        %v2200 = vrot.slane %v2198, 4
        %v2201 = vshll.u32 %v551, 16
        %v2203 = vrot.slane %v2201, 5
        %v2204 = vor.u32 %v2200, %v2203
        %v2205 = vrot.slane %v2204, 4
        %v2207 = vshll.u32 %v552, 16
        %v2209 = vrot.slane %v2207, 5
        %v2210 = vsel %vm1266, %v2205, %v2209
        %v2211 = vshrl.u32 %v552, 16
        %v2213 = vrot.slane %v2211, 4
        %v2214 = vor.u32 %v2213, %v2209
        %v2215 = vrot.slane %v2214, 4
        %v2217 = vshll.u32 %v553, 16
        %v2219 = vrot.slane %v2217, 5
        %v2220 = vsel %vm1266, %v2215, %v2219
        %s2221 = scalar_lea.vmem [#allocation8], 112
        %v2222 = vld [vmem:[%s2221] sm:$0xf]
        %v2223 = vld [vmem:[%s2221 + $0x4] sm:$0xf]
        %v2224 = vld [vmem:[%s2221 + $0x8] sm:$0xf]
        %v2225 = vld [vmem:[%s2221 + $0xc] sm:$0xf]
        %v2226 = vunpack.c.l.b16 %v2210
        %v2227 = vunpack.c.l.b16 %v2220
        %v2228 = vpack.c.b16 %v2227, %v2226
        %v2233 = vunpack.c.l.b16 %v2222
        %v2234 = vunpack.c.l.b16 %v2223
        %v2235 = vunpack.c.l.b16 %v2224
        %v2236 = vunpack.c.l.b16 %v2225
        %v2237 = vpack.c.b16 %v2234, %v2233
        %v2238 = vpack.c.b16 %v2236, %v2235
        %v2242 = vsel %vm655, %v2228, 0
        %2244 = vmatprep.subr.bf16.mxu0 0
        %2245 = vmatpush1.bf16.msra.mxu0 %v2237
        %2246 = vmatprep.subr.bf16.mxu0 0
        %2247 = vmatpush1.bf16.msra.mxu0 %v2238
        %2248 = vmatprep.subr.bf16.mxu0 0
        %2249 = vmatpush1.bf16.msra.mxu0 0
        %2250 = vmatprep.subr.bf16.mxu0 0
        %2251 = vmatpush1.bf16.msra.mxu0 0
        %2252 = vmatprep.subr.bf16.mxu0 0
        %2253 = vmatpush1.bf16.msra.mxu0 0
        %2254 = vmatprep.subr.bf16.mxu0 0
        %2255 = vmatpush1.bf16.msra.mxu0 0
        %2256 = vmatprep.subr.bf16.mxu0 0
        %2257 = vmatpush1.bf16.msra.mxu0 0
        %2258 = vmatprep.subr.bf16.mxu0 0
        %2259 = vmatpush1.bf16.msra.mxu0 0
        %2260 = vmatprep.subr.bf16.mxu0 0
        %2261 = vmatpush1.bf16.msra.mxu0 0
        %2262 = vmatprep.subr.bf16.mxu0 0
        %2263 = vmatpush1.bf16.msra.mxu0 0
        %2264 = vmatprep.subr.bf16.mxu0 0
        %2265 = vmatpush1.bf16.msra.mxu0 0
        %2266 = vmatprep.subr.bf16.mxu0 0
        %2267 = vmatpush1.bf16.msra.mxu0 0
        %2268 = vmatprep.subr.bf16.mxu0 0
        %2269 = vmatpush1.bf16.msra.mxu0 0
        %2270 = vmatprep.subr.bf16.mxu0 0
        %2271 = vmatpush1.bf16.msra.mxu0 0
        %2272 = vmatprep.subr.bf16.mxu0 0
        %2273 = vmatpush1.bf16.msra.mxu0 0
        %2274 = vmatprep.subr.bf16.mxu0 0
        %2275 = vmatpush1.bf16.msra.mxu0 0
        %2276 = vmatprep.mubr.bf16.mxu0 0
        %2277 = vmatmul.mubr.bf16.gmra.mrb[0].mxu0 %v1723
        %v2278 = vpop.f32.mrb[0].mxu0
        %v2279 = vadd.f32 0.0, %v2278
        %v2280 = vpop.f32.mrb[0].mxu0
        %v2281 = vpop.f32.mrb[0].mxu0
        %v2282 = vadd.f32 0.0, %v2281
        %v2283 = vpop.f32.mrb[0].mxu0
        %2284 = vmatprep.mubr.bf16.mxu0 0
        %2285 = vmatmul.mubr.bf16.gmra.mrb[0].mxu0 %v1726
        %v2286 = vpop.f32.mrb[0].mxu0
        %v2287 = vadd.f32 0.0, %v2286
        %v2288 = vpop.f32.mrb[0].mxu0
        %v2289 = vpop.f32.mrb[0].mxu0
        %v2290 = vadd.f32 0.0, %v2289
        %v2291 = vpop.f32.mrb[0].mxu0
        %2292 = vmatprep.mubr.bf16.mxu0 0
        %2293 = vmatmul.mubr.bf16.gmra.mrb[0].mxu0 %v1729
        %v2294 = vpop.f32.mrb[0].mxu0
        %v2295 = vadd.f32 0.0, %v2294
        %v2296 = vpop.f32.mrb[0].mxu0
        %v2297 = vpop.f32.mrb[0].mxu0
        %v2298 = vadd.f32 0.0, %v2297
        %v2299 = vpop.f32.mrb[0].mxu0
        %2300 = vmatprep.mubr.bf16.mxu0 0
        %2301 = vmatmul.mubr.bf16.gmra.mrb[0].mxu0 %v1732
        %v2302 = vpop.f32.mrb[0].mxu0
        %v2303 = vadd.f32 0.0, %v2302
        %v2304 = vpop.f32.mrb[0].mxu0
        %v2305 = vpop.f32.mrb[0].mxu0
        %v2306 = vadd.f32 0.0, %v2305
        %v2307 = vpop.f32.mrb[0].mxu0
        %2308 = vmatprep.mubr.bf16.mxu0 0
        %2309 = vmatmul.mubr.bf16.gmra.mrb[0].mxu0 %v1735
        %v2310 = vpop.f32.mrb[0].mxu0
        %v2311 = vadd.f32 0.0, %v2310
        %v2312 = vpop.f32.mrb[0].mxu0
        %v2313 = vpop.f32.mrb[0].mxu0
        %v2314 = vadd.f32 0.0, %v2313
        %v2315 = vpop.f32.mrb[0].mxu0
        %2316 = vmatprep.mubr.bf16.mxu0 0
        %2317 = vmatmul.mubr.bf16.gmra.mrb[0].mxu0 %v1738
        %v2318 = vpop.f32.mrb[0].mxu0
        %v2319 = vadd.f32 0.0, %v2318
        %v2320 = vpop.f32.mrb[0].mxu0
        %v2321 = vpop.f32.mrb[0].mxu0
        %v2322 = vadd.f32 0.0, %v2321
        %v2323 = vpop.f32.mrb[0].mxu0
        %2324 = vmatprep.mubr.bf16.mxu0 0
        %2325 = vmatmul.mubr.bf16.gmra.mrb[0].mxu0 %v1741
        %v2326 = vpop.f32.mrb[0].mxu0
        %v2327 = vadd.f32 0.0, %v2326
        %v2328 = vpop.f32.mrb[0].mxu0
        %v2329 = vpop.f32.mrb[0].mxu0
        %v2330 = vadd.f32 0.0, %v2329
        %v2331 = vpop.f32.mrb[0].mxu0
        %2332 = vmatprep.mubr.bf16.mxu0 0
        %2333 = vmatmul.mubr.bf16.gmra.mrb[0].mxu0 %v1744
        %v2334 = vpop.f32.mrb[0].mxu0
        %v2335 = vadd.f32 0.0, %v2334
        %v2336 = vpop.f32.mrb[0].mxu0
        %v2337 = vpop.f32.mrb[0].mxu0
        %v2338 = vadd.f32 0.0, %v2337
        %v2339 = vpop.f32.mrb[0].mxu0
        %2340 = vmatprep.mubr.bf16.mxu0 0
        %2341 = vmatmul.mubr.bf16.gmra.mrb[0].mxu0 %v1747
        %v2342 = vpop.f32.mrb[0].mxu0
        %v2343 = vadd.f32 0.0, %v2342
        %v2344 = vpop.f32.mrb[0].mxu0
        %v2345 = vpop.f32.mrb[0].mxu0
        %v2346 = vadd.f32 0.0, %v2345
        %v2347 = vpop.f32.mrb[0].mxu0
        %2348 = vmatprep.mubr.bf16.mxu0 0
        %2349 = vmatmul.mubr.bf16.gmra.mrb[0].mxu0 %v1750
        %v2350 = vpop.f32.mrb[0].mxu0
        %v2351 = vadd.f32 0.0, %v2350
        %v2352 = vpop.f32.mrb[0].mxu0
        %v2353 = vpop.f32.mrb[0].mxu0
        %v2354 = vadd.f32 0.0, %v2353
        %v2355 = vpop.f32.mrb[0].mxu0
        %2356 = vmatprep.mubr.bf16.mxu0 0
        %2357 = vmatmul.mubr.bf16.gmra.mrb[0].mxu0 %v1753
        %v2358 = vpop.f32.mrb[0].mxu0
        %v2359 = vadd.f32 0.0, %v2358
        %v2360 = vpop.f32.mrb[0].mxu0
        %v2361 = vpop.f32.mrb[0].mxu0
        %v2362 = vadd.f32 0.0, %v2361
        %v2363 = vpop.f32.mrb[0].mxu0
        %2364 = vmatprep.mubr.bf16.mxu0 0
        %2365 = vmatmul.mubr.bf16.gmra.mrb[0].mxu0 %v1756
        %v2366 = vpop.f32.mrb[0].mxu0
        %v2367 = vadd.f32 0.0, %v2366
        %v2368 = vpop.f32.mrb[0].mxu0
        %v2369 = vpop.f32.mrb[0].mxu0
        %v2370 = vadd.f32 0.0, %v2369
        %v2371 = vpop.f32.mrb[0].mxu0
        %2372 = vmatprep.mubr.bf16.mxu0 0
        %2373 = vmatmul.mubr.bf16.gmra.mrb[0].mxu0 %v1759
        %v2374 = vpop.f32.mrb[0].mxu0
        %v2375 = vadd.f32 0.0, %v2374
        %v2376 = vpop.f32.mrb[0].mxu0
        %v2377 = vpop.f32.mrb[0].mxu0
        %v2378 = vadd.f32 0.0, %v2377
        %v2379 = vpop.f32.mrb[0].mxu0
        %2380 = vmatprep.mubr.bf16.mxu0 0
        %2381 = vmatmul.mubr.bf16.gmra.mrb[0].mxu0 %v1762
        %v2382 = vpop.f32.mrb[0].mxu0
        %v2383 = vadd.f32 0.0, %v2382
        %v2384 = vpop.f32.mrb[0].mxu0
        %v2385 = vpop.f32.mrb[0].mxu0
        %v2386 = vadd.f32 0.0, %v2385
        %v2387 = vpop.f32.mrb[0].mxu0
        %2388 = vmatprep.mubr.bf16.mxu0 0
        %2389 = vmatmul.mubr.bf16.gmra.mrb[0].mxu0 %v2002
        %v2390 = vpop.f32.mrb[0].mxu0
        %v2391 = vadd.f32 0.0, %v2390
        %v2392 = vpop.f32.mrb[0].mxu0
        %v2393 = vpop.f32.mrb[0].mxu0
        %v2394 = vadd.f32 0.0, %v2393
        %v2395 = vpop.f32.mrb[0].mxu0
        %2396 = vmatprep.mubr.bf16.mxu0 0
        %2397 = vmatmul.mubr.bf16.gmra.mrb[0].mxu0 %v2242
        %v2398 = vpop.f32.mrb[0].mxu0
        %v2399 = vadd.f32 0.0, %v2398
        %v2400 = vpop.f32.mrb[0].mxu0
        %v2401 = vpop.f32.mrb[0].mxu0
        %v2402 = vadd.f32 0.0, %v2401
        %v2403 = vpop.f32.mrb[0].mxu0
        %2404 = vdwg.mxu0
        %v2405 = vadd.f32 %v2165, %v2279
        %v2406 = vadd.f32 %v2166, %v2282
        %v2407 = vadd.f32 %v2167, %v2287
        %v2408 = vadd.f32 %v2168, %v2290
        %v2409 = vadd.f32 %v2169, %v2295
        %v2410 = vadd.f32 %v2170, %v2298
        %v2411 = vadd.f32 %v2171, %v2303
        %v2412 = vadd.f32 %v2172, %v2306
        %v2413 = vadd.f32 %v2173, %v2311
        %v2414 = vadd.f32 %v2174, %v2314
        %v2415 = vadd.f32 %v2175, %v2319
        %v2416 = vadd.f32 %v2176, %v2322
        %v2417 = vadd.f32 %v2177, %v2327
        %v2418 = vadd.f32 %v2178, %v2330
        %v2419 = vadd.f32 %v2179, %v2335
        %v2420 = vadd.f32 %v2180, %v2338
        %v2421 = vadd.f32 %v2181, %v2343
        %v2422 = vadd.f32 %v2182, %v2346
        %v2423 = vadd.f32 %v2183, %v2351
        %v2424 = vadd.f32 %v2184, %v2354
        %v2425 = vadd.f32 %v2185, %v2359
        %v2426 = vadd.f32 %v2186, %v2362
        %v2427 = vadd.f32 %v2187, %v2367
        %v2428 = vadd.f32 %v2188, %v2370
        %v2429 = vadd.f32 %v2189, %v2375
        %v2430 = vadd.f32 %v2190, %v2378
        %v2431 = vadd.f32 %v2191, %v2383
        %v2432 = vadd.f32 %v2192, %v2386
        %v2433 = vadd.f32 %v2193, %v2391
        %v2434 = vadd.f32 %v2194, %v2394
        %v2435 = vadd.f32 %v2195, %v2399
        %v2436 = vadd.f32 %v2196, %v2402
        %vm2453 = vcmask 1042432
        %vm2454 = vcmask 1046532
        %vm2455 = vmor %vm2453, %vm2454
        %v2456 = vrot.slane %v500, 5
        %v2457 = vrot.slane %v2456, 4
        %v2458 = vrot.slane %v501, 5
        %v2459 = vsel %vm2455, %v2457, %v2458
        %v2460 = vrot.slane %v2458, 4
        %v2461 = vrot.slane %v502, 5
        %v2462 = vsel %vm2455, %v2460, %v2461
        %v2463 = vrot.slane %v503, 5
        %v2464 = vrot.slane %v2463, 4
        %v2465 = vrot.slane %v504, 5
        %v2466 = vsel %vm2455, %v2464, %v2465
        %v2467 = vrot.slane %v2465, 4
        %v2468 = vrot.slane %v505, 5
        %v2469 = vsel %vm2455, %v2467, %v2468
        %v2470 = vrot.slane %v506, 5
        %v2471 = vrot.slane %v2470, 4
        %v2472 = vrot.slane %v507, 5
        %v2473 = vsel %vm2455, %v2471, %v2472
        %v2474 = vrot.slane %v2472, 4
        %v2475 = vrot.slane %v508, 5
        %v2476 = vsel %vm2455, %v2474, %v2475
        %v2477 = vrot.slane %v509, 5
        %v2478 = vrot.slane %v2477, 4
        %v2479 = vrot.slane %v510, 5
        %v2480 = vsel %vm2455, %v2478, %v2479
        %v2481 = vrot.slane %v2479, 4
        %v2482 = vrot.slane %v511, 5
        %v2483 = vsel %vm2455, %v2481, %v2482
        %v2484 = vrot.slane %v512, 5
        %v2485 = vrot.slane %v2484, 4
        %v2486 = vrot.slane %v513, 5
        %v2487 = vsel %vm2455, %v2485, %v2486
        %v2488 = vrot.slane %v2486, 4
        %v2489 = vrot.slane %v514, 5
        %v2490 = vsel %vm2455, %v2488, %v2489
        %v2491 = vrot.slane %v515, 5
        %v2492 = vrot.slane %v2491, 4
        %v2493 = vrot.slane %v516, 5
        %v2494 = vsel %vm2455, %v2492, %v2493
        %v2495 = vrot.slane %v2493, 4
        %v2496 = vrot.slane %v517, 5
        %v2497 = vsel %vm2455, %v2495, %v2496
        %v2498 = vrot.slane %v518, 5
        %v2499 = vrot.slane %v2498, 4
        %v2500 = vrot.slane %v519, 5
        %v2501 = vsel %vm2455, %v2499, %v2500
        %v2502 = vrot.slane %v2500, 4
        %v2503 = vrot.slane %v520, 5
        %v2504 = vsel %vm2455, %v2502, %v2503
        %v2505 = vrot.slane %v521, 5
        %v2506 = vrot.slane %v2505, 4
        %v2507 = vrot.slane %v522, 5
        %v2508 = vsel %vm2455, %v2506, %v2507
        %v2509 = vrot.slane %v2507, 4
        %v2510 = vrot.slane %v523, 5
        %v2511 = vsel %vm2455, %v2509, %v2510
        %v2512 = vrot.slane %v524, 5
        %v2513 = vrot.slane %v2512, 4
        %v2514 = vrot.slane %v525, 5
        %v2515 = vsel %vm2455, %v2513, %v2514
        %v2516 = vrot.slane %v2514, 4
        %v2517 = vrot.slane %v526, 5
        %v2518 = vsel %vm2455, %v2516, %v2517
        %v2519 = vrot.slane %v527, 5
        %v2520 = vrot.slane %v2519, 4
        %v2521 = vrot.slane %v528, 5
        %v2522 = vsel %vm2455, %v2520, %v2521
        %v2523 = vrot.slane %v2521, 4
        %v2524 = vrot.slane %v529, 5
        %v2525 = vsel %vm2455, %v2523, %v2524
        %v2526 = vrot.slane %v530, 5
        %v2527 = vrot.slane %v2526, 4
        %v2528 = vrot.slane %v531, 5
        %v2529 = vsel %vm2455, %v2527, %v2528
        %v2530 = vrot.slane %v2528, 4
        %v2531 = vrot.slane %v532, 5
        %v2532 = vsel %vm2455, %v2530, %v2531
        %v2533 = vrot.slane %v533, 5
        %v2534 = vrot.slane %v2533, 4
        %v2535 = vrot.slane %v534, 5
        %v2536 = vsel %vm2455, %v2534, %v2535
        %v2537 = vrot.slane %v2535, 4
        %v2538 = vrot.slane %v535, 5
        %v2539 = vsel %vm2455, %v2537, %v2538
        %v2540 = vrot.slane %v536, 5
        %v2541 = vrot.slane %v2540, 4
        %v2542 = vrot.slane %v537, 5
        %v2543 = vsel %vm2455, %v2541, %v2542
        %v2544 = vrot.slane %v2542, 4
        %v2545 = vrot.slane %v538, 5
        %v2546 = vsel %vm2455, %v2544, %v2545
        %v2547 = vrot.slane %v539, 5
        %v2548 = vrot.slane %v2547, 4
        %v2549 = vrot.slane %v540, 5
        %v2550 = vsel %vm2455, %v2548, %v2549
        %v2551 = vrot.slane %v2549, 4
        %v2552 = vrot.slane %v541, 5
        %v2553 = vsel %vm2455, %v2551, %v2552
        %v2554 = vrot.slane %v542, 5
        %v2555 = vrot.slane %v2554, 4
        %v2556 = vrot.slane %v543, 5
        %v2557 = vsel %vm2455, %v2555, %v2556
        %v2558 = vrot.slane %v2556, 4
        %v2559 = vrot.slane %v544, 5
        %v2560 = vsel %vm2455, %v2558, %v2559
        %v2561 = vrot.slane %v545, 5
        %v2562 = vrot.slane %v2561, 4
        %v2563 = vrot.slane %v546, 5
        %v2564 = vsel %vm2455, %v2562, %v2563
        %v2565 = vrot.slane %v2563, 4
        %v2566 = vrot.slane %v547, 5
        %v2567 = vsel %vm2455, %v2565, %v2566
        %s2568 = scalar_lea.vmem [#allocation8], 32
        %v2569 = vld [vmem:[%s2568] sm:$0xf]
        %v2570 = vld [vmem:[%s2568 + $0x4] sm:$0xf]
        %v2571 = vld [vmem:[%s2568 + $0x8] sm:$0xf]
        %v2572 = vld [vmem:[%s2568 + $0xc] sm:$0xf]
        %v2573 = vunpack.c.l.b16 %v2459
        %v2574 = vunpack.c.l.b16 %v2462
        %v2575 = vunpack.c.l.b16 %v2466
        %v2576 = vunpack.c.l.b16 %v2469
        %v2577 = vunpack.c.l.b16 %v2473
        %v2578 = vunpack.c.l.b16 %v2476
        %v2579 = vunpack.c.l.b16 %v2480
        %v2580 = vunpack.c.l.b16 %v2483
        %v2581 = vunpack.c.l.b16 %v2487
        %v2582 = vunpack.c.l.b16 %v2490
        %v2583 = vunpack.c.l.b16 %v2494
        %v2584 = vunpack.c.l.b16 %v2497
        %v2585 = vunpack.c.l.b16 %v2501
        %v2586 = vunpack.c.l.b16 %v2504
        %v2587 = vunpack.c.l.b16 %v2508
        %v2588 = vunpack.c.l.b16 %v2511
        %v2589 = vunpack.c.l.b16 %v2515
        %v2590 = vunpack.c.l.b16 %v2518
        %v2591 = vunpack.c.l.b16 %v2522
        %v2592 = vunpack.c.l.b16 %v2525
        %v2593 = vunpack.c.l.b16 %v2529
        %v2594 = vunpack.c.l.b16 %v2532
        %v2595 = vunpack.c.l.b16 %v2536
        %v2596 = vunpack.c.l.b16 %v2539
        %v2597 = vunpack.c.l.b16 %v2543
        %v2598 = vunpack.c.l.b16 %v2546
        %v2599 = vunpack.c.l.b16 %v2550
        %v2600 = vunpack.c.l.b16 %v2553
        %v2601 = vunpack.c.l.b16 %v2557
        %v2602 = vunpack.c.l.b16 %v2560
        %v2603 = vunpack.c.l.b16 %v2564
        %v2604 = vunpack.c.l.b16 %v2567
        %v2605 = vpack.c.b16 %v2574, %v2573
        %v2606 = vpack.c.b16 %v2576, %v2575
        %v2607 = vpack.c.b16 %v2578, %v2577
        %v2608 = vpack.c.b16 %v2580, %v2579
        %v2609 = vpack.c.b16 %v2582, %v2581
        %v2610 = vpack.c.b16 %v2584, %v2583
        %v2611 = vpack.c.b16 %v2586, %v2585
        %v2612 = vpack.c.b16 %v2588, %v2587
        %v2613 = vpack.c.b16 %v2590, %v2589
        %v2614 = vpack.c.b16 %v2592, %v2591
        %v2615 = vpack.c.b16 %v2594, %v2593
        %v2616 = vpack.c.b16 %v2596, %v2595
        %v2617 = vpack.c.b16 %v2598, %v2597
        %v2618 = vpack.c.b16 %v2600, %v2599
        %v2619 = vpack.c.b16 %v2602, %v2601
        %v2620 = vpack.c.b16 %v2604, %v2603
        %v2625 = vunpack.c.l.b16 %v2569
        %v2626 = vunpack.c.l.b16 %v2570
        %v2627 = vunpack.c.l.b16 %v2571
        %v2628 = vunpack.c.l.b16 %v2572
        %v2629 = vpack.c.b16 %v2626, %v2625
        %v2630 = vpack.c.b16 %v2628, %v2627
        %v2634 = vsel %vm655, %v2605, 0
        %v2637 = vsel %vm655, %v2606, 0
        %v2640 = vsel %vm655, %v2607, 0
        %v2643 = vsel %vm655, %v2608, 0
        %v2646 = vsel %vm655, %v2609, 0
        %v2649 = vsel %vm655, %v2610, 0
        %v2652 = vsel %vm655, %v2611, 0
        %v2655 = vsel %vm655, %v2612, 0
        %v2658 = vsel %vm655, %v2613, 0
        %v2661 = vsel %vm655, %v2614, 0
        %v2664 = vsel %vm655, %v2615, 0
        %v2667 = vsel %vm655, %v2616, 0
        %v2670 = vsel %vm655, %v2617, 0
        %v2673 = vsel %vm655, %v2618, 0
        %v2676 = vsel %vm655, %v2619, 0
        %v2679 = vsel %vm655, %v2620, 0
        %2681 = vmatprep.subr.bf16.mxu0 0
        %2682 = vmatpush1.bf16.msra.mxu0 %v2629
        %2683 = vmatprep.subr.bf16.mxu0 0
        %2684 = vmatpush1.bf16.msra.mxu0 %v2630
        %2685 = vmatprep.subr.bf16.mxu0 0
        %2686 = vmatpush1.bf16.msra.mxu0 0
        %2687 = vmatprep.subr.bf16.mxu0 0
        %2688 = vmatpush1.bf16.msra.mxu0 0
        %2689 = vmatprep.subr.bf16.mxu0 0
        %2690 = vmatpush1.bf16.msra.mxu0 0
        %2691 = vmatprep.subr.bf16.mxu0 0
        %2692 = vmatpush1.bf16.msra.mxu0 0
        %2693 = vmatprep.subr.bf16.mxu0 0
        %2694 = vmatpush1.bf16.msra.mxu0 0
        %2695 = vmatprep.subr.bf16.mxu0 0
        %2696 = vmatpush1.bf16.msra.mxu0 0
        %2697 = vmatprep.subr.bf16.mxu0 0
        %2698 = vmatpush1.bf16.msra.mxu0 0
        %2699 = vmatprep.subr.bf16.mxu0 0
        %2700 = vmatpush1.bf16.msra.mxu0 0
        %2701 = vmatprep.subr.bf16.mxu0 0
        %2702 = vmatpush1.bf16.msra.mxu0 0
        %2703 = vmatprep.subr.bf16.mxu0 0
        %2704 = vmatpush1.bf16.msra.mxu0 0
        %2705 = vmatprep.subr.bf16.mxu0 0
        %2706 = vmatpush1.bf16.msra.mxu0 0
        %2707 = vmatprep.subr.bf16.mxu0 0
        %2708 = vmatpush1.bf16.msra.mxu0 0
        %2709 = vmatprep.subr.bf16.mxu0 0
        %2710 = vmatpush1.bf16.msra.mxu0 0
        %2711 = vmatprep.subr.bf16.mxu0 0
        %2712 = vmatpush1.bf16.msra.mxu0 0
        %2713 = vmatprep.mubr.bf16.mxu0 0
        %2714 = vmatmul.mubr.bf16.gmra.mrb[0].mxu0 %v2634
        %v2715 = vpop.f32.mrb[0].mxu0
        %v2716 = vadd.f32 0.0, %v2715
        %v2717 = vpop.f32.mrb[0].mxu0
        %v2718 = vpop.f32.mrb[0].mxu0
        %v2719 = vadd.f32 0.0, %v2718
        %v2720 = vpop.f32.mrb[0].mxu0
        %2721 = vmatprep.mubr.bf16.mxu0 0
        %2722 = vmatmul.mubr.bf16.gmra.mrb[0].mxu0 %v2637
        %v2723 = vpop.f32.mrb[0].mxu0
        %v2724 = vadd.f32 0.0, %v2723
        %v2725 = vpop.f32.mrb[0].mxu0
        %v2726 = vpop.f32.mrb[0].mxu0
        %v2727 = vadd.f32 0.0, %v2726
        %v2728 = vpop.f32.mrb[0].mxu0
        %2729 = vmatprep.mubr.bf16.mxu0 0
        %2730 = vmatmul.mubr.bf16.gmra.mrb[0].mxu0 %v2640
        %v2731 = vpop.f32.mrb[0].mxu0
        %v2732 = vadd.f32 0.0, %v2731
        %v2733 = vpop.f32.mrb[0].mxu0
        %v2734 = vpop.f32.mrb[0].mxu0
        %v2735 = vadd.f32 0.0, %v2734
        %v2736 = vpop.f32.mrb[0].mxu0
        %2737 = vmatprep.mubr.bf16.mxu0 0
        %2738 = vmatmul.mubr.bf16.gmra.mrb[0].mxu0 %v2643
        %v2739 = vpop.f32.mrb[0].mxu0
        %v2740 = vadd.f32 0.0, %v2739
        %v2741 = vpop.f32.mrb[0].mxu0
        %v2742 = vpop.f32.mrb[0].mxu0
        %v2743 = vadd.f32 0.0, %v2742
        %v2744 = vpop.f32.mrb[0].mxu0
        %2745 = vmatprep.mubr.bf16.mxu0 0
        %2746 = vmatmul.mubr.bf16.gmra.mrb[0].mxu0 %v2646
        %v2747 = vpop.f32.mrb[0].mxu0
        %v2748 = vadd.f32 0.0, %v2747
        %v2749 = vpop.f32.mrb[0].mxu0
        %v2750 = vpop.f32.mrb[0].mxu0
        %v2751 = vadd.f32 0.0, %v2750
        %v2752 = vpop.f32.mrb[0].mxu0
        %2753 = vmatprep.mubr.bf16.mxu0 0
        %2754 = vmatmul.mubr.bf16.gmra.mrb[0].mxu0 %v2649
        %v2755 = vpop.f32.mrb[0].mxu0
        %v2756 = vadd.f32 0.0, %v2755
        %v2757 = vpop.f32.mrb[0].mxu0
        %v2758 = vpop.f32.mrb[0].mxu0
        %v2759 = vadd.f32 0.0, %v2758
        %v2760 = vpop.f32.mrb[0].mxu0
        %2761 = vmatprep.mubr.bf16.mxu0 0
        %2762 = vmatmul.mubr.bf16.gmra.mrb[0].mxu0 %v2652
        %v2763 = vpop.f32.mrb[0].mxu0
        %v2764 = vadd.f32 0.0, %v2763
        %v2765 = vpop.f32.mrb[0].mxu0
        %v2766 = vpop.f32.mrb[0].mxu0
        %v2767 = vadd.f32 0.0, %v2766
        %v2768 = vpop.f32.mrb[0].mxu0
        %2769 = vmatprep.mubr.bf16.mxu0 0
        %2770 = vmatmul.mubr.bf16.gmra.mrb[0].mxu0 %v2655
        %v2771 = vpop.f32.mrb[0].mxu0
        %v2772 = vadd.f32 0.0, %v2771
        %v2773 = vpop.f32.mrb[0].mxu0
        %v2774 = vpop.f32.mrb[0].mxu0
        %v2775 = vadd.f32 0.0, %v2774
        %v2776 = vpop.f32.mrb[0].mxu0
        %2777 = vmatprep.mubr.bf16.mxu0 0
        %2778 = vmatmul.mubr.bf16.gmra.mrb[0].mxu0 %v2658
        %v2779 = vpop.f32.mrb[0].mxu0
        %v2780 = vadd.f32 0.0, %v2779
        %v2781 = vpop.f32.mrb[0].mxu0
        %v2782 = vpop.f32.mrb[0].mxu0
        %v2783 = vadd.f32 0.0, %v2782
        %v2784 = vpop.f32.mrb[0].mxu0
        %2785 = vmatprep.mubr.bf16.mxu0 0
        %2786 = vmatmul.mubr.bf16.gmra.mrb[0].mxu0 %v2661
        %v2787 = vpop.f32.mrb[0].mxu0
        %v2788 = vadd.f32 0.0, %v2787
        %v2789 = vpop.f32.mrb[0].mxu0
        %v2790 = vpop.f32.mrb[0].mxu0
        %v2791 = vadd.f32 0.0, %v2790
        %v2792 = vpop.f32.mrb[0].mxu0
        %2793 = vmatprep.mubr.bf16.mxu0 0
        %2794 = vmatmul.mubr.bf16.gmra.mrb[0].mxu0 %v2664
        %v2795 = vpop.f32.mrb[0].mxu0
        %v2796 = vadd.f32 0.0, %v2795
        %v2797 = vpop.f32.mrb[0].mxu0
        %v2798 = vpop.f32.mrb[0].mxu0
        %v2799 = vadd.f32 0.0, %v2798
        %v2800 = vpop.f32.mrb[0].mxu0
        %2801 = vmatprep.mubr.bf16.mxu0 0
        %2802 = vmatmul.mubr.bf16.gmra.mrb[0].mxu0 %v2667
        %v2803 = vpop.f32.mrb[0].mxu0
        %v2804 = vadd.f32 0.0, %v2803
        %v2805 = vpop.f32.mrb[0].mxu0
        %v2806 = vpop.f32.mrb[0].mxu0
        %v2807 = vadd.f32 0.0, %v2806
        %v2808 = vpop.f32.mrb[0].mxu0
        %2809 = vmatprep.mubr.bf16.mxu0 0
        %2810 = vmatmul.mubr.bf16.gmra.mrb[0].mxu0 %v2670
        %v2811 = vpop.f32.mrb[0].mxu0
        %v2812 = vadd.f32 0.0, %v2811
        %v2813 = vpop.f32.mrb[0].mxu0
        %v2814 = vpop.f32.mrb[0].mxu0
        %v2815 = vadd.f32 0.0, %v2814
        %v2816 = vpop.f32.mrb[0].mxu0
        %2817 = vmatprep.mubr.bf16.mxu0 0
        %2818 = vmatmul.mubr.bf16.gmra.mrb[0].mxu0 %v2673
        %v2819 = vpop.f32.mrb[0].mxu0
        %v2820 = vadd.f32 0.0, %v2819
        %v2821 = vpop.f32.mrb[0].mxu0
        %v2822 = vpop.f32.mrb[0].mxu0
        %v2823 = vadd.f32 0.0, %v2822
        %v2824 = vpop.f32.mrb[0].mxu0
        %2825 = vmatprep.mubr.bf16.mxu0 0
        %2826 = vmatmul.mubr.bf16.gmra.mrb[0].mxu0 %v2676
        %v2827 = vpop.f32.mrb[0].mxu0
        %v2828 = vadd.f32 0.0, %v2827
        %v2829 = vpop.f32.mrb[0].mxu0
        %v2830 = vpop.f32.mrb[0].mxu0
        %v2831 = vadd.f32 0.0, %v2830
        %v2832 = vpop.f32.mrb[0].mxu0
        %2833 = vmatprep.mubr.bf16.mxu0 0
        %2834 = vmatmul.mubr.bf16.gmra.mrb[0].mxu0 %v2679
        %v2835 = vpop.f32.mrb[0].mxu0
        %v2836 = vadd.f32 0.0, %v2835
        %v2837 = vpop.f32.mrb[0].mxu0
        %v2838 = vpop.f32.mrb[0].mxu0
        %v2839 = vadd.f32 0.0, %v2838
        %v2840 = vpop.f32.mrb[0].mxu0
        %2841 = vdwg.mxu0
        %v2842 = vadd.f32 %v2405, %v2716
        %v2843 = vadd.f32 %v2406, %v2719
        %v2844 = vadd.f32 %v2407, %v2724
        %v2845 = vadd.f32 %v2408, %v2727
        %v2846 = vadd.f32 %v2409, %v2732
        %v2847 = vadd.f32 %v2410, %v2735
        %v2848 = vadd.f32 %v2411, %v2740
        %v2849 = vadd.f32 %v2412, %v2743
        %v2850 = vadd.f32 %v2413, %v2748
        %v2851 = vadd.f32 %v2414, %v2751
        %v2852 = vadd.f32 %v2415, %v2756
        %v2853 = vadd.f32 %v2416, %v2759
        %v2854 = vadd.f32 %v2417, %v2764
        %v2855 = vadd.f32 %v2418, %v2767
        %v2856 = vadd.f32 %v2419, %v2772
        %v2857 = vadd.f32 %v2420, %v2775
        %v2858 = vadd.f32 %v2421, %v2780
        %v2859 = vadd.f32 %v2422, %v2783
        %v2860 = vadd.f32 %v2423, %v2788
        %v2861 = vadd.f32 %v2424, %v2791
        %v2862 = vadd.f32 %v2425, %v2796
        %v2863 = vadd.f32 %v2426, %v2799
        %v2864 = vadd.f32 %v2427, %v2804
        %v2865 = vadd.f32 %v2428, %v2807
        %v2866 = vadd.f32 %v2429, %v2812
        %v2867 = vadd.f32 %v2430, %v2815
        %v2868 = vadd.f32 %v2431, %v2820
        %v2869 = vadd.f32 %v2432, %v2823
        %v2870 = vadd.f32 %v2433, %v2828
        %v2871 = vadd.f32 %v2434, %v2831
        %v2872 = vadd.f32 %v2435, %v2836
        %v2873 = vadd.f32 %v2436, %v2839
        %v2875 = vrot.slane %v548, 5
        %v2876 = vrot.slane %v2875, 4
        %v2877 = vrot.slane %v549, 5
        %v2878 = vsel %vm2455, %v2876, %v2877
        %v2879 = vrot.slane %v2877, 4
        %v2880 = vrot.slane %v550, 5
        %v2881 = vsel %vm2455, %v2879, %v2880
        %s2882 = scalar_lea.vmem [#allocation8], 80
        %v2883 = vld [vmem:[%s2882] sm:$0xf]
        %v2884 = vld [vmem:[%s2882 + $0x4] sm:$0xf]
        %v2885 = vld [vmem:[%s2882 + $0x8] sm:$0xf]
        %v2886 = vld [vmem:[%s2882 + $0xc] sm:$0xf]
        %v2887 = vunpack.c.l.b16 %v2878
        %v2888 = vunpack.c.l.b16 %v2881
        %v2889 = vpack.c.b16 %v2888, %v2887
        %v2894 = vunpack.c.l.b16 %v2883
        %v2895 = vunpack.c.l.b16 %v2884
        %v2896 = vunpack.c.l.b16 %v2885
        %v2897 = vunpack.c.l.b16 %v2886
        %v2898 = vpack.c.b16 %v2895, %v2894
        %v2899 = vpack.c.b16 %v2897, %v2896
        %v2903 = vsel %vm655, %v2889, 0
        %2905 = vmatprep.subr.bf16.mxu0 0
        %2906 = vmatpush1.bf16.msra.mxu0 %v2898
        %2907 = vmatprep.subr.bf16.mxu0 0
        %2908 = vmatpush1.bf16.msra.mxu0 %v2899
        %2909 = vmatprep.subr.bf16.mxu0 0
        %2910 = vmatpush1.bf16.msra.mxu0 0
        %2911 = vmatprep.subr.bf16.mxu0 0
        %2912 = vmatpush1.bf16.msra.mxu0 0
        %2913 = vmatprep.subr.bf16.mxu0 0
        %2914 = vmatpush1.bf16.msra.mxu0 0
        %2915 = vmatprep.subr.bf16.mxu0 0
        %2916 = vmatpush1.bf16.msra.mxu0 0
        %2917 = vmatprep.subr.bf16.mxu0 0
        %2918 = vmatpush1.bf16.msra.mxu0 0
        %2919 = vmatprep.subr.bf16.mxu0 0
        %2920 = vmatpush1.bf16.msra.mxu0 0
        %2921 = vmatprep.subr.bf16.mxu0 0
        %2922 = vmatpush1.bf16.msra.mxu0 0
        %2923 = vmatprep.subr.bf16.mxu0 0
        %2924 = vmatpush1.bf16.msra.mxu0 0
        %2925 = vmatprep.subr.bf16.mxu0 0
        %2926 = vmatpush1.bf16.msra.mxu0 0
        %2927 = vmatprep.subr.bf16.mxu0 0
        %2928 = vmatpush1.bf16.msra.mxu0 0
        %2929 = vmatprep.subr.bf16.mxu0 0
        %2930 = vmatpush1.bf16.msra.mxu0 0
        %2931 = vmatprep.subr.bf16.mxu0 0
        %2932 = vmatpush1.bf16.msra.mxu0 0
        %2933 = vmatprep.subr.bf16.mxu0 0
        %2934 = vmatpush1.bf16.msra.mxu0 0
        %2935 = vmatprep.subr.bf16.mxu0 0
        %2936 = vmatpush1.bf16.msra.mxu0 0
        %2937 = vmatprep.mubr.bf16.mxu0 0
        %2938 = vmatmul.mubr.bf16.gmra.mrb[0].mxu0 %v2637
        %v2939 = vpop.f32.mrb[0].mxu0
        %v2940 = vadd.f32 0.0, %v2939
        %v2941 = vpop.f32.mrb[0].mxu0
        %v2942 = vpop.f32.mrb[0].mxu0
        %v2943 = vadd.f32 0.0, %v2942
        %v2944 = vpop.f32.mrb[0].mxu0
        %2945 = vmatprep.mubr.bf16.mxu0 0
        %2946 = vmatmul.mubr.bf16.gmra.mrb[0].mxu0 %v2640
        %v2947 = vpop.f32.mrb[0].mxu0
        %v2948 = vadd.f32 0.0, %v2947
        %v2949 = vpop.f32.mrb[0].mxu0
        %v2950 = vpop.f32.mrb[0].mxu0
        %v2951 = vadd.f32 0.0, %v2950
        %v2952 = vpop.f32.mrb[0].mxu0
        %2953 = vmatprep.mubr.bf16.mxu0 0
        %2954 = vmatmul.mubr.bf16.gmra.mrb[0].mxu0 %v2643
        %v2955 = vpop.f32.mrb[0].mxu0
        %v2956 = vadd.f32 0.0, %v2955
        %v2957 = vpop.f32.mrb[0].mxu0
        %v2958 = vpop.f32.mrb[0].mxu0
        %v2959 = vadd.f32 0.0, %v2958
        %v2960 = vpop.f32.mrb[0].mxu0
        %2961 = vmatprep.mubr.bf16.mxu0 0
        %2962 = vmatmul.mubr.bf16.gmra.mrb[0].mxu0 %v2646
        %v2963 = vpop.f32.mrb[0].mxu0
        %v2964 = vadd.f32 0.0, %v2963
        %v2965 = vpop.f32.mrb[0].mxu0
        %v2966 = vpop.f32.mrb[0].mxu0
        %v2967 = vadd.f32 0.0, %v2966
        %v2968 = vpop.f32.mrb[0].mxu0
        %2969 = vmatprep.mubr.bf16.mxu0 0
        %2970 = vmatmul.mubr.bf16.gmra.mrb[0].mxu0 %v2649
        %v2971 = vpop.f32.mrb[0].mxu0
        %v2972 = vadd.f32 0.0, %v2971
        %v2973 = vpop.f32.mrb[0].mxu0
        %v2974 = vpop.f32.mrb[0].mxu0
        %v2975 = vadd.f32 0.0, %v2974
        %v2976 = vpop.f32.mrb[0].mxu0
        %2977 = vmatprep.mubr.bf16.mxu0 0
        %2978 = vmatmul.mubr.bf16.gmra.mrb[0].mxu0 %v2652
        %v2979 = vpop.f32.mrb[0].mxu0
        %v2980 = vadd.f32 0.0, %v2979
        %v2981 = vpop.f32.mrb[0].mxu0
        %v2982 = vpop.f32.mrb[0].mxu0
        %v2983 = vadd.f32 0.0, %v2982
        %v2984 = vpop.f32.mrb[0].mxu0
        %2985 = vmatprep.mubr.bf16.mxu0 0
        %2986 = vmatmul.mubr.bf16.gmra.mrb[0].mxu0 %v2655
        %v2987 = vpop.f32.mrb[0].mxu0
        %v2988 = vadd.f32 0.0, %v2987
        %v2989 = vpop.f32.mrb[0].mxu0
        %v2990 = vpop.f32.mrb[0].mxu0
        %v2991 = vadd.f32 0.0, %v2990
        %v2992 = vpop.f32.mrb[0].mxu0
        %2993 = vmatprep.mubr.bf16.mxu0 0
        %2994 = vmatmul.mubr.bf16.gmra.mrb[0].mxu0 %v2658
        %v2995 = vpop.f32.mrb[0].mxu0
        %v2996 = vadd.f32 0.0, %v2995
        %v2997 = vpop.f32.mrb[0].mxu0
        %v2998 = vpop.f32.mrb[0].mxu0
        %v2999 = vadd.f32 0.0, %v2998
        %v3000 = vpop.f32.mrb[0].mxu0
        %3001 = vmatprep.mubr.bf16.mxu0 0
        %3002 = vmatmul.mubr.bf16.gmra.mrb[0].mxu0 %v2661
        %v3003 = vpop.f32.mrb[0].mxu0
        %v3004 = vadd.f32 0.0, %v3003
        %v3005 = vpop.f32.mrb[0].mxu0
        %v3006 = vpop.f32.mrb[0].mxu0
        %v3007 = vadd.f32 0.0, %v3006
        %v3008 = vpop.f32.mrb[0].mxu0
        %3009 = vmatprep.mubr.bf16.mxu0 0
        %3010 = vmatmul.mubr.bf16.gmra.mrb[0].mxu0 %v2664
        %v3011 = vpop.f32.mrb[0].mxu0
        %v3012 = vadd.f32 0.0, %v3011
        %v3013 = vpop.f32.mrb[0].mxu0
        %v3014 = vpop.f32.mrb[0].mxu0
        %v3015 = vadd.f32 0.0, %v3014
        %v3016 = vpop.f32.mrb[0].mxu0
        %3017 = vmatprep.mubr.bf16.mxu0 0
        %3018 = vmatmul.mubr.bf16.gmra.mrb[0].mxu0 %v2667
        %v3019 = vpop.f32.mrb[0].mxu0
        %v3020 = vadd.f32 0.0, %v3019
        %v3021 = vpop.f32.mrb[0].mxu0
        %v3022 = vpop.f32.mrb[0].mxu0
        %v3023 = vadd.f32 0.0, %v3022
        %v3024 = vpop.f32.mrb[0].mxu0
        %3025 = vmatprep.mubr.bf16.mxu0 0
        %3026 = vmatmul.mubr.bf16.gmra.mrb[0].mxu0 %v2670
        %v3027 = vpop.f32.mrb[0].mxu0
        %v3028 = vadd.f32 0.0, %v3027
        %v3029 = vpop.f32.mrb[0].mxu0
        %v3030 = vpop.f32.mrb[0].mxu0
        %v3031 = vadd.f32 0.0, %v3030
        %v3032 = vpop.f32.mrb[0].mxu0
        %3033 = vmatprep.mubr.bf16.mxu0 0
        %3034 = vmatmul.mubr.bf16.gmra.mrb[0].mxu0 %v2673
        %v3035 = vpop.f32.mrb[0].mxu0
        %v3036 = vadd.f32 0.0, %v3035
        %v3037 = vpop.f32.mrb[0].mxu0
        %v3038 = vpop.f32.mrb[0].mxu0
        %v3039 = vadd.f32 0.0, %v3038
        %v3040 = vpop.f32.mrb[0].mxu0
        %3041 = vmatprep.mubr.bf16.mxu0 0
        %3042 = vmatmul.mubr.bf16.gmra.mrb[0].mxu0 %v2676
        %v3043 = vpop.f32.mrb[0].mxu0
        %v3044 = vadd.f32 0.0, %v3043
        %v3045 = vpop.f32.mrb[0].mxu0
        %v3046 = vpop.f32.mrb[0].mxu0
        %v3047 = vadd.f32 0.0, %v3046
        %v3048 = vpop.f32.mrb[0].mxu0
        %3049 = vmatprep.mubr.bf16.mxu0 0
        %3050 = vmatmul.mubr.bf16.gmra.mrb[0].mxu0 %v2679
        %v3051 = vpop.f32.mrb[0].mxu0
        %v3052 = vadd.f32 0.0, %v3051
        %v3053 = vpop.f32.mrb[0].mxu0
        %v3054 = vpop.f32.mrb[0].mxu0
        %v3055 = vadd.f32 0.0, %v3054
        %v3056 = vpop.f32.mrb[0].mxu0
        %3057 = vmatprep.mubr.bf16.mxu0 0
        %3058 = vmatmul.mubr.bf16.gmra.mrb[0].mxu0 %v2903
        %v3059 = vpop.f32.mrb[0].mxu0
        %v3060 = vadd.f32 0.0, %v3059
        %v3061 = vpop.f32.mrb[0].mxu0
        %v3062 = vpop.f32.mrb[0].mxu0
        %v3063 = vadd.f32 0.0, %v3062
        %v3064 = vpop.f32.mrb[0].mxu0
        %3065 = vdwg.mxu0
        %v3066 = vadd.f32 %v2842, %v2940
        %v3067 = vadd.f32 %v2843, %v2943
        %v3068 = vadd.f32 %v2844, %v2948
        %v3069 = vadd.f32 %v2845, %v2951
        %v3070 = vadd.f32 %v2846, %v2956
        %v3071 = vadd.f32 %v2847, %v2959
        %v3072 = vadd.f32 %v2848, %v2964
        %v3073 = vadd.f32 %v2849, %v2967
        %v3074 = vadd.f32 %v2850, %v2972
        %v3075 = vadd.f32 %v2851, %v2975
        %v3076 = vadd.f32 %v2852, %v2980
        %v3077 = vadd.f32 %v2853, %v2983
        %v3078 = vadd.f32 %v2854, %v2988
        %v3079 = vadd.f32 %v2855, %v2991
        %v3080 = vadd.f32 %v2856, %v2996
        %v3081 = vadd.f32 %v2857, %v2999
        %v3082 = vadd.f32 %v2858, %v3004
        %v3083 = vadd.f32 %v2859, %v3007
        %v3084 = vadd.f32 %v2860, %v3012
        %v3085 = vadd.f32 %v2861, %v3015
        %v3086 = vadd.f32 %v2862, %v3020
        %v3087 = vadd.f32 %v2863, %v3023
        %v3088 = vadd.f32 %v2864, %v3028
        %v3089 = vadd.f32 %v2865, %v3031
        %v3090 = vadd.f32 %v2866, %v3036
        %v3091 = vadd.f32 %v2867, %v3039
        %v3092 = vadd.f32 %v2868, %v3044
        %v3093 = vadd.f32 %v2869, %v3047
        %v3094 = vadd.f32 %v2870, %v3052
        %v3095 = vadd.f32 %v2871, %v3055
        %v3096 = vadd.f32 %v2872, %v3060
        %v3097 = vadd.f32 %v2873, %v3063
        %v3099 = vrot.slane %v551, 5
        %v3100 = vrot.slane %v3099, 4
        %v3101 = vrot.slane %v552, 5
        %v3102 = vsel %vm2455, %v3100, %v3101
        %v3103 = vrot.slane %v3101, 4
        %v3104 = vrot.slane %v553, 5
        %v3105 = vsel %vm2455, %v3103, %v3104
        %s3106 = scalar_lea.vmem [#allocation8], 128
        %v3107 = vld [vmem:[%s3106] sm:$0xf]
        %v3108 = vld [vmem:[%s3106 + $0x4] sm:$0xf]
        %v3109 = vld [vmem:[%s3106 + $0x8] sm:$0xf]
        %v3110 = vld [vmem:[%s3106 + $0xc] sm:$0xf]
        %v3111 = vunpack.c.l.b16 %v3102
        %v3112 = vunpack.c.l.b16 %v3105
        %v3113 = vpack.c.b16 %v3112, %v3111
        %v3118 = vunpack.c.l.b16 %v3107
        %v3119 = vunpack.c.l.b16 %v3108
        %v3120 = vunpack.c.l.b16 %v3109
        %v3121 = vunpack.c.l.b16 %v3110
        %v3122 = vpack.c.b16 %v3119, %v3118
        %v3123 = vpack.c.b16 %v3121, %v3120
        %v3127 = vsel %vm655, %v3113, 0
        %3129 = vmatprep.subr.bf16.mxu0 0
        %3130 = vmatpush1.bf16.msra.mxu0 %v3122
        %3131 = vmatprep.subr.bf16.mxu0 0
        %3132 = vmatpush1.bf16.msra.mxu0 %v3123
        %3133 = vmatprep.subr.bf16.mxu0 0
        %3134 = vmatpush1.bf16.msra.mxu0 0
        %3135 = vmatprep.subr.bf16.mxu0 0
        %3136 = vmatpush1.bf16.msra.mxu0 0
        %3137 = vmatprep.subr.bf16.mxu0 0
        %3138 = vmatpush1.bf16.msra.mxu0 0
        %3139 = vmatprep.subr.bf16.mxu0 0
        %3140 = vmatpush1.bf16.msra.mxu0 0
        %3141 = vmatprep.subr.bf16.mxu0 0
        %3142 = vmatpush1.bf16.msra.mxu0 0
        %3143 = vmatprep.subr.bf16.mxu0 0
        %3144 = vmatpush1.bf16.msra.mxu0 0
        %3145 = vmatprep.subr.bf16.mxu0 0
        %3146 = vmatpush1.bf16.msra.mxu0 0
        %3147 = vmatprep.subr.bf16.mxu0 0
        %3148 = vmatpush1.bf16.msra.mxu0 0
        %3149 = vmatprep.subr.bf16.mxu0 0
        %3150 = vmatpush1.bf16.msra.mxu0 0
        %3151 = vmatprep.subr.bf16.mxu0 0
        %3152 = vmatpush1.bf16.msra.mxu0 0
        %3153 = vmatprep.subr.bf16.mxu0 0
        %3154 = vmatpush1.bf16.msra.mxu0 0
        %3155 = vmatprep.subr.bf16.mxu0 0
        %3156 = vmatpush1.bf16.msra.mxu0 0
        %3157 = vmatprep.subr.bf16.mxu0 0
        %3158 = vmatpush1.bf16.msra.mxu0 0
        %3159 = vmatprep.subr.bf16.mxu0 0
        %3160 = vmatpush1.bf16.msra.mxu0 0
        %3161 = vmatprep.mubr.bf16.mxu0 0
        %3162 = vmatmul.mubr.bf16.gmra.mrb[0].mxu0 %v2640
        %v3163 = vpop.f32.mrb[0].mxu0
        %v3164 = vadd.f32 0.0, %v3163
        %v3165 = vpop.f32.mrb[0].mxu0
        %v3166 = vpop.f32.mrb[0].mxu0
        %v3167 = vadd.f32 0.0, %v3166
        %v3168 = vpop.f32.mrb[0].mxu0
        %3169 = vmatprep.mubr.bf16.mxu0 0
        %3170 = vmatmul.mubr.bf16.gmra.mrb[0].mxu0 %v2643
        %v3171 = vpop.f32.mrb[0].mxu0
        %v3172 = vadd.f32 0.0, %v3171
        %v3173 = vpop.f32.mrb[0].mxu0
        %v3174 = vpop.f32.mrb[0].mxu0
        %v3175 = vadd.f32 0.0, %v3174
        %v3176 = vpop.f32.mrb[0].mxu0
        %3177 = vmatprep.mubr.bf16.mxu0 0
        %3178 = vmatmul.mubr.bf16.gmra.mrb[0].mxu0 %v2646
        %v3179 = vpop.f32.mrb[0].mxu0
        %v3180 = vadd.f32 0.0, %v3179
        %v3181 = vpop.f32.mrb[0].mxu0
        %v3182 = vpop.f32.mrb[0].mxu0
        %v3183 = vadd.f32 0.0, %v3182
        %v3184 = vpop.f32.mrb[0].mxu0
        %3185 = vmatprep.mubr.bf16.mxu0 0
        %3186 = vmatmul.mubr.bf16.gmra.mrb[0].mxu0 %v2649
        %v3187 = vpop.f32.mrb[0].mxu0
        %v3188 = vadd.f32 0.0, %v3187
        %v3189 = vpop.f32.mrb[0].mxu0
        %v3190 = vpop.f32.mrb[0].mxu0
        %v3191 = vadd.f32 0.0, %v3190
        %v3192 = vpop.f32.mrb[0].mxu0
        %3193 = vmatprep.mubr.bf16.mxu0 0
        %3194 = vmatmul.mubr.bf16.gmra.mrb[0].mxu0 %v2652
        %v3195 = vpop.f32.mrb[0].mxu0
        %v3196 = vadd.f32 0.0, %v3195
        %v3197 = vpop.f32.mrb[0].mxu0
        %v3198 = vpop.f32.mrb[0].mxu0
        %v3199 = vadd.f32 0.0, %v3198
        %v3200 = vpop.f32.mrb[0].mxu0
        %3201 = vmatprep.mubr.bf16.mxu0 0
        %3202 = vmatmul.mubr.bf16.gmra.mrb[0].mxu0 %v2655
        %v3203 = vpop.f32.mrb[0].mxu0
        %v3204 = vadd.f32 0.0, %v3203
        %v3205 = vpop.f32.mrb[0].mxu0
        %v3206 = vpop.f32.mrb[0].mxu0
        %v3207 = vadd.f32 0.0, %v3206
        %v3208 = vpop.f32.mrb[0].mxu0
        %3209 = vmatprep.mubr.bf16.mxu0 0
        %3210 = vmatmul.mubr.bf16.gmra.mrb[0].mxu0 %v2658
        %v3211 = vpop.f32.mrb[0].mxu0
        %v3212 = vadd.f32 0.0, %v3211
        %v3213 = vpop.f32.mrb[0].mxu0
        %v3214 = vpop.f32.mrb[0].mxu0
        %v3215 = vadd.f32 0.0, %v3214
        %v3216 = vpop.f32.mrb[0].mxu0
        %3217 = vmatprep.mubr.bf16.mxu0 0
        %3218 = vmatmul.mubr.bf16.gmra.mrb[0].mxu0 %v2661
        %v3219 = vpop.f32.mrb[0].mxu0
        %v3220 = vadd.f32 0.0, %v3219
        %v3221 = vpop.f32.mrb[0].mxu0
        %v3222 = vpop.f32.mrb[0].mxu0
        %v3223 = vadd.f32 0.0, %v3222
        %v3224 = vpop.f32.mrb[0].mxu0
        %3225 = vmatprep.mubr.bf16.mxu0 0
        %3226 = vmatmul.mubr.bf16.gmra.mrb[0].mxu0 %v2664
        %v3227 = vpop.f32.mrb[0].mxu0
        %v3228 = vadd.f32 0.0, %v3227
        %v3229 = vpop.f32.mrb[0].mxu0
        %v3230 = vpop.f32.mrb[0].mxu0
        %v3231 = vadd.f32 0.0, %v3230
        %v3232 = vpop.f32.mrb[0].mxu0
        %3233 = vmatprep.mubr.bf16.mxu0 0
        %3234 = vmatmul.mubr.bf16.gmra.mrb[0].mxu0 %v2667
        %v3235 = vpop.f32.mrb[0].mxu0
        %v3236 = vadd.f32 0.0, %v3235
        %v3237 = vpop.f32.mrb[0].mxu0
        %v3238 = vpop.f32.mrb[0].mxu0
        %v3239 = vadd.f32 0.0, %v3238
        %v3240 = vpop.f32.mrb[0].mxu0
        %3241 = vmatprep.mubr.bf16.mxu0 0
        %3242 = vmatmul.mubr.bf16.gmra.mrb[0].mxu0 %v2670
        %v3243 = vpop.f32.mrb[0].mxu0
        %v3244 = vadd.f32 0.0, %v3243
        %v3245 = vpop.f32.mrb[0].mxu0
        %v3246 = vpop.f32.mrb[0].mxu0
        %v3247 = vadd.f32 0.0, %v3246
        %v3248 = vpop.f32.mrb[0].mxu0
        %3249 = vmatprep.mubr.bf16.mxu0 0
        %3250 = vmatmul.mubr.bf16.gmra.mrb[0].mxu0 %v2673
        %v3251 = vpop.f32.mrb[0].mxu0
        %v3252 = vadd.f32 0.0, %v3251
        %v3253 = vpop.f32.mrb[0].mxu0
        %v3254 = vpop.f32.mrb[0].mxu0
        %v3255 = vadd.f32 0.0, %v3254
        %v3256 = vpop.f32.mrb[0].mxu0
        %3257 = vmatprep.mubr.bf16.mxu0 0
        %3258 = vmatmul.mubr.bf16.gmra.mrb[0].mxu0 %v2676
        %v3259 = vpop.f32.mrb[0].mxu0
        %v3260 = vadd.f32 0.0, %v3259
        %v3261 = vpop.f32.mrb[0].mxu0
        %v3262 = vpop.f32.mrb[0].mxu0
        %v3263 = vadd.f32 0.0, %v3262
        %v3264 = vpop.f32.mrb[0].mxu0
        %3265 = vmatprep.mubr.bf16.mxu0 0
        %3266 = vmatmul.mubr.bf16.gmra.mrb[0].mxu0 %v2679
        %v3267 = vpop.f32.mrb[0].mxu0
        %v3268 = vadd.f32 0.0, %v3267
        %v3269 = vpop.f32.mrb[0].mxu0
        %v3270 = vpop.f32.mrb[0].mxu0
        %v3271 = vadd.f32 0.0, %v3270
        %v3272 = vpop.f32.mrb[0].mxu0
        %3273 = vmatprep.mubr.bf16.mxu0 0
        %3274 = vmatmul.mubr.bf16.gmra.mrb[0].mxu0 %v2903
        %v3275 = vpop.f32.mrb[0].mxu0
        %v3276 = vadd.f32 0.0, %v3275
        %v3277 = vpop.f32.mrb[0].mxu0
        %v3278 = vpop.f32.mrb[0].mxu0
        %v3279 = vadd.f32 0.0, %v3278
        %v3280 = vpop.f32.mrb[0].mxu0
        %3281 = vmatprep.mubr.bf16.mxu0 0
        %3282 = vmatmul.mubr.bf16.gmra.mrb[0].mxu0 %v3127
        %v3283 = vpop.f32.mrb[0].mxu0
        %v3284 = vadd.f32 0.0, %v3283
        %v3285 = vpop.f32.mrb[0].mxu0
        %v3286 = vpop.f32.mrb[0].mxu0
        %v3287 = vadd.f32 0.0, %v3286
        %v3288 = vpop.f32.mrb[0].mxu0
        %3289 = vdwg.mxu0
        %v3290 = vadd.f32 %v3066, %v3164
        %v3291 = vadd.f32 %v3067, %v3167
        %v3292 = vadd.f32 %v3068, %v3172
        %v3293 = vadd.f32 %v3069, %v3175
        %v3294 = vadd.f32 %v3070, %v3180
        %v3295 = vadd.f32 %v3071, %v3183
        %v3296 = vadd.f32 %v3072, %v3188
        %v3297 = vadd.f32 %v3073, %v3191
        %v3298 = vadd.f32 %v3074, %v3196
        %v3299 = vadd.f32 %v3075, %v3199
        %v3300 = vadd.f32 %v3076, %v3204
        %v3301 = vadd.f32 %v3077, %v3207
        %v3302 = vadd.f32 %v3078, %v3212
        %v3303 = vadd.f32 %v3079, %v3215
        %v3304 = vadd.f32 %v3080, %v3220
        %v3305 = vadd.f32 %v3081, %v3223
        %v3306 = vadd.f32 %v3082, %v3228
        %v3307 = vadd.f32 %v3083, %v3231
        %v3308 = vadd.f32 %v3084, %v3236
        %v3309 = vadd.f32 %v3085, %v3239
        %v3310 = vadd.f32 %v3086, %v3244
        %v3311 = vadd.f32 %v3087, %v3247
        %v3312 = vadd.f32 %v3088, %v3252
        %v3313 = vadd.f32 %v3089, %v3255
        %v3314 = vadd.f32 %v3090, %v3260
        %v3315 = vadd.f32 %v3091, %v3263
        %v3316 = vadd.f32 %v3092, %v3268
        %v3317 = vadd.f32 %v3093, %v3271
        %v3318 = vadd.f32 %v3094, %v3276
        %v3319 = vadd.f32 %v3095, %v3279
        %v3320 = vadd.f32 %v3096, %v3284
        %v3321 = vadd.f32 %v3097, %v3287
        %v3322 = vld [vmem:[#allocation9] sm:$0x1]
        %v3324 = vlaneseq
        %v3325 = vshrl.u32 %v3324, 7
        %v3326 = vsub.s32 0, %v3325
        %v3327 = vrot.slane %v3322, %v3326
        %v3329 = vadd.f32 %v3290, %v3327
        %v3330 = vadd.f32 %v3291, %v3327
        %v3331 = vadd.f32 %v3292, %v3327
        %v3332 = vadd.f32 %v3293, %v3327
        %v3333 = vadd.f32 %v3294, %v3327
        %v3334 = vadd.f32 %v3295, %v3327
        %v3335 = vadd.f32 %v3296, %v3327
        %v3336 = vadd.f32 %v3297, %v3327
        %v3337 = vadd.f32 %v3298, %v3327
        %v3338 = vadd.f32 %v3299, %v3327
        %v3339 = vadd.f32 %v3300, %v3327
        %v3340 = vadd.f32 %v3301, %v3327
        %v3341 = vadd.f32 %v3302, %v3327
        %v3342 = vadd.f32 %v3303, %v3327
        %v3343 = vadd.f32 %v3304, %v3327
        %v3344 = vadd.f32 %v3305, %v3327
        %v3345 = vadd.f32 %v3306, %v3327
        %v3346 = vadd.f32 %v3307, %v3327
        %v3347 = vadd.f32 %v3308, %v3327
        %v3348 = vadd.f32 %v3309, %v3327
        %v3349 = vadd.f32 %v3310, %v3327
        %v3350 = vadd.f32 %v3311, %v3327
        %v3351 = vadd.f32 %v3312, %v3327
        %v3352 = vadd.f32 %v3313, %v3327
        %v3353 = vadd.f32 %v3314, %v3327
        %v3354 = vadd.f32 %v3315, %v3327
        %v3355 = vadd.f32 %v3316, %v3327
        %v3356 = vadd.f32 %v3317, %v3327
        %v3357 = vadd.f32 %v3318, %v3327
        %v3358 = vadd.f32 %v3319, %v3327
        %v3359 = vadd.f32 %v3320, %v3327
        %v3360 = vadd.f32 %v3321, %v3327
        %v3361 = vld [vmem:[%s345] sm:$0xf]
        %v3362 = vld [vmem:[%s345 + $0x4] sm:$0xf]
        %v3363 = vld [vmem:[%s345 + $0x8] sm:$0xf]
        %v3364 = vld [vmem:[%s345 + $0xc] sm:$0xf]
        %v3365 = vld [vmem:[%s345 + $0x10] sm:$0xf]
        %v3366 = vld [vmem:[%s345 + $0x14] sm:$0xf]
        %v3367 = vld [vmem:[%s345 + $0x18] sm:$0xf]
        %v3368 = vld [vmem:[%s345 + $0x1c] sm:$0xf]
        %v3369 = vld [vmem:[%s345 + $0x20] sm:$0xf]
        %v3370 = vld [vmem:[%s345 + $0x24] sm:$0xf]
        %v3371 = vld [vmem:[%s345 + $0x28] sm:$0xf]
        %v3372 = vld [vmem:[%s345 + $0x2c] sm:$0xf]
        %v3373 = vld [vmem:[%s345 + $0x30] sm:$0xf]
        %v3374 = vld [vmem:[%s345 + $0x34] sm:$0xf]
        %v3375 = vld [vmem:[%s345 + $0x38] sm:$0xf]
        %v3376 = vld [vmem:[%s345 + $0x3c] sm:$0xf]
        %v3377 = vld [vmem:[%s345 + $0x40] sm:$0xf]
        %v3378 = vld [vmem:[%s345 + $0x44] sm:$0xf]
        %v3379 = vld [vmem:[%s345 + $0x48] sm:$0xf]
        %v3380 = vld [vmem:[%s345 + $0x4c] sm:$0xf]
        %v3381 = vld [vmem:[%s345 + $0x50] sm:$0xf]
        %v3382 = vld [vmem:[%s345 + $0x54] sm:$0xf]
        %v3383 = vld [vmem:[%s345 + $0x58] sm:$0xf]
        %v3384 = vld [vmem:[%s345 + $0x5c] sm:$0xf]
        %v3385 = vld [vmem:[%s345 + $0x60] sm:$0xf]
        %v3386 = vld [vmem:[%s345 + $0x64] sm:$0xf]
        %v3387 = vld [vmem:[%s345 + $0x68] sm:$0xf]
        %v3388 = vld [vmem:[%s345 + $0x6c] sm:$0xf]
        %v3389 = vld [vmem:[%s345 + $0x70] sm:$0xf]
        %v3390 = vld [vmem:[%s345 + $0x74] sm:$0xf]
        %v3391 = vld [vmem:[%s345 + $0x78] sm:$0xf]
        %v3392 = vld [vmem:[%s345 + $0x7c] sm:$0xf]
        %v3393 = vunpack.c.l.bf16 %v3361
        %v3394 = vunpack.c.l.bf16 %v3362
        %v3395 = vunpack.c.l.bf16 %v3363
        %v3396 = vunpack.c.l.bf16 %v3364
        %v3397 = vunpack.c.l.bf16 %v3365
        %v3398 = vunpack.c.l.bf16 %v3366
        %v3399 = vunpack.c.l.bf16 %v3367
        %v3400 = vunpack.c.l.bf16 %v3368
        %v3401 = vunpack.c.l.bf16 %v3369
        %v3402 = vunpack.c.l.bf16 %v3370
        %v3403 = vunpack.c.l.bf16 %v3371
        %v3404 = vunpack.c.l.bf16 %v3372
        %v3405 = vunpack.c.l.bf16 %v3373
        %v3406 = vunpack.c.l.bf16 %v3374
        %v3407 = vunpack.c.l.bf16 %v3375
        %v3408 = vunpack.c.l.bf16 %v3376
        %v3409 = vunpack.c.l.bf16 %v3377
        %v3410 = vunpack.c.l.bf16 %v3378
        %v3411 = vunpack.c.l.bf16 %v3379
        %v3412 = vunpack.c.l.bf16 %v3380
        %v3413 = vunpack.c.l.bf16 %v3381
        %v3414 = vunpack.c.l.bf16 %v3382
        %v3415 = vunpack.c.l.bf16 %v3383
        %v3416 = vunpack.c.l.bf16 %v3384
        %v3417 = vunpack.c.l.bf16 %v3385
        %v3418 = vunpack.c.l.bf16 %v3386
        %v3419 = vunpack.c.l.bf16 %v3387
        %v3420 = vunpack.c.l.bf16 %v3388
        %v3421 = vunpack.c.l.bf16 %v3389
        %v3422 = vunpack.c.l.bf16 %v3390
        %v3423 = vunpack.c.l.bf16 %v3391
        %v3424 = vunpack.c.l.bf16 %v3392
        %v3425 = vadd.f32 %v3329, %v3393
        %v3426 = vadd.f32 %v3330, %v3394
        %v3427 = vadd.f32 %v3331, %v3395
        %v3428 = vadd.f32 %v3332, %v3396
        %v3429 = vadd.f32 %v3333, %v3397
        %v3430 = vadd.f32 %v3334, %v3398
        %v3431 = vadd.f32 %v3335, %v3399
        %v3432 = vadd.f32 %v3336, %v3400
        %v3433 = vadd.f32 %v3337, %v3401
        %v3434 = vadd.f32 %v3338, %v3402
        %v3435 = vadd.f32 %v3339, %v3403
        %v3436 = vadd.f32 %v3340, %v3404
        %v3437 = vadd.f32 %v3341, %v3405
        %v3438 = vadd.f32 %v3342, %v3406
        %v3439 = vadd.f32 %v3343, %v3407
        %v3440 = vadd.f32 %v3344, %v3408
        %v3441 = vadd.f32 %v3345, %v3409
        %v3442 = vadd.f32 %v3346, %v3410
        %v3443 = vadd.f32 %v3347, %v3411
        %v3444 = vadd.f32 %v3348, %v3412
        %v3445 = vadd.f32 %v3349, %v3413
        %v3446 = vadd.f32 %v3350, %v3414
        %v3447 = vadd.f32 %v3351, %v3415
        %v3448 = vadd.f32 %v3352, %v3416
        %v3449 = vadd.f32 %v3353, %v3417
        %v3450 = vadd.f32 %v3354, %v3418
        %v3451 = vadd.f32 %v3355, %v3419
        %v3452 = vadd.f32 %v3356, %v3420
        %v3453 = vadd.f32 %v3357, %v3421
        %v3454 = vadd.f32 %v3358, %v3422
        %v3455 = vadd.f32 %v3359, %v3423
        %v3456 = vadd.f32 %v3360, %v3424
        %v3457 = vpack.c.bf16 %v3426, %v3425
        %v3458 = vpack.c.bf16 %v3428, %v3427
        %v3459 = vpack.c.bf16 %v3430, %v3429
        %v3460 = vpack.c.bf16 %v3432, %v3431
        %v3461 = vpack.c.bf16 %v3434, %v3433
        %v3462 = vpack.c.bf16 %v3436, %v3435
        %v3463 = vpack.c.bf16 %v3438, %v3437
        %v3464 = vpack.c.bf16 %v3440, %v3439
        %v3465 = vpack.c.bf16 %v3442, %v3441
        %v3466 = vpack.c.bf16 %v3444, %v3443
        %v3467 = vpack.c.bf16 %v3446, %v3445
        %v3468 = vpack.c.bf16 %v3448, %v3447
        %v3469 = vpack.c.bf16 %v3450, %v3449
        %v3470 = vpack.c.bf16 %v3452, %v3451
        %v3471 = vpack.c.bf16 %v3454, %v3453
        %v3472 = vpack.c.bf16 %v3456, %v3455
        %v3489 = vunpack.c.l.b16 %v3457
        %v3490 = vunpack.c.h.b16 %v3457
        %v3491 = vunpack.c.l.b16 %v3458
        %v3492 = vunpack.c.h.b16 %v3458
        %v3493 = vunpack.c.l.b16 %v3459
        %v3494 = vunpack.c.h.b16 %v3459
        %v3495 = vunpack.c.l.b16 %v3460
        %v3496 = vunpack.c.h.b16 %v3460
        %v3497 = vunpack.c.l.b16 %v3461
        %v3498 = vunpack.c.h.b16 %v3461
        %v3499 = vunpack.c.l.b16 %v3462
        %v3500 = vunpack.c.h.b16 %v3462
        %v3501 = vunpack.c.l.b16 %v3463
        %v3502 = vunpack.c.h.b16 %v3463
        %v3503 = vunpack.c.l.b16 %v3464
        %v3504 = vunpack.c.h.b16 %v3464
        %v3505 = vunpack.c.l.b16 %v3465
        %v3506 = vunpack.c.h.b16 %v3465
        %v3507 = vunpack.c.l.b16 %v3466
        %v3508 = vunpack.c.h.b16 %v3466
        %v3509 = vunpack.c.l.b16 %v3467
        %v3510 = vunpack.c.h.b16 %v3467
        %v3511 = vunpack.c.l.b16 %v3468
        %v3512 = vunpack.c.h.b16 %v3468
        %v3513 = vunpack.c.l.b16 %v3469
        %v3514 = vunpack.c.h.b16 %v3469
        %v3515 = vunpack.c.l.b16 %v3470
        %v3516 = vunpack.c.h.b16 %v3470
        %v3517 = vunpack.c.l.b16 %v3471
        %v3518 = vunpack.c.h.b16 %v3471
        %v3519 = vunpack.c.l.b16 %v3472
        %v3520 = vunpack.c.h.b16 %v3472
        %v3521 = vpack.c.b16 %v3489, %v3489
        %v3522 = vpack.c.b16 %v3490, %v3490
        %v3523 = vpack.c.b16 %v3491, %v3491
        %v3524 = vpack.c.b16 %v3492, %v3492
        %v3525 = vpack.c.b16 %v3493, %v3493
        %v3526 = vpack.c.b16 %v3494, %v3494
        %v3527 = vpack.c.b16 %v3495, %v3495
        %v3528 = vpack.c.b16 %v3496, %v3496
        %v3529 = vpack.c.b16 %v3497, %v3497
        %v3530 = vpack.c.b16 %v3498, %v3498
        %v3531 = vpack.c.b16 %v3499, %v3499
        %v3532 = vpack.c.b16 %v3500, %v3500
        %v3533 = vpack.c.b16 %v3501, %v3501
        %v3534 = vpack.c.b16 %v3502, %v3502
        %v3535 = vpack.c.b16 %v3503, %v3503
        %v3536 = vpack.c.b16 %v3504, %v3504
        %v3537 = vpack.c.b16 %v3505, %v3505
        %v3538 = vpack.c.b16 %v3506, %v3506
        %v3539 = vpack.c.b16 %v3507, %v3507
        %v3540 = vpack.c.b16 %v3508, %v3508
        %v3541 = vpack.c.b16 %v3509, %v3509
        %v3542 = vpack.c.b16 %v3510, %v3510
        %v3543 = vpack.c.b16 %v3511, %v3511
        %v3544 = vpack.c.b16 %v3512, %v3512
        %v3545 = vpack.c.b16 %v3513, %v3513
        %v3546 = vpack.c.b16 %v3514, %v3514
        %v3547 = vpack.c.b16 %v3515, %v3515
        %v3548 = vpack.c.b16 %v3516, %v3516
        %v3549 = vpack.c.b16 %v3517, %v3517
        %v3550 = vpack.c.b16 %v3518, %v3518
        %v3551 = vpack.c.b16 %v3519, %v3519
        %v3552 = vpack.c.b16 %v3520, %v3520
        %vm3585 = vcmask 388096
        %3586 = vst.msk [vmem:[%s381] sm:$0xf] %vm3585, %v3521
        %3587 = vst.msk [vmem:[%s381 + $0x4] sm:$0xf] %vm3585, %v3522
        %3588 = vst.msk [vmem:[%s381 + $0x8] sm:$0xf] %vm3585, %v3523
        %3589 = vst.msk [vmem:[%s381 + $0xc] sm:$0xf] %vm3585, %v3524
        %3590 = vst.msk [vmem:[%s381 + $0x10] sm:$0xf] %vm3585, %v3525
        %3591 = vst.msk [vmem:[%s381 + $0x14] sm:$0xf] %vm3585, %v3526
        %3592 = vst.msk [vmem:[%s381 + $0x18] sm:$0xf] %vm3585, %v3527
        %3593 = vst.msk [vmem:[%s381 + $0x1c] sm:$0xf] %vm3585, %v3528
        %3594 = vst.msk [vmem:[%s381 + $0x20] sm:$0xf] %vm3585, %v3529
        %3595 = vst.msk [vmem:[%s381 + $0x24] sm:$0xf] %vm3585, %v3530
        %3596 = vst.msk [vmem:[%s381 + $0x28] sm:$0xf] %vm3585, %v3531
        %3597 = vst.msk [vmem:[%s381 + $0x2c] sm:$0xf] %vm3585, %v3532
        %3598 = vst.msk [vmem:[%s381 + $0x30] sm:$0xf] %vm3585, %v3533
        %3599 = vst.msk [vmem:[%s381 + $0x34] sm:$0xf] %vm3585, %v3534
        %3600 = vst.msk [vmem:[%s381 + $0x38] sm:$0xf] %vm3585, %v3535
        %3601 = vst.msk [vmem:[%s381 + $0x3c] sm:$0xf] %vm3585, %v3536
        %3602 = vst.msk [vmem:[%s381 + $0x40] sm:$0xf] %vm3585, %v3537
        %3603 = vst.msk [vmem:[%s381 + $0x44] sm:$0xf] %vm3585, %v3538
        %3604 = vst.msk [vmem:[%s381 + $0x48] sm:$0xf] %vm3585, %v3539
        %3605 = vst.msk [vmem:[%s381 + $0x4c] sm:$0xf] %vm3585, %v3540
        %3606 = vst.msk [vmem:[%s381 + $0x50] sm:$0xf] %vm3585, %v3541
        %3607 = vst.msk [vmem:[%s381 + $0x54] sm:$0xf] %vm3585, %v3542
        %3608 = vst.msk [vmem:[%s381 + $0x58] sm:$0xf] %vm3585, %v3543
        %3609 = vst.msk [vmem:[%s381 + $0x5c] sm:$0xf] %vm3585, %v3544
        %3610 = vst.msk [vmem:[%s381 + $0x60] sm:$0xf] %vm3585, %v3545
        %3611 = vst.msk [vmem:[%s381 + $0x64] sm:$0xf] %vm3585, %v3546
        %3612 = vst.msk [vmem:[%s381 + $0x68] sm:$0xf] %vm3585, %v3547
        %3613 = vst.msk [vmem:[%s381 + $0x6c] sm:$0xf] %vm3585, %v3548
        %3614 = vst.msk [vmem:[%s381 + $0x70] sm:$0xf] %vm3585, %v3549
        %3615 = vst.msk [vmem:[%s381 + $0x74] sm:$0xf] %vm3585, %v3550
        %3616 = vst.msk [vmem:[%s381 + $0x78] sm:$0xf] %vm3585, %v3551
        %3617 = vst.msk [vmem:[%s381 + $0x7c] sm:$0xf] %vm3585, %v3552
        %s3618 = sand.u32 %s178, 1
        %s3619 = scalar_lea.sflag [#allocation5], %s3618
        %s3620 = sand.u32 %s178, 1
        %s3621 = smul.addr %s3620, 128
        %s3622 = scalar_lea.vmem [#allocation12], %s3621
        // Predicated region
        $region61: #{tpu_custom_call.1} parent=39 // pred_check
          %p3623 = pneg %p188
        $region62: #{tpu_custom_call.1} parent=39 // pred_check_branch
          %3625 = sbr.rel (%p3623) target = $region64
        $region63: #{tpu_custom_call.1} parent=39 // pred_region
          %s3626 = smul.u32 16, %s31
          %s3628 = ssub.s32 2048, 2048
          %3629 = vsyncadd %s3619, %s3628
          %s3630 = smul.addr %s3626, 2
          %s3631 = smul.addr %s30, 32
          %s3632 = sadd.s32 %s3630, %s3631
          %s3633 = smul.addr %s3632, 64
          %s3634 = scalar_lea.hbm %s5, %s3633
          %s3635 = sshll.u32 %s3622, 4
          %s3636 = int_to_ptr.vmem [resolvable:$true] %s3635
          %3641 = dma.vmem_to_hbm [thread:$0]  %s3636, 2048, %s3634, %s3619, 64, 64, 4
        $region64: #{tpu_custom_call.1} parent=39 // pred_fallthru
          _
      $region40: #{tpu_custom_call.1} parent=5 // pred_fallthru
        _
      %p3642 = scmp.le.s32.totalorder 2, %s21
      // Predicated region
      $region65: #{tpu_custom_call.1} parent=5 // pred_check
        %p3643 = pneg %p3642
      $region66: #{tpu_custom_call.1} parent=5 // pred_check_branch
        %3645 = sbr.rel (%p3643) target = $region68
      $region67: #{tpu_custom_call.1} parent=5 // pred_region
        %s3646 = ssub.s32 %s21, 2
        // Predicated region
        $region69: #{tpu_custom_call.1} parent=67 // pred_check
          %p3647 = pneg %p194
        $region70: #{tpu_custom_call.1} parent=67 // pred_check_branch
          %3649 = sbr.rel (%p3647) target = $region72
        $region71: #{tpu_custom_call.1} parent=67 // pred_region
          %s3650 = sand.u32 %s179, 1
          %s3651 = scalar_lea.sflag [#allocation5], %s3650
          %s3652 = sand.u32 %s179, 1
          %s3653 = smul.addr %s3652, 128
          %s3654 = scalar_lea.vmem [#allocation12], %s3653
          %3655 = dma.done %s3651, 2048
        $region72: #{tpu_custom_call.1} parent=67 // pred_fallthru
          _
      $region68: #{tpu_custom_call.1} parent=5 // pred_fallthru
        _
    $region6: #{tpu_custom_call.1} parent=1 // loop_footer
      %s25 = sadd.s32 1, %s21
    $region7: #{tpu_custom_call.1} parent=1 // loop_footer_branch
      %20 = sbr.rel target = $region3
    $region8: #{tpu_custom_call.1} parent=1 // loop_exit
      _
    %3656 = vsyncpa [#allocation4], 1
    %s3657 = scalar_lea.sflag [#allocation4], 1
    %3658 = vsyncpa %s3657, 1
    %3659 = vsyncpa [#allocation7], 1
    %s3660 = scalar_lea.sflag [#allocation7], 1
    %3661 = vsyncpa %s3660, 1
    %3662 = vsyncpa [#allocation10], 1
    %3663 = vsyncpa [#allocation5], 1
    %s3664 = scalar_lea.sflag [#allocation5], 1
    %3665 = vsyncpa %s3664, 1

</llo_original>
